<compile_context>
chip_gen: v7x
topology: tpu7x:2x2x1
jax: 0.10.0
libtpu: 0.0.40
codegen_flags: <defaults>
</compile_context>

<pallas_src>
import functools
import math

import jax
import jax.numpy as jnp
from jax.experimental import pallas as pl
from jax.experimental.pallas import tpu as pltpu

LN_EPS = 1e-5

_LAYER_PARAM_ORDER = ('ln1_g', 'ln1_b',
                      'wq', 'bq', 'wk', 'bk', 'wv', 'bv', 'wo', 'bo',
                      'ln2_g', 'ln2_b',
                      'w1', 'b1', 'w2', 'b2')


def _layernorm(x, gamma, beta):
    mu = jnp.mean(x, axis=-1, keepdims=True)
    var = jnp.mean((x - mu) ** 2, axis=-1, keepdims=True)
    return (x - mu) * jax.lax.rsqrt(var + LN_EPS) * gamma + beta


def clip_stack_kernel(x_ref,
                      ln1_g_ref, ln1_b_ref,
                      wq_ref, bq_ref, wk_ref, bk_ref, wv_ref, bv_ref,
                      wo_ref, bo_ref,
                      ln2_g_ref, ln2_b_ref,
                      w1_ref, b1_ref, w2_ref, b2_ref,
                      fin_g_ref, fin_b_ref,
                      o_ref,
                      x_scr,
                      *, num_heads, batch, seq):
    """One grid step == one CLIP text encoder layer over all B*S tokens."""
    layer = pl.program_id(0)
    num_layers = pl.num_programs(0)

    # Load embeddings into the resident residual-stream scratch once.
    @pl.when(layer == 0)
    def _():
        x_scr[...] = x_ref[...]

    x = x_scr[...]                                  # (B*S, D) f32 residual stream
    D = x.shape[-1]
    H, B, S = num_heads, batch, seq
    hd = D // H
    scale = hd ** -0.5

    # ---------------- self-attention block (pre-LN, causal) ----------------
    h1 = _layernorm(x, ln1_g_ref[0], ln1_b_ref[0])
    h1b = h1.astype(jnp.bfloat16)
    wq, wk, wv, wo = wq_ref[0], wk_ref[0], wv_ref[0], wo_ref[0]   # (H, hd, D) bf16
    bq, bk, bv = bq_ref[0], bk_ref[0], bv_ref[0]                  # (H, 1, hd) f32

    row = jax.lax.broadcasted_iota(jnp.int32, (H, S, S), 1)
    col = jax.lax.broadcasted_iota(jnp.int32, (H, S, S), 2)
    causal = row >= col

    attn_parts = []
    for b in range(B):                              # static, small batch
        hb = jnp.broadcast_to(h1b[b * S:(b + 1) * S][None], (H, S, D))
        q = jnp.einsum('hsd,hkd->hsk', hb, wq,
                       preferred_element_type=jnp.float32) + bq   # (H, S, hd)
        k = jnp.einsum('hsd,hkd->hsk', hb, wk,
                       preferred_element_type=jnp.float32) + bk
        v = jnp.einsum('hsd,hkd->hsk', hb, wv,
                       preferred_element_type=jnp.float32) + bv
        q = q * scale
        s = jnp.einsum('hsd,htd->hst',
                       q.astype(jnp.bfloat16), k.astype(jnp.bfloat16),
                       preferred_element_type=jnp.float32)        # (H, S, S)
        s = jnp.where(causal, s, -1e9)
        s = s - jnp.max(s, axis=-1, keepdims=True)
        p = jnp.exp(s)
        p = p * pl.reciprocal(jnp.sum(p, axis=-1, keepdims=True), approx=True)
        ctx = jnp.einsum('hst,htd->hsd',
                         p.astype(jnp.bfloat16), v.astype(jnp.bfloat16),
                         preferred_element_type=jnp.float32)      # (H, S, hd)
        proj = jnp.einsum('hsd,hdk->hsk',
                          ctx.astype(jnp.bfloat16), wo,
                          preferred_element_type=jnp.float32)     # (H, S, D)
        attn_parts.append(jnp.sum(proj, axis=0))                  # (S, D)
    attn = jnp.concatenate(attn_parts, axis=0) + bo_ref[0]        # (B*S, D)
    x = x + attn

    # ---------------- MLP block (quick_gelu, as in CLIP) ----------------
    h2 = _layernorm(x, ln2_g_ref[0], ln2_b_ref[0])
    f = jnp.dot(h2.astype(jnp.bfloat16), w1_ref[0],
                preferred_element_type=jnp.float32) + b1_ref[0]
    f = f * jax.nn.sigmoid(1.702 * f)                             # quick_gelu
    y = jnp.dot(f.astype(jnp.bfloat16), w2_ref[0],
                preferred_element_type=jnp.float32) + b2_ref[0]
    x = x + y

    x_scr[...] = x

    # Fused final LayerNorm on the last layer only.
    @pl.when(layer == num_layers - 1)
    def _():
        o_ref[...] = _layernorm(x, fin_g_ref[...], fin_b_ref[...])


def _stacked_weight_spec(w):
    nd = w.ndim
    return pl.BlockSpec((1,) + tuple(w.shape[1:]),
                        lambda l, _nd=nd: (l,) + (0,) * (_nd - 1))


def clip_text_transformer(x2d, stacked, final_g, final_b, *, num_heads, batch, seq):
    BS, D = x2d.shape
    num_layers = int(stacked['wq'].shape[0])
    ws = [stacked[name] for name in _LAYER_PARAM_ORDER]

    in_specs = ([pl.BlockSpec((BS, D), lambda l: (0, 0))]
                + [_stacked_weight_spec(w) for w in ws]
                + [pl.BlockSpec(final_g.shape, lambda l: (0, 0)),
                   pl.BlockSpec(final_b.shape, lambda l: (0, 0))])

    # VMEM budget: double-buffered per-layer weights + resident activations
    # + MLP intermediate + headroom for in-kernel temporaries.
    per_layer_bytes = sum(math.prod(w.shape[1:]) * w.dtype.itemsize for w in ws)
    mlp_dim = int(stacked['w1'].shape[-1])
    act_bytes = BS * D * 4
    vmem_limit = (2 * per_layer_bytes + 12 * act_bytes
                  + 4 * BS * mlp_dim * 4 + (16 << 20))
    vmem_limit = int(max(32 << 20, min(vmem_limit, 100 << 20)))

    kernel = functools.partial(clip_stack_kernel, num_heads=num_heads,
                               batch=batch, seq=seq)
    return pl.pallas_call(
        kernel,
        out_shape=jax.ShapeDtypeStruct((BS, D), jnp.float32),
        grid=(num_layers,),
        in_specs=in_specs,
        out_specs=pl.BlockSpec((BS, D), lambda l: (0, 0)),
        scratch_shapes=[pltpu.VMEM((BS, D), jnp.float32)],
        compiler_params=pltpu.CompilerParams(
            dimension_semantics=("arbitrary",),
            vmem_limit_bytes=vmem_limit),
    )(x2d, *ws, final_g, final_b)


def _stack_layer_params(layers, *, num_heads):
    """Stack per-layer params over a leading L axis, in per-head kernel layouts."""
    d_model = layers[0]['wq'].shape[0]
    hd = d_model // num_heads

    def per_head_w(w):      # (D_in, D_out) -> (H, hd, D_in)
        return jnp.transpose(w).reshape(num_heads, hd, d_model)

    def per_head_b(bvec):   # (1, D) -> (H, 1, hd)
        return bvec.reshape(num_heads, hd)[:, None, :]

    def out_proj_w(w):      # (D_in = H*hd, D_out) -> (H, hd, D_out)
        return w.reshape(num_heads, hd, w.shape[-1])

    transforms = {'wq': per_head_w, 'wk': per_head_w, 'wv': per_head_w,
                  'bq': per_head_b, 'bk': per_head_b, 'bv': per_head_b,
                  'wo': out_proj_w}
    stacked = {}
    for name in _LAYER_PARAM_ORDER:
        fn = transforms.get(name, lambda w: w)
        stacked[name] = jnp.stack([fn(lp[name]) for lp in layers], axis=0)
    return stacked


def frozen_clip_text_embedder_forward(token_ids, params, *, num_heads):
    """Equivalent of FrozenCLIPTextEmbedder.forward: returns last_hidden_state."""
    B, S = token_ids.shape
    D = params['tok_emb'].shape[-1]
    # TODO(synk): CLIPTokenizer has no Pallas equivalent; synthetic token ids stand in.
    x = params['tok_emb'][token_ids] + params['pos_emb'][None, :S, :]
    x = x.astype(jnp.float32).reshape(B * S, D)
    z = clip_text_transformer(x, params['stacked_layers'],
                              params['final_ln_g'], params['final_ln_b'],
                              num_heads=num_heads, batch=B, seq=S)
    return z.reshape(B, S, D)           # == outputs.last_hidden_state


def init_params(key, *, vocab, max_len, d_model, mlp_dim, num_layers, num_heads):
    keys = jax.random.split(key, 2 + num_layers)
    w_dtype = jnp.bfloat16              # big matrices bf16, biases/LN in f32

    def dense(k, shape):
        return (0.02 * jax.random.normal(k, shape, jnp.float32)).astype(w_dtype)

    layers = []
    for l in range(num_layers):
        lk = jax.random.split(keys[2 + l], 6)
        layers.append(dict(
            ln1_g=jnp.ones((1, d_model), jnp.float32),
            ln1_b=jnp.zeros((1, d_model), jnp.float32),
            wq=dense(lk[0], (d_model, d_model)), bq=jnp.zeros((1, d_model), jnp.float32),
            wk=dense(lk[1], (d_model, d_model)), bk=jnp.zeros((1, d_model), jnp.float32),
            wv=dense(lk[2], (d_model, d_model)), bv=jnp.zeros((1, d_model), jnp.float32),
            wo=dense(lk[3], (d_model, d_model)), bo=jnp.zeros((1, d_model), jnp.float32),
            ln2_g=jnp.ones((1, d_model), jnp.float32),
            ln2_b=jnp.zeros((1, d_model), jnp.float32),
            w1=dense(lk[4], (d_model, mlp_dim)), b1=jnp.zeros((1, mlp_dim), jnp.float32),
            w2=dense(lk[5], (mlp_dim, d_model)), b2=jnp.zeros((1, d_model), jnp.float32),
        ))
    return {
        'tok_emb': 0.02 * jax.random.normal(keys[0], (vocab, d_model), jnp.float32),
        'pos_emb': 0.01 * jax.random.normal(keys[1], (max_len, d_model), jnp.float32),
        'final_ln_g': jnp.ones((1, d_model), jnp.float32),
        'final_ln_b': jnp.zeros((1, d_model), jnp.float32),
        'stacked_layers': _stack_layer_params(layers, num_heads=num_heads),
    }


if __name__ == "__main__":
    # Small synthetic CLIP text config (real one: max_length=77, D=768, 12 layers).
    BATCH = 2
    MAX_LEN = 8        # stands in for max_length=77
    VOCAB = 64
    D_MODEL = 32
    NUM_HEADS = 4
    MLP_DIM = 4 * D_MODEL
    NUM_LAYERS = 2

    key = jax.random.PRNGKey(0)
    k_tok, k_par = jax.random.split(key)

    params = init_params(k_par, vocab=VOCAB, max_len=MAX_LEN, d_model=D_MODEL,
                         mlp_dim=MLP_DIM, num_layers=NUM_LAYERS,
                         num_heads=NUM_HEADS)

    # TODO(synk): tokenizer replaced by deterministic synthetic token ids.
    token_ids = jax.random.randint(k_tok, (BATCH, MAX_LEN), 0, VOCAB, dtype=jnp.int32)

    z = frozen_clip_text_embedder_forward(token_ids, params, num_heads=NUM_HEADS)
    z = jax.block_until_ready(z)
    assert z.shape == (BATCH, MAX_LEN, D_MODEL) and z.dtype == jnp.float32
    assert bool(jnp.isfinite(z).all())
    print("KERNEL_OK")
</pallas_src>

<mosaic_0001>
module attributes {stable_mosaic.version = 11 : i64} {
  func.func @clip_stack_kernel(%arg0: i32, %arg1: memref<16x32xf32, #tpu.memory_space<vmem>>, %arg2: memref<1x1x32xf32, #tpu.memory_space<vmem>>, %arg3: memref<1x1x32xf32, #tpu.memory_space<vmem>>, %arg4: memref<1x4x8x32xbf16, #tpu.memory_space<vmem>>, %arg5: memref<1x4x1x8xf32, #tpu.memory_space<vmem>>, %arg6: memref<1x4x8x32xbf16, #tpu.memory_space<vmem>>, %arg7: memref<1x4x1x8xf32, #tpu.memory_space<vmem>>, %arg8: memref<1x4x8x32xbf16, #tpu.memory_space<vmem>>, %arg9: memref<1x4x1x8xf32, #tpu.memory_space<vmem>>, %arg10: memref<1x4x8x32xbf16, #tpu.memory_space<vmem>>, %arg11: memref<1x1x32xf32, #tpu.memory_space<vmem>>, %arg12: memref<1x1x32xf32, #tpu.memory_space<vmem>>, %arg13: memref<1x1x32xf32, #tpu.memory_space<vmem>>, %arg14: memref<1x32x128xbf16, #tpu.memory_space<vmem>>, %arg15: memref<1x1x128xf32, #tpu.memory_space<vmem>>, %arg16: memref<1x128x32xbf16, #tpu.memory_space<vmem>>, %arg17: memref<1x1x32xf32, #tpu.memory_space<vmem>>, %arg18: memref<1x32xf32, #tpu.memory_space<vmem>>, %arg19: memref<1x32xf32, #tpu.memory_space<vmem>>, %arg20: memref<16x32xf32, #tpu.memory_space<vmem>>, %arg21: memref<16x32xf32, #tpu.memory_space<vmem>>) attributes {dimension_semantics = [#tpu.dimension_semantics<arbitrary>], iteration_bounds = array<i64: 2>, scalar_prefetch = 0 : i64, scratch_operands = 1 : i64, tpu.core_type = #tpu.core_type<tc>, window_params = [{pipeline_mode = #tpu.pipeline_mode<synchronous>, transform_indices = @transform_0, window_bounds = array<i64: 16, 32>}, {transform_indices = @transform_1, window_bounds = array<i64: 1, 1, 32>}, {transform_indices = @transform_2, window_bounds = array<i64: 1, 1, 32>}, {transform_indices = @transform_3, window_bounds = array<i64: 1, 4, 8, 32>}, {transform_indices = @transform_4, window_bounds = array<i64: 1, 4, 1, 8>}, {transform_indices = @transform_5, window_bounds = array<i64: 1, 4, 8, 32>}, {transform_indices = @transform_6, window_bounds = array<i64: 1, 4, 1, 8>}, {transform_indices = @transform_7, window_bounds = array<i64: 1, 4, 8, 32>}, {transform_indices = @transform_8, window_bounds = array<i64: 1, 4, 1, 8>}, {transform_indices = @transform_9, window_bounds = array<i64: 1, 4, 8, 32>}, {transform_indices = @transform_10, window_bounds = array<i64: 1, 1, 32>}, {transform_indices = @transform_11, window_bounds = array<i64: 1, 1, 32>}, {transform_indices = @transform_12, window_bounds = array<i64: 1, 1, 32>}, {transform_indices = @transform_13, window_bounds = array<i64: 1, 32, 128>}, {transform_indices = @transform_14, window_bounds = array<i64: 1, 1, 128>}, {transform_indices = @transform_15, window_bounds = array<i64: 1, 128, 32>}, {transform_indices = @transform_16, window_bounds = array<i64: 1, 1, 32>}, {pipeline_mode = #tpu.pipeline_mode<synchronous>, transform_indices = @transform_17, window_bounds = array<i64: 1, 32>}, {pipeline_mode = #tpu.pipeline_mode<synchronous>, transform_indices = @transform_18, window_bounds = array<i64: 1, 32>}, {pipeline_mode = #tpu.pipeline_mode<synchronous>, transform_indices = @transform_19, window_bounds = array<i64: 16, 32>}]} {
    %c0_i32 = arith.constant 0 : i32
    %0 = arith.cmpi eq, %arg0, %c0_i32 : i32
    %1 = arith.extui %0 : i1 to i32
    %c0_i32_0 = arith.constant 0 : i32
    %2 = arith.cmpi ne, %1, %c0_i32_0 : i32
    scf.if %2 {
      %c0_95 = arith.constant 0 : index
      %c0_96 = arith.constant 0 : index
      %181 = vector.load %arg1[%c0_95, %c0_96] : memref<16x32xf32, #tpu.memory_space<vmem>>, vector<16x32xf32>
      %c0_97 = arith.constant 0 : index
      %c0_98 = arith.constant 0 : index
      %182 = vector.load %arg21[%c0_97, %c0_98] : memref<16x32xf32, #tpu.memory_space<vmem>>, vector<16x32xf32>
      tpu.vector_store %arg21[%c0_97, %c0_98], %181 {strides = array<i32>} : memref<16x32xf32, #tpu.memory_space<vmem>>, vector<16x32xf32>,
    } else {
    }
    %c0 = arith.constant 0 : index
    %c0_1 = arith.constant 0 : index
    %3 = vector.load %arg21[%c0, %c0_1] : memref<16x32xf32, #tpu.memory_space<vmem>>, vector<16x32xf32>
    %c0_2 = arith.constant 0 : index
    %c0_3 = arith.constant 0 : index
    %c0_4 = arith.constant 0 : index
    %4 = vector.load %arg2[%c0_2, %c0_3, %c0_4] : memref<1x1x32xf32, #tpu.memory_space<vmem>>, vector<1x1x32xf32>
    %5 = vector.shape_cast %4 : vector<1x1x32xf32> to vector<1x32xf32>
    %c0_5 = arith.constant 0 : index
    %c0_6 = arith.constant 0 : index
    %c0_7 = arith.constant 0 : index
    %6 = vector.load %arg3[%c0_5, %c0_6, %c0_7] : memref<1x1x32xf32, #tpu.memory_space<vmem>>, vector<1x1x32xf32>
    %7 = vector.shape_cast %6 : vector<1x1x32xf32> to vector<1x32xf32>
    %cst = arith.constant dense<0.000000e+00> : vector<16xf32>
    %8 = vector.multi_reduction <add>, %3, %cst [1] : vector<16x32xf32> to vector<16xf32>
    %9 = vector.shape_cast %8 : vector<16xf32> to vector<16x1xf32>
    %cst_8 = arith.constant 3.200000e+01 : f32
    %10 = vector.broadcast %cst_8 : f32 to vector<16x1xf32>
    %11 = arith.divf %9, %10 : vector<16x1xf32>
    %12 = vector.broadcast %11 : vector<16x1xf32> to vector<16x32xf32>
    %13 = arith.subf %3, %12 : vector<16x32xf32>
    %14 = arith.mulf %13, %13 : vector<16x32xf32>
    %cst_9 = arith.constant dense<0.000000e+00> : vector<16xf32>
    %15 = vector.multi_reduction <add>, %14, %cst_9 [1] : vector<16x32xf32> to vector<16xf32>
    %16 = vector.shape_cast %15 : vector<16xf32> to vector<16x1xf32>
    %cst_10 = arith.constant 3.200000e+01 : f32
    %17 = vector.broadcast %cst_10 : f32 to vector<16x1xf32>
    %18 = arith.divf %16, %17 : vector<16x1xf32>
    %19 = vector.broadcast %11 : vector<16x1xf32> to vector<16x32xf32>
    %20 = arith.subf %3, %19 : vector<16x32xf32>
    %cst_11 = arith.constant 9.99999974E-6 : f32
    %21 = vector.broadcast %cst_11 : f32 to vector<16x1xf32>
    %22 = arith.addf %18, %21 : vector<16x1xf32>
    %23 = math.rsqrt %22 : vector<16x1xf32>
    %24 = vector.broadcast %23 : vector<16x1xf32> to vector<16x32xf32>
    %25 = arith.mulf %20, %24 : vector<16x32xf32>
    %26 = vector.broadcast %5 : vector<1x32xf32> to vector<16x32xf32>
    %27 = arith.mulf %25, %26 : vector<16x32xf32>
    %28 = vector.broadcast %7 : vector<1x32xf32> to vector<16x32xf32>
    %29 = arith.addf %27, %28 : vector<16x32xf32>
    %30 = arith.truncf %29 : vector<16x32xf32> to vector<16x32xbf16>
    %c0_12 = arith.constant 0 : index
    %c0_13 = arith.constant 0 : index
    %c0_14 = arith.constant 0 : index
    %c0_15 = arith.constant 0 : index
    %31 = vector.load %arg4[%c0_12, %c0_13, %c0_14, %c0_15] : memref<1x4x8x32xbf16, #tpu.memory_space<vmem>>, vector<1x4x8x32xbf16>
    %32 = vector.shape_cast %31 : vector<1x4x8x32xbf16> to vector<4x8x32xbf16>
    %c0_16 = arith.constant 0 : index
    %c0_17 = arith.constant 0 : index
    %c0_18 = arith.constant 0 : index
    %c0_19 = arith.constant 0 : index
    %33 = vector.load %arg6[%c0_16, %c0_17, %c0_18, %c0_19] : memref<1x4x8x32xbf16, #tpu.memory_space<vmem>>, vector<1x4x8x32xbf16>
    %34 = vector.shape_cast %33 : vector<1x4x8x32xbf16> to vector<4x8x32xbf16>
    %c0_20 = arith.constant 0 : index
    %c0_21 = arith.constant 0 : index
    %c0_22 = arith.constant 0 : index
    %c0_23 = arith.constant 0 : index
    %35 = vector.load %arg8[%c0_20, %c0_21, %c0_22, %c0_23] : memref<1x4x8x32xbf16, #tpu.memory_space<vmem>>, vector<1x4x8x32xbf16>
    %36 = vector.shape_cast %35 : vector<1x4x8x32xbf16> to vector<4x8x32xbf16>
    %c0_24 = arith.constant 0 : index
    %c0_25 = arith.constant 0 : index
    %c0_26 = arith.constant 0 : index
    %c0_27 = arith.constant 0 : index
    %37 = vector.load %arg10[%c0_24, %c0_25, %c0_26, %c0_27] : memref<1x4x8x32xbf16, #tpu.memory_space<vmem>>, vector<1x4x8x32xbf16>
    %38 = vector.shape_cast %37 : vector<1x4x8x32xbf16> to vector<4x8x32xbf16>
    %c0_28 = arith.constant 0 : index
    %c0_29 = arith.constant 0 : index
    %c0_30 = arith.constant 0 : index
    %c0_31 = arith.constant 0 : index
    %39 = vector.load %arg5[%c0_28, %c0_29, %c0_30, %c0_31] : memref<1x4x1x8xf32, #tpu.memory_space<vmem>>, vector<1x4x1x8xf32>
    %40 = vector.shape_cast %39 : vector<1x4x1x8xf32> to vector<4x1x8xf32>
    %c0_32 = arith.constant 0 : index
    %c0_33 = arith.constant 0 : index
    %c0_34 = arith.constant 0 : index
    %c0_35 = arith.constant 0 : index
    %41 = vector.load %arg7[%c0_32, %c0_33, %c0_34, %c0_35] : memref<1x4x1x8xf32, #tpu.memory_space<vmem>>, vector<1x4x1x8xf32>
    %42 = vector.shape_cast %41 : vector<1x4x1x8xf32> to vector<4x1x8xf32>
    %c0_36 = arith.constant 0 : index
    %c0_37 = arith.constant 0 : index
    %c0_38 = arith.constant 0 : index
    %c0_39 = arith.constant 0 : index
    %43 = vector.load %arg9[%c0_36, %c0_37, %c0_38, %c0_39] : memref<1x4x1x8xf32, #tpu.memory_space<vmem>>, vector<1x4x1x8xf32>
    %44 = vector.shape_cast %43 : vector<1x4x1x8xf32> to vector<4x1x8xf32>
    %45 = tpu.iota {dimensions = array<i32: 1>} : vector<4x8x8xi32>
    %46 = tpu.iota {dimensions = array<i32: 2>} : vector<4x8x8xi32>
    %47 = arith.cmpi sge, %45, %46 : vector<4x8x8xi32>
    %48 = vector.extract_strided_slice %30 {offsets = [0, 0], sizes = [8, 32], strides = [1, 1]} : vector<16x32xbf16> to vector<8x32xbf16>
    %49 = vector.shape_cast %48 : vector<8x32xbf16> to vector<1x8x32xbf16>
    %50 = vector.shape_cast %49 : vector<1x8x32xbf16> to vector<1x8x32xbf16>
    %51 = vector.broadcast %50 : vector<1x8x32xbf16> to vector<4x8x32xbf16>
    "tpu.trace_start"() <{level = 10 : i32, message = "hsd,hkd->hsk"}> : () -> ()
    %cst_40 = arith.constant dense<0.000000e+00> : vector<4x8x8xf32>
    %52 = tpu.matmul %51, %32, %cst_40 {dimension_numbers = #tpu.dot_dimension_numbers<[2], [2], [1], [1], [0, 0, 0, 1, 1, 1], [0], [0]>} : vector<4x8x32xbf16>, vector<4x8x32xbf16>, vector<4x8x8xf32> -> vector<4x8x8xf32>
    "tpu.trace_stop"() : () -> ()
    %53 = vector.broadcast %40 : vector<4x1x8xf32> to vector<4x8x8xf32>
    %54 = arith.addf %52, %53 : vector<4x8x8xf32>
    "tpu.trace_start"() <{level = 10 : i32, message = "hsd,hkd->hsk"}> : () -> ()
    %cst_41 = arith.constant dense<0.000000e+00> : vector<4x8x8xf32>
    %55 = tpu.matmul %51, %34, %cst_41 {dimension_numbers = #tpu.dot_dimension_numbers<[2], [2], [1], [1], [0, 0, 0, 1, 1, 1], [0], [0]>} : vector<4x8x32xbf16>, vector<4x8x32xbf16>, vector<4x8x8xf32> -> vector<4x8x8xf32>
    "tpu.trace_stop"() : () -> ()
    %56 = vector.broadcast %42 : vector<4x1x8xf32> to vector<4x8x8xf32>
    %57 = arith.addf %55, %56 : vector<4x8x8xf32>
    "tpu.trace_start"() <{level = 10 : i32, message = "hsd,hkd->hsk"}> : () -> ()
    %cst_42 = arith.constant dense<0.000000e+00> : vector<4x8x8xf32>
    %58 = tpu.matmul %51, %36, %cst_42 {dimension_numbers = #tpu.dot_dimension_numbers<[2], [2], [1], [1], [0, 0, 0, 1, 1, 1], [0], [0]>} : vector<4x8x32xbf16>, vector<4x8x32xbf16>, vector<4x8x8xf32> -> vector<4x8x8xf32>
    "tpu.trace_stop"() : () -> ()
    %59 = vector.broadcast %44 : vector<4x1x8xf32> to vector<4x8x8xf32>
    %60 = arith.addf %58, %59 : vector<4x8x8xf32>
    %cst_43 = arith.constant 0.353553385 : f32
    %61 = vector.broadcast %cst_43 : f32 to vector<4x8x8xf32>
    %62 = arith.mulf %54, %61 : vector<4x8x8xf32>
    %63 = arith.truncf %62 : vector<4x8x8xf32> to vector<4x8x8xbf16>
    %64 = arith.truncf %57 : vector<4x8x8xf32> to vector<4x8x8xbf16>
    "tpu.trace_start"() <{level = 10 : i32, message = "hsd,htd->hst"}> : () -> ()
    %cst_44 = arith.constant dense<0.000000e+00> : vector<4x8x8xf32>
    %65 = tpu.matmul %63, %64, %cst_44 {dimension_numbers = #tpu.dot_dimension_numbers<[2], [2], [1], [1], [0, 0, 0, 1, 1, 1], [0], [0]>} : vector<4x8x8xbf16>, vector<4x8x8xbf16>, vector<4x8x8xf32> -> vector<4x8x8xf32>
    %cst_45 = arith.constant -1.000000e+09 : f32
    "tpu.trace_stop"() : () -> ()
    %66 = vector.broadcast %cst_45 : f32 to vector<4x8x8xf32>
    %67 = arith.select %47, %65, %66 : vector<4x8x8xi1>, vector<4x8x8xf32>
    %cst_46 = arith.constant dense<0xFF800000> : vector<4x8xf32>
    %68 = vector.multi_reduction <maximumf>, %67, %cst_46 [2] : vector<4x8x8xf32> to vector<4x8xf32>
    %69 = vector.shape_cast %68 : vector<4x8xf32> to vector<4x8x1xf32>
    %70 = vector.broadcast %69 : vector<4x8x1xf32> to vector<4x8x8xf32>
    %71 = arith.subf %67, %70 : vector<4x8x8xf32>
    %72 = math.exp %71 : vector<4x8x8xf32>
    %cst_47 = arith.constant dense<0.000000e+00> : vector<4x8xf32>
    %73 = vector.multi_reduction <add>, %72, %cst_47 [2] : vector<4x8x8xf32> to vector<4x8xf32>
    %74 = vector.shape_cast %73 : vector<4x8xf32> to vector<4x8x1xf32>
    %75 = tpu.reciprocal %74 {approx = true} : vector<4x8x1xf32> -> vector<4x8x1xf32>
    %76 = vector.broadcast %75 : vector<4x8x1xf32> to vector<4x8x8xf32>
    %77 = arith.mulf %72, %76 : vector<4x8x8xf32>
    %78 = arith.truncf %77 : vector<4x8x8xf32> to vector<4x8x8xbf16>
    %79 = arith.truncf %60 : vector<4x8x8xf32> to vector<4x8x8xbf16>
    "tpu.trace_start"() <{level = 10 : i32, message = "hst,htd->hsd"}> : () -> ()
    %cst_48 = arith.constant dense<0.000000e+00> : vector<4x8x8xf32>
    %80 = tpu.matmul %78, %79, %cst_48 {dimension_numbers = #tpu.dot_dimension_numbers<[2], [1], [1], [2], [0, 0, 0, 1, 1, 2], [0], [0]>} : vector<4x8x8xbf16>, vector<4x8x8xbf16>, vector<4x8x8xf32> -> vector<4x8x8xf32>
    "tpu.trace_stop"() : () -> ()
    %81 = arith.truncf %80 : vector<4x8x8xf32> to vector<4x8x8xbf16>
    "tpu.trace_start"() <{level = 10 : i32, message = "hsd,hdk->hsk"}> : () -> ()
    %cst_49 = arith.constant dense<0.000000e+00> : vector<4x8x32xf32>
    %82 = tpu.matmul %81, %38, %cst_49 {dimension_numbers = #tpu.dot_dimension_numbers<[2], [1], [1], [2], [0, 0, 0, 1, 1, 2], [0], [0]>} : vector<4x8x8xbf16>, vector<4x8x32xbf16>, vector<4x8x32xf32> -> vector<4x8x32xf32>
    "tpu.trace_stop"() : () -> ()
    %cst_50 = arith.constant dense<0.000000e+00> : vector<8x32xf32>
    %83 = vector.multi_reduction <add>, %82, %cst_50 [0] : vector<4x8x32xf32> to vector<8x32xf32>
    %84 = vector.extract_strided_slice %30 {offsets = [8, 0], sizes = [8, 32], strides = [1, 1]} : vector<16x32xbf16> to vector<8x32xbf16>
    %85 = vector.shape_cast %84 : vector<8x32xbf16> to vector<1x8x32xbf16>
    %86 = vector.shape_cast %85 : vector<1x8x32xbf16> to vector<1x8x32xbf16>
    %87 = vector.broadcast %86 : vector<1x8x32xbf16> to vector<4x8x32xbf16>
    "tpu.trace_start"() <{level = 10 : i32, message = "hsd,hkd->hsk"}> : () -> ()
    %cst_51 = arith.constant dense<0.000000e+00> : vector<4x8x8xf32>
    %88 = tpu.matmul %87, %32, %cst_51 {dimension_numbers = #tpu.dot_dimension_numbers<[2], [2], [1], [1], [0, 0, 0, 1, 1, 1], [0], [0]>} : vector<4x8x32xbf16>, vector<4x8x32xbf16>, vector<4x8x8xf32> -> vector<4x8x8xf32>
    "tpu.trace_stop"() : () -> ()
    %89 = vector.broadcast %40 : vector<4x1x8xf32> to vector<4x8x8xf32>
    %90 = arith.addf %88, %89 : vector<4x8x8xf32>
    "tpu.trace_start"() <{level = 10 : i32, message = "hsd,hkd->hsk"}> : () -> ()
    %cst_52 = arith.constant dense<0.000000e+00> : vector<4x8x8xf32>
    %91 = tpu.matmul %87, %34, %cst_52 {dimension_numbers = #tpu.dot_dimension_numbers<[2], [2], [1], [1], [0, 0, 0, 1, 1, 1], [0], [0]>} : vector<4x8x32xbf16>, vector<4x8x32xbf16>, vector<4x8x8xf32> -> vector<4x8x8xf32>
    "tpu.trace_stop"() : () -> ()
    %92 = vector.broadcast %42 : vector<4x1x8xf32> to vector<4x8x8xf32>
    %93 = arith.addf %91, %92 : vector<4x8x8xf32>
    "tpu.trace_start"() <{level = 10 : i32, message = "hsd,hkd->hsk"}> : () -> ()
    %cst_53 = arith.constant dense<0.000000e+00> : vector<4x8x8xf32>
    %94 = tpu.matmul %87, %36, %cst_53 {dimension_numbers = #tpu.dot_dimension_numbers<[2], [2], [1], [1], [0, 0, 0, 1, 1, 1], [0], [0]>} : vector<4x8x32xbf16>, vector<4x8x32xbf16>, vector<4x8x8xf32> -> vector<4x8x8xf32>
    "tpu.trace_stop"() : () -> ()
    %95 = vector.broadcast %44 : vector<4x1x8xf32> to vector<4x8x8xf32>
    %96 = arith.addf %94, %95 : vector<4x8x8xf32>
    %cst_54 = arith.constant 0.353553385 : f32
    %97 = vector.broadcast %cst_54 : f32 to vector<4x8x8xf32>
    %98 = arith.mulf %90, %97 : vector<4x8x8xf32>
    %99 = arith.truncf %98 : vector<4x8x8xf32> to vector<4x8x8xbf16>
    %100 = arith.truncf %93 : vector<4x8x8xf32> to vector<4x8x8xbf16>
    "tpu.trace_start"() <{level = 10 : i32, message = "hsd,htd->hst"}> : () -> ()
    %cst_55 = arith.constant dense<0.000000e+00> : vector<4x8x8xf32>
    %101 = tpu.matmul %99, %100, %cst_55 {dimension_numbers = #tpu.dot_dimension_numbers<[2], [2], [1], [1], [0, 0, 0, 1, 1, 1], [0], [0]>} : vector<4x8x8xbf16>, vector<4x8x8xbf16>, vector<4x8x8xf32> -> vector<4x8x8xf32>
    %cst_56 = arith.constant -1.000000e+09 : f32
    "tpu.trace_stop"() : () -> ()
    %102 = vector.broadcast %cst_56 : f32 to vector<4x8x8xf32>
    %103 = arith.select %47, %101, %102 : vector<4x8x8xi1>, vector<4x8x8xf32>
    %cst_57 = arith.constant dense<0xFF800000> : vector<4x8xf32>
    %104 = vector.multi_reduction <maximumf>, %103, %cst_57 [2] : vector<4x8x8xf32> to vector<4x8xf32>
    %105 = vector.shape_cast %104 : vector<4x8xf32> to vector<4x8x1xf32>
    %106 = vector.broadcast %105 : vector<4x8x1xf32> to vector<4x8x8xf32>
    %107 = arith.subf %103, %106 : vector<4x8x8xf32>
    %108 = math.exp %107 : vector<4x8x8xf32>
    %cst_58 = arith.constant dense<0.000000e+00> : vector<4x8xf32>
    %109 = vector.multi_reduction <add>, %108, %cst_58 [2] : vector<4x8x8xf32> to vector<4x8xf32>
    %110 = vector.shape_cast %109 : vector<4x8xf32> to vector<4x8x1xf32>
    %111 = tpu.reciprocal %110 {approx = true} : vector<4x8x1xf32> -> vector<4x8x1xf32>
    %112 = vector.broadcast %111 : vector<4x8x1xf32> to vector<4x8x8xf32>
    %113 = arith.mulf %108, %112 : vector<4x8x8xf32>
    %114 = arith.truncf %113 : vector<4x8x8xf32> to vector<4x8x8xbf16>
    %115 = arith.truncf %96 : vector<4x8x8xf32> to vector<4x8x8xbf16>
    "tpu.trace_start"() <{level = 10 : i32, message = "hst,htd->hsd"}> : () -> ()
    %cst_59 = arith.constant dense<0.000000e+00> : vector<4x8x8xf32>
    %116 = tpu.matmul %114, %115, %cst_59 {dimension_numbers = #tpu.dot_dimension_numbers<[2], [1], [1], [2], [0, 0, 0, 1, 1, 2], [0], [0]>} : vector<4x8x8xbf16>, vector<4x8x8xbf16>, vector<4x8x8xf32> -> vector<4x8x8xf32>
    "tpu.trace_stop"() : () -> ()
    %117 = arith.truncf %116 : vector<4x8x8xf32> to vector<4x8x8xbf16>
    "tpu.trace_start"() <{level = 10 : i32, message = "hsd,hdk->hsk"}> : () -> ()
    %cst_60 = arith.constant dense<0.000000e+00> : vector<4x8x32xf32>
    %118 = tpu.matmul %117, %38, %cst_60 {dimension_numbers = #tpu.dot_dimension_numbers<[2], [1], [1], [2], [0, 0, 0, 1, 1, 2], [0], [0]>} : vector<4x8x8xbf16>, vector<4x8x32xbf16>, vector<4x8x32xf32> -> vector<4x8x32xf32>
    "tpu.trace_stop"() : () -> ()
    %cst_61 = arith.constant dense<0.000000e+00> : vector<8x32xf32>
    %119 = vector.multi_reduction <add>, %118, %cst_61 [0] : vector<4x8x32xf32> to vector<8x32xf32>
    %120 = tpu.concatenate %83, %119 in 0 : vector<8x32xf32>, vector<8x32xf32> -> vector<16x32xf32>
    %c0_62 = arith.constant 0 : index
    %c0_63 = arith.constant 0 : index
    %c0_64 = arith.constant 0 : index
    %121 = vector.load %arg11[%c0_62, %c0_63, %c0_64] : memref<1x1x32xf32, #tpu.memory_space<vmem>>, vector<1x1x32xf32>
    %122 = vector.shape_cast %121 : vector<1x1x32xf32> to vector<1x32xf32>
    %123 = vector.broadcast %122 : vector<1x32xf32> to vector<16x32xf32>
    %124 = arith.addf %120, %123 : vector<16x32xf32>
    %125 = arith.addf %3, %124 : vector<16x32xf32>
    %c0_65 = arith.constant 0 : index
    %c0_66 = arith.constant 0 : index
    %c0_67 = arith.constant 0 : index
    %126 = vector.load %arg12[%c0_65, %c0_66, %c0_67] : memref<1x1x32xf32, #tpu.memory_space<vmem>>, vector<1x1x32xf32>
    %127 = vector.shape_cast %126 : vector<1x1x32xf32> to vector<1x32xf32>
    %c0_68 = arith.constant 0 : index
    %c0_69 = arith.constant 0 : index
    %c0_70 = arith.constant 0 : index
    %128 = vector.load %arg13[%c0_68, %c0_69, %c0_70] : memref<1x1x32xf32, #tpu.memory_space<vmem>>, vector<1x1x32xf32>
    %129 = vector.shape_cast %128 : vector<1x1x32xf32> to vector<1x32xf32>
    %cst_71 = arith.constant dense<0.000000e+00> : vector<16xf32>
    %130 = vector.multi_reduction <add>, %125, %cst_71 [1] : vector<16x32xf32> to vector<16xf32>
    %131 = vector.shape_cast %130 : vector<16xf32> to vector<16x1xf32>
    %cst_72 = arith.constant 3.200000e+01 : f32
    %132 = vector.broadcast %cst_72 : f32 to vector<16x1xf32>
    %133 = arith.divf %131, %132 : vector<16x1xf32>
    %134 = vector.broadcast %133 : vector<16x1xf32> to vector<16x32xf32>
    %135 = arith.subf %125, %134 : vector<16x32xf32>
    %136 = arith.mulf %135, %135 : vector<16x32xf32>
    %cst_73 = arith.constant dense<0.000000e+00> : vector<16xf32>
    %137 = vector.multi_reduction <add>, %136, %cst_73 [1] : vector<16x32xf32> to vector<16xf32>
    %138 = vector.shape_cast %137 : vector<16xf32> to vector<16x1xf32>
    %cst_74 = arith.constant 3.200000e+01 : f32
    %139 = vector.broadcast %cst_74 : f32 to vector<16x1xf32>
    %140 = arith.divf %138, %139 : vector<16x1xf32>
    %141 = vector.broadcast %133 : vector<16x1xf32> to vector<16x32xf32>
    %142 = arith.subf %125, %141 : vector<16x32xf32>
    %cst_75 = arith.constant 9.99999974E-6 : f32
    %143 = vector.broadcast %cst_75 : f32 to vector<16x1xf32>
    %144 = arith.addf %140, %143 : vector<16x1xf32>
    %145 = math.rsqrt %144 : vector<16x1xf32>
    %146 = vector.broadcast %145 : vector<16x1xf32> to vector<16x32xf32>
    %147 = arith.mulf %142, %146 : vector<16x32xf32>
    %148 = vector.broadcast %127 : vector<1x32xf32> to vector<16x32xf32>
    %149 = arith.mulf %147, %148 : vector<16x32xf32>
    %150 = vector.broadcast %129 : vector<1x32xf32> to vector<16x32xf32>
    %151 = arith.addf %149, %150 : vector<16x32xf32>
    %152 = arith.truncf %151 : vector<16x32xf32> to vector<16x32xbf16>
    %c0_76 = arith.constant 0 : index
    %c0_77 = arith.constant 0 : index
    %c0_78 = arith.constant 0 : index
    %153 = vector.load %arg14[%c0_76, %c0_77, %c0_78] : memref<1x32x128xbf16, #tpu.memory_space<vmem>>, vector<1x32x128xbf16>
    %154 = vector.shape_cast %153 : vector<1x32x128xbf16> to vector<32x128xbf16>
    %cst_79 = arith.constant dense<0.000000e+00> : vector<16x128xf32>
    %155 = tpu.matmul %152, %154, %cst_79 {dimension_numbers = #tpu.dot_dimension_numbers<[1], [0], [0], [1], [0, 0, 1, 1], [], []>} : vector<16x32xbf16>, vector<32x128xbf16>, vector<16x128xf32> -> vector<16x128xf32>
    %c0_80 = arith.constant 0 : index
    %c0_81 = arith.constant 0 : index
    %c0_82 = arith.constant 0 : index
    %156 = vector.load %arg15[%c0_80, %c0_81, %c0_82] : memref<1x1x128xf32, #tpu.memory_space<vmem>>, vector<1x1x128xf32>
    %157 = vector.shape_cast %156 : vector<1x1x128xf32> to vector<1x128xf32>
    %158 = vector.broadcast %157 : vector<1x128xf32> to vector<16x128xf32>
    %159 = arith.addf %155, %158 : vector<16x128xf32>
    %cst_83 = arith.constant 1.702000e+00 : f32
    %160 = vector.broadcast %cst_83 : f32 to vector<16x128xf32>
    %161 = arith.mulf %160, %159 : vector<16x128xf32>
    %162 = arith.negf %161 : vector<16x128xf32>
    %163 = math.exp %162 : vector<16x128xf32>
    %cst_84 = arith.constant 1.000000e+00 : f32
    %164 = vector.broadcast %cst_84 : f32 to vector<16x128xf32>
    %165 = arith.addf %164, %163 : vector<16x128xf32>
    %166 = arith.divf %164, %165 : vector<16x128xf32>
    %167 = arith.mulf %159, %166 : vector<16x128xf32>
    %168 = arith.truncf %167 : vector<16x128xf32> to vector<16x128xbf16>
    %c0_85 = arith.constant 0 : index
    %c0_86 = arith.constant 0 : index
    %c0_87 = arith.constant 0 : index
    %169 = vector.load %arg16[%c0_85, %c0_86, %c0_87] : memref<1x128x32xbf16, #tpu.memory_space<vmem>>, vector<1x128x32xbf16>
    %170 = vector.shape_cast %169 : vector<1x128x32xbf16> to vector<128x32xbf16>
    %cst_88 = arith.constant dense<0.000000e+00> : vector<16x32xf32>
    %171 = tpu.matmul %168, %170, %cst_88 {dimension_numbers = #tpu.dot_dimension_numbers<[1], [0], [0], [1], [0, 0, 1, 1], [], []>} : vector<16x128xbf16>, vector<128x32xbf16>, vector<16x32xf32> -> vector<16x32xf32>
    %c0_89 = arith.constant 0 : index
    %c0_90 = arith.constant 0 : index
    %c0_91 = arith.constant 0 : index
    %172 = vector.load %arg17[%c0_89, %c0_90, %c0_91] : memref<1x1x32xf32, #tpu.memory_space<vmem>>, vector<1x1x32xf32>
    %173 = vector.shape_cast %172 : vector<1x1x32xf32> to vector<1x32xf32>
    %174 = vector.broadcast %173 : vector<1x32xf32> to vector<16x32xf32>
    %175 = arith.addf %171, %174 : vector<16x32xf32>
    %176 = arith.addf %125, %175 : vector<16x32xf32>
    %c0_92 = arith.constant 0 : index
    %c0_93 = arith.constant 0 : index
    %177 = vector.load %arg21[%c0_92, %c0_93] : memref<16x32xf32, #tpu.memory_space<vmem>>, vector<16x32xf32>
    tpu.vector_store %arg21[%c0_92, %c0_93], %176 {strides = array<i32>} : memref<16x32xf32, #tpu.memory_space<vmem>>, vector<16x32xf32>,
    %c1_i32 = arith.constant 1 : i32
    %178 = arith.cmpi eq, %arg0, %c1_i32 : i32
    %179 = arith.extui %178 : i1 to i32
    %c0_i32_94 = arith.constant 0 : i32
    %180 = arith.cmpi ne, %179, %c0_i32_94 : i32
    scf.if %180 {
      %c0_95 = arith.constant 0 : index
      %c0_96 = arith.constant 0 : index
      %181 = vector.load %arg18[%c0_95, %c0_96] : memref<1x32xf32, #tpu.memory_space<vmem>>, vector<1x32xf32>
      %c0_97 = arith.constant 0 : index
      %c0_98 = arith.constant 0 : index
      %182 = vector.load %arg19[%c0_97, %c0_98] : memref<1x32xf32, #tpu.memory_space<vmem>>, vector<1x32xf32>
      %cst_99 = arith.constant dense<0.000000e+00> : vector<16xf32>
      %183 = vector.multi_reduction <add>, %176, %cst_99 [1] : vector<16x32xf32> to vector<16xf32>
      %184 = vector.shape_cast %183 : vector<16xf32> to vector<16x1xf32>
      %cst_100 = arith.constant 3.200000e+01 : f32
      %185 = vector.broadcast %cst_100 : f32 to vector<16x1xf32>
      %186 = arith.divf %184, %185 : vector<16x1xf32>
      %187 = vector.broadcast %186 : vector<16x1xf32> to vector<16x32xf32>
      %188 = arith.subf %176, %187 : vector<16x32xf32>
      %189 = arith.mulf %188, %188 : vector<16x32xf32>
      %cst_101 = arith.constant dense<0.000000e+00> : vector<16xf32>
      %190 = vector.multi_reduction <add>, %189, %cst_101 [1] : vector<16x32xf32> to vector<16xf32>
      %191 = vector.shape_cast %190 : vector<16xf32> to vector<16x1xf32>
      %cst_102 = arith.constant 3.200000e+01 : f32
      %192 = vector.broadcast %cst_102 : f32 to vector<16x1xf32>
      %193 = arith.divf %191, %192 : vector<16x1xf32>
      %194 = vector.broadcast %186 : vector<16x1xf32> to vector<16x32xf32>
      %195 = arith.subf %176, %194 : vector<16x32xf32>
      %cst_103 = arith.constant 9.99999974E-6 : f32
      %196 = vector.broadcast %cst_103 : f32 to vector<16x1xf32>
      %197 = arith.addf %193, %196 : vector<16x1xf32>
      %198 = math.rsqrt %197 : vector<16x1xf32>
      %199 = vector.broadcast %198 : vector<16x1xf32> to vector<16x32xf32>
      %200 = arith.mulf %195, %199 : vector<16x32xf32>
      %201 = vector.broadcast %181 : vector<1x32xf32> to vector<16x32xf32>
      %202 = arith.mulf %200, %201 : vector<16x32xf32>
      %203 = vector.broadcast %182 : vector<1x32xf32> to vector<16x32xf32>
      %204 = arith.addf %202, %203 : vector<16x32xf32>
      %c0_104 = arith.constant 0 : index
      %c0_105 = arith.constant 0 : index
      %205 = vector.load %arg20[%c0_104, %c0_105] : memref<16x32xf32, #tpu.memory_space<vmem>>, vector<16x32xf32>
      tpu.vector_store %arg20[%c0_104, %c0_105], %204 {strides = array<i32>} : memref<16x32xf32, #tpu.memory_space<vmem>>, vector<16x32xf32>,
    } else {
    }
    return
  }
  func.func @transform_0(%arg0: i32) -> (i32, i32) {
    %c0_i32 = arith.constant 0 : i32
    %c0_i32_0 = arith.constant 0 : i32
    %c0_i32_1 = arith.constant 0 : i32
    return %c0_i32, %c0_i32_0 : i32, i32
  }
  func.func @transform_1(%arg0: i32) -> (i32, i32, i32) {
    %c0_i32 = arith.constant 0 : i32
    %c0_i32_0 = arith.constant 0 : i32
    %c0_i32_1 = arith.constant 0 : i32
    return %arg0, %c0_i32, %c0_i32_0 : i32, i32, i32
  }
  func.func @transform_2(%arg0: i32) -> (i32, i32, i32) {
    %c0_i32 = arith.constant 0 : i32
    %c0_i32_0 = arith.constant 0 : i32
    %c0_i32_1 = arith.constant 0 : i32
    return %arg0, %c0_i32, %c0_i32_0 : i32, i32, i32
  }
  func.func @transform_3(%arg0: i32) -> (i32, i32, i32, i32) {
    %c0_i32 = arith.constant 0 : i32
    %c0_i32_0 = arith.constant 0 : i32
    %c0_i32_1 = arith.constant 0 : i32
    %c0_i32_2 = arith.constant 0 : i32
    return %arg0, %c0_i32, %c0_i32_0, %c0_i32_1 : i32, i32, i32, i32
  }
  func.func @transform_4(%arg0: i32) -> (i32, i32, i32, i32) {
    %c0_i32 = arith.constant 0 : i32
    %c0_i32_0 = arith.constant 0 : i32
    %c0_i32_1 = arith.constant 0 : i32
    %c0_i32_2 = arith.constant 0 : i32
    return %arg0, %c0_i32, %c0_i32_0, %c0_i32_1 : i32, i32, i32, i32
  }
  func.func @transform_5(%arg0: i32) -> (i32, i32, i32, i32) {
    %c0_i32 = arith.constant 0 : i32
    %c0_i32_0 = arith.constant 0 : i32
    %c0_i32_1 = arith.constant 0 : i32
    %c0_i32_2 = arith.constant 0 : i32
    return %arg0, %c0_i32, %c0_i32_0, %c0_i32_1 : i32, i32, i32, i32
  }
  func.func @transform_6(%arg0: i32) -> (i32, i32, i32, i32) {
    %c0_i32 = arith.constant 0 : i32
    %c0_i32_0 = arith.constant 0 : i32
    %c0_i32_1 = arith.constant 0 : i32
    %c0_i32_2 = arith.constant 0 : i32
    return %arg0, %c0_i32, %c0_i32_0, %c0_i32_1 : i32, i32, i32, i32
  }
  func.func @transform_7(%arg0: i32) -> (i32, i32, i32, i32) {
    %c0_i32 = arith.constant 0 : i32
    %c0_i32_0 = arith.constant 0 : i32
    %c0_i32_1 = arith.constant 0 : i32
    %c0_i32_2 = arith.constant 0 : i32
    return %arg0, %c0_i32, %c0_i32_0, %c0_i32_1 : i32, i32, i32, i32
  }
  func.func @transform_8(%arg0: i32) -> (i32, i32, i32, i32) {
    %c0_i32 = arith.constant 0 : i32
    %c0_i32_0 = arith.constant 0 : i32
    %c0_i32_1 = arith.constant 0 : i32
    %c0_i32_2 = arith.constant 0 : i32
    return %arg0, %c0_i32, %c0_i32_0, %c0_i32_1 : i32, i32, i32, i32
  }
  func.func @transform_9(%arg0: i32) -> (i32, i32, i32, i32) {
    %c0_i32 = arith.constant 0 : i32
    %c0_i32_0 = arith.constant 0 : i32
    %c0_i32_1 = arith.constant 0 : i32
    %c0_i32_2 = arith.constant 0 : i32
    return %arg0, %c0_i32, %c0_i32_0, %c0_i32_1 : i32, i32, i32, i32
  }
  func.func @transform_10(%arg0: i32) -> (i32, i32, i32) {
    %c0_i32 = arith.constant 0 : i32
    %c0_i32_0 = arith.constant 0 : i32
    %c0_i32_1 = arith.constant 0 : i32
    return %arg0, %c0_i32, %c0_i32_0 : i32, i32, i32
  }
  func.func @transform_11(%arg0: i32) -> (i32, i32, i32) {
    %c0_i32 = arith.constant 0 : i32
    %c0_i32_0 = arith.constant 0 : i32
    %c0_i32_1 = arith.constant 0 : i32
    return %arg0, %c0_i32, %c0_i32_0 : i32, i32, i32
  }
  func.func @transform_12(%arg0: i32) -> (i32, i32, i32) {
    %c0_i32 = arith.constant 0 : i32
    %c0_i32_0 = arith.constant 0 : i32
    %c0_i32_1 = arith.constant 0 : i32
    return %arg0, %c0_i32, %c0_i32_0 : i32, i32, i32
  }
  func.func @transform_13(%arg0: i32) -> (i32, i32, i32) {
    %c0_i32 = arith.constant 0 : i32
    %c0_i32_0 = arith.constant 0 : i32
    %c0_i32_1 = arith.constant 0 : i32
    return %arg0, %c0_i32, %c0_i32_0 : i32, i32, i32
  }
  func.func @transform_14(%arg0: i32) -> (i32, i32, i32) {
    %c0_i32 = arith.constant 0 : i32
    %c0_i32_0 = arith.constant 0 : i32
    %c0_i32_1 = arith.constant 0 : i32
    return %arg0, %c0_i32, %c0_i32_0 : i32, i32, i32
  }
  func.func @transform_15(%arg0: i32) -> (i32, i32, i32) {
    %c0_i32 = arith.constant 0 : i32
    %c0_i32_0 = arith.constant 0 : i32
    %c0_i32_1 = arith.constant 0 : i32
    return %arg0, %c0_i32, %c0_i32_0 : i32, i32, i32
  }
  func.func @transform_16(%arg0: i32) -> (i32, i32, i32) {
    %c0_i32 = arith.constant 0 : i32
    %c0_i32_0 = arith.constant 0 : i32
    %c0_i32_1 = arith.constant 0 : i32
    return %arg0, %c0_i32, %c0_i32_0 : i32, i32, i32
  }
  func.func @transform_17(%arg0: i32) -> (i32, i32) {
    %c0_i32 = arith.constant 0 : i32
    %c0_i32_0 = arith.constant 0 : i32
    %c0_i32_1 = arith.constant 0 : i32
    return %c0_i32, %c0_i32_0 : i32, i32
  }
  func.func @transform_18(%arg0: i32) -> (i32, i32) {
    %c0_i32 = arith.constant 0 : i32
    %c0_i32_0 = arith.constant 0 : i32
    %c0_i32_1 = arith.constant 0 : i32
    return %c0_i32, %c0_i32_0 : i32, i32
  }
  func.func @transform_19(%arg0: i32) -> (i32, i32) {
    %c0_i32 = arith.constant 0 : i32
    %c0_i32_0 = arith.constant 0 : i32
    %c0_i32_1 = arith.constant 0 : i32
    return %c0_i32, %c0_i32_0 : i32, i32
  }
}

</mosaic_0001>

<llo_original>
// kernel: tpu_custom_call.1
$region0: #{tpu_custom_call.1}
  #allocation0 [shape = 'u32[]', space=smem, size = 0x4, offset = 0x4, fixed_abs, tag = 'smem constant byte address 0x4 - core index']
  #allocation1 [shape = 'u32[144,128]{1,0:T(1,128)}', space=vmem, size = 0x12000, scoped, tag = 'internal scratch']
  #allocation2 [shape = 'f32[16,32]{1,0:T(8,128)}', space=vmem, size = 0x2000, scoped, tag = 'scratch operand']
  %s0 = inlined_call_operand.hbm [shape: f32[16,32], index: 0, kind: input, shape index: {}]
  %s1 = inlined_call_operand.hbm [shape: f32[2,1,32], index: 1, kind: input, shape index: {}]
  %s2 = inlined_call_operand.hbm [shape: f32[2,1,32], index: 2, kind: input, shape index: {}]
  %s3 = inlined_call_operand.vmem [shape: bf16[2,4,8,32], index: 3, kind: input, shape index: {}]
  %s4 = inlined_call_operand.vmem [shape: f32[2,4,1,8], index: 4, kind: input, shape index: {}]
  %s5 = inlined_call_operand.vmem [shape: bf16[2,4,8,32], index: 5, kind: input, shape index: {}]
  %s6 = inlined_call_operand.vmem [shape: f32[2,4,1,8], index: 6, kind: input, shape index: {}]
  %s7 = inlined_call_operand.vmem [shape: bf16[2,4,8,32], index: 7, kind: input, shape index: {}]
  %s8 = inlined_call_operand.vmem [shape: f32[2,4,1,8], index: 8, kind: input, shape index: {}]
  %s9 = inlined_call_operand.vmem [shape: bf16[2,4,8,32], index: 9, kind: input, shape index: {}]
  %s10 = inlined_call_operand.hbm [shape: f32[2,1,32], index: 10, kind: input, shape index: {}]
  %s11 = inlined_call_operand.hbm [shape: f32[2,1,32], index: 11, kind: input, shape index: {}]
  %s12 = inlined_call_operand.hbm [shape: f32[2,1,32], index: 12, kind: input, shape index: {}]
  %s13 = inlined_call_operand.vmem [shape: bf16[2,32,128], index: 13, kind: input, shape index: {}]
  %s14 = inlined_call_operand.hbm [shape: f32[2,1,128], index: 14, kind: input, shape index: {}]
  %s15 = inlined_call_operand.vmem [shape: bf16[2,128,32], index: 15, kind: input, shape index: {}]
  %s16 = inlined_call_operand.vmem [shape: f32[2,1,32], index: 16, kind: input, shape index: {}]
  %s17 = inlined_call_operand.vmem [shape: f32[1,32], index: 17, kind: input, shape index: {}]
  %s18 = inlined_call_operand.vmem [shape: f32[1,32], index: 18, kind: input, shape index: {}]
  %s19 = inlined_call_operand.hbm [shape: f32[16,32], index: 19, kind: output, shape index: {}]
  %s20 = sld [smem:[#allocation0]]
  $region145: #{tpu_custom_call.1} parent=0
    _
  %s22 = ssub.s32 1, %s20
  %s23 = scalar_select 0, %s22, %s20
  $region1: #{tpu_custom_call.1} parent=0
    #allocation3 [shape = 'u8[8192]{0}', space=vmem, size = 0x2000, scoped, tag = 'input window, operand 0, single buffered']
    #allocation4 [shape = 's32[2]{0}', space=sflag, size = 0x8, scoped, tag = 'scoped memory for tpu_custom_call.1']
    #allocation5 [shape = 's32[2]{0}', space=sflag, size = 0x8, scoped, tag = 'scoped memory for tpu_custom_call.1']
    #allocation6 [shape = 'u8[1024]{0}', space=vmem, size = 0x400, scoped, tag = 'input window, operand 1']
    #allocation7 [shape = 's32[2]{0}', space=sflag, size = 0x8, scoped, tag = 'scoped memory for tpu_custom_call.1']
    #allocation8 [shape = 'u8[1024]{0}', space=vmem, size = 0x400, scoped, tag = 'input window, operand 2']
    #allocation9 [shape = 'u8[1024]{0}', space=vmem, size = 0x400, scoped, tag = 'input window, operand 10']
    #allocation10 [shape = 's32[2]{0}', space=sflag, size = 0x8, scoped, tag = 'scoped memory for tpu_custom_call.1']
    #allocation11 [shape = 'u8[1024]{0}', space=vmem, size = 0x400, scoped, tag = 'input window, operand 11']
    #allocation12 [shape = 'u8[1024]{0}', space=vmem, size = 0x400, scoped, tag = 'input window, operand 12']
    #allocation13 [shape = 's32[2]{0}', space=sflag, size = 0x8, scoped, tag = 'scoped memory for tpu_custom_call.1']
    #allocation14 [shape = 'u8[1024]{0}', space=vmem, size = 0x400, scoped, tag = 'input window, operand 14']
    #allocation15 [shape = 'u8[8192]{0}', space=vmem, size = 0x2000, scoped, tag = 'output window, operand 0, single buffered']
    %24 = vsyncpa [#allocation4], 0
    %25 = vsyncpa [#allocation7], 0
    %s26 = scalar_lea.sflag [#allocation7], 1
    %27 = vsyncpa %s26, 0
    %28 = vsyncpa [#allocation10], 0
    %s29 = scalar_lea.sflag [#allocation10], 1
    %30 = vsyncpa %s29, 0
    %31 = vsyncpa [#allocation13], 0
    %s32 = scalar_lea.sflag [#allocation13], 1
    %33 = vsyncpa %s32, 0
    %34 = vsyncpa [#allocation5], 0
    loop: start=0, step=1, limit=4
    $region2: #{tpu_custom_call.1} parent=1 // loop_pre_header
      _
    $region3: #{tpu_custom_call.1} parent=1 // loop_header
      %s36 = sphi 0, %s40
      %p37 = scmp.ge.s32.totalorder %s36, 4
      %s44 = sphi 0, %s44
      %s46 = sphi 0, %s44
      %s47 = sphi 0, %s46
      %s61 = sphi 0, %s47
      %s67 = sphi 0, %s69
      %s70 = sphi 0, %s67
      %s71 = sphi 0, %s70
      %s87 = sphi 0, %s71
      %s93 = sphi 0, %s95
      %s96 = sphi 0, %s93
      %s97 = sphi 0, %s96
      %s113 = sphi 0, %s97
      %s119 = sphi 0, %s121
      %s122 = sphi 0, %s119
      %s123 = sphi 0, %s122
      %s139 = sphi 0, %s123
      %s145 = sphi 0, %s147
      %s148 = sphi 0, %s145
      %s149 = sphi 0, %s148
      %s165 = sphi 0, %s149
      %s171 = sphi 0, %s173
      %s174 = sphi 0, %s171
      %s175 = sphi 0, %s174
      %s191 = sphi 0, %s175
      %s197 = sphi 0, %s199
      %s200 = sphi 0, %s197
      %s201 = sphi 0, %s200
      %s217 = sphi 0, %s201
      %s223 = sphi 0, %s225
      %s226 = sphi 0, %s223
      %s227 = sphi 0, %s226
      %s243 = sphi 0, %s227
      %s249 = sphi 0, %s251
      %s252 = sphi 0, %s249
      %s253 = sphi 0, %s252
      %s269 = sphi 0, %s253
      %s275 = sphi 0, %s277
      %s278 = sphi 0, %s275
      %s279 = sphi 0, %s278
      %s295 = sphi 0, %s279
      %s301 = sphi 0, %s303
      %s304 = sphi 0, %s301
      %s305 = sphi 0, %s304
      %s321 = sphi 0, %s305
      %s327 = sphi 0, %s329
      %s330 = sphi 0, %s327
      %s331 = sphi 0, %s330
      %s347 = sphi 0, %s331
      %s353 = sphi 0, %s355
      %s356 = sphi 0, %s353
      %s357 = sphi 0, %s356
      %s373 = sphi 0, %s357
      %s379 = sphi 0, %s381
      %s382 = sphi 0, %s379
      %s383 = sphi 0, %s382
      %s399 = sphi 0, %s383
      %s405 = sphi 0, %s407
      %s408 = sphi 0, %s405
      %s409 = sphi 0, %s408
      %s425 = sphi 0, %s409
      %s431 = sphi 0, %s433
      %s434 = sphi 0, %s431
      %s435 = sphi 0, %s434
      %s451 = sphi 0, %s435
      %s457 = sphi 0, %s459
      %s460 = sphi 0, %s457
      %s461 = sphi 0, %s460
      %s477 = sphi 0, %s461
      %s481 = sphi 0, %s481
      %s483 = sphi 0, %s481
      %s484 = sphi 0, %s483
      %s498 = sphi 0, %s484
      %s502 = sphi 0, %s502
      %s504 = sphi 0, %s502
      %s505 = sphi 0, %s504
      %s519 = sphi 0, %s505
      %s523 = sphi 0, %s523
      %s525 = sphi 0, %s523
      %s526 = sphi 0, %s525
      %s540 = sphi 0, %s526
    $region4: #{tpu_custom_call.1} parent=1 // loop_header_branch
      %39 = sbr.rel (%p37) target = $region8
    $region5: #{tpu_custom_call.1} parent=1 // loop_body
      %s41 = ssub.s32 %s36, 1
      %s42 = ssub.s32 %s36, 2
      %s43 = sadd.s32 %s36, 1
      %s45 = sadd.s32 %s44, 1
      %p48 = scmp.eq.s32.totalorder %s36, 1
      %p49 = scmp.ne.s32.totalorder %s44, %s46
      %p50 = scmp.eq.s32.totalorder %s36, 0
      %p51 = por %p49, %p50
      %p52 = scmp.ne.s32.totalorder %s44, %s46
      %p53 = scmp.eq.s32.totalorder %s41, 1
      %p54 = por %p52, %p53
      %p55 = scmp.ne.s32.totalorder %s46, %s47
      %p56 = scmp.eq.s32.totalorder %s41, 0
      %p57 = por %p55, %p56
      %p58 = scmp.ne.s32.totalorder %s46, %s47
      %p59 = scmp.eq.s32.totalorder %s42, 1
      %p60 = por %p58, %p59
      %p62 = scmp.ne.s32.totalorder %s47, %s61
      %p63 = scmp.eq.s32.totalorder %s42, 0
      %p64 = por %p62, %p63
      %s65 = ssub.s32 %s36, %s43
      %p66 = scmp.eq.s32.totalorder %s65, 0
      %s68 = sadd.s32 %s67, 1
      %s69 = scalar_select %p66, %s67, %s68
      %p72 = pneg %p66
      %p73 = scmp.eq.s32.totalorder %s36, 1
      %p74 = por %p72, %p73
      %p75 = scmp.ne.s32.totalorder %s67, %s70
      %p76 = scmp.eq.s32.totalorder %s36, 0
      %p77 = por %p75, %p76
      %p78 = scmp.ne.s32.totalorder %s67, %s70
      %p79 = scmp.eq.s32.totalorder %s41, 1
      %p80 = por %p78, %p79
      %p81 = scmp.ne.s32.totalorder %s70, %s71
      %p82 = scmp.eq.s32.totalorder %s41, 0
      %p83 = por %p81, %p82
      %p84 = scmp.ne.s32.totalorder %s70, %s71
      %p85 = scmp.eq.s32.totalorder %s42, 1
      %p86 = por %p84, %p85
      %p88 = scmp.ne.s32.totalorder %s71, %s87
      %p89 = scmp.eq.s32.totalorder %s42, 0
      %p90 = por %p88, %p89
      %s91 = ssub.s32 %s36, %s43
      %p92 = scmp.eq.s32.totalorder %s91, 0
      %s94 = sadd.s32 %s93, 1
      %s95 = scalar_select %p92, %s93, %s94
      %p98 = pneg %p92
      %p99 = scmp.eq.s32.totalorder %s36, 1
      %p100 = por %p98, %p99
      %p101 = scmp.ne.s32.totalorder %s93, %s96
      %p102 = scmp.eq.s32.totalorder %s36, 0
      %p103 = por %p101, %p102
      %p104 = scmp.ne.s32.totalorder %s93, %s96
      %p105 = scmp.eq.s32.totalorder %s41, 1
      %p106 = por %p104, %p105
      %p107 = scmp.ne.s32.totalorder %s96, %s97
      %p108 = scmp.eq.s32.totalorder %s41, 0
      %p109 = por %p107, %p108
      %p110 = scmp.ne.s32.totalorder %s96, %s97
      %p111 = scmp.eq.s32.totalorder %s42, 1
      %p112 = por %p110, %p111
      %p114 = scmp.ne.s32.totalorder %s97, %s113
      %p115 = scmp.eq.s32.totalorder %s42, 0
      %p116 = por %p114, %p115
      %s117 = ssub.s32 %s36, %s43
      %p118 = scmp.eq.s32.totalorder %s117, 0
      %s120 = sadd.s32 %s119, 1
      %s121 = scalar_select %p118, %s119, %s120
      %p124 = pneg %p118
      %p125 = scmp.eq.s32.totalorder %s36, 1
      %p126 = por %p124, %p125
      %p127 = scmp.ne.s32.totalorder %s119, %s122
      %p128 = scmp.eq.s32.totalorder %s36, 0
      %p129 = por %p127, %p128
      %p130 = scmp.ne.s32.totalorder %s119, %s122
      %p131 = scmp.eq.s32.totalorder %s41, 1
      %p132 = por %p130, %p131
      %p133 = scmp.ne.s32.totalorder %s122, %s123
      %p134 = scmp.eq.s32.totalorder %s41, 0
      %p135 = por %p133, %p134
      %p136 = scmp.ne.s32.totalorder %s122, %s123
      %p137 = scmp.eq.s32.totalorder %s42, 1
      %p138 = por %p136, %p137
      %p140 = scmp.ne.s32.totalorder %s123, %s139
      %p141 = scmp.eq.s32.totalorder %s42, 0
      %p142 = por %p140, %p141
      %s143 = ssub.s32 %s36, %s43
      %p144 = scmp.eq.s32.totalorder %s143, 0
      %s146 = sadd.s32 %s145, 1
      %s147 = scalar_select %p144, %s145, %s146
      %p150 = pneg %p144
      %p151 = scmp.eq.s32.totalorder %s36, 1
      %p152 = por %p150, %p151
      %p153 = scmp.ne.s32.totalorder %s145, %s148
      %p154 = scmp.eq.s32.totalorder %s36, 0
      %p155 = por %p153, %p154
      %p156 = scmp.ne.s32.totalorder %s145, %s148
      %p157 = scmp.eq.s32.totalorder %s41, 1
      %p158 = por %p156, %p157
      %p159 = scmp.ne.s32.totalorder %s148, %s149
      %p160 = scmp.eq.s32.totalorder %s41, 0
      %p161 = por %p159, %p160
      %p162 = scmp.ne.s32.totalorder %s148, %s149
      %p163 = scmp.eq.s32.totalorder %s42, 1
      %p164 = por %p162, %p163
      %p166 = scmp.ne.s32.totalorder %s149, %s165
      %p167 = scmp.eq.s32.totalorder %s42, 0
      %p168 = por %p166, %p167
      %s169 = ssub.s32 %s36, %s43
      %p170 = scmp.eq.s32.totalorder %s169, 0
      %s172 = sadd.s32 %s171, 1
      %s173 = scalar_select %p170, %s171, %s172
      %p176 = pneg %p170
      %p177 = scmp.eq.s32.totalorder %s36, 1
      %p178 = por %p176, %p177
      %p179 = scmp.ne.s32.totalorder %s171, %s174
      %p180 = scmp.eq.s32.totalorder %s36, 0
      %p181 = por %p179, %p180
      %p182 = scmp.ne.s32.totalorder %s171, %s174
      %p183 = scmp.eq.s32.totalorder %s41, 1
      %p184 = por %p182, %p183
      %p185 = scmp.ne.s32.totalorder %s174, %s175
      %p186 = scmp.eq.s32.totalorder %s41, 0
      %p187 = por %p185, %p186
      %p188 = scmp.ne.s32.totalorder %s174, %s175
      %p189 = scmp.eq.s32.totalorder %s42, 1
      %p190 = por %p188, %p189
      %p192 = scmp.ne.s32.totalorder %s175, %s191
      %p193 = scmp.eq.s32.totalorder %s42, 0
      %p194 = por %p192, %p193
      %s195 = ssub.s32 %s36, %s43
      %p196 = scmp.eq.s32.totalorder %s195, 0
      %s198 = sadd.s32 %s197, 1
      %s199 = scalar_select %p196, %s197, %s198
      %p202 = pneg %p196
      %p203 = scmp.eq.s32.totalorder %s36, 1
      %p204 = por %p202, %p203
      %p205 = scmp.ne.s32.totalorder %s197, %s200
      %p206 = scmp.eq.s32.totalorder %s36, 0
      %p207 = por %p205, %p206
      %p208 = scmp.ne.s32.totalorder %s197, %s200
      %p209 = scmp.eq.s32.totalorder %s41, 1
      %p210 = por %p208, %p209
      %p211 = scmp.ne.s32.totalorder %s200, %s201
      %p212 = scmp.eq.s32.totalorder %s41, 0
      %p213 = por %p211, %p212
      %p214 = scmp.ne.s32.totalorder %s200, %s201
      %p215 = scmp.eq.s32.totalorder %s42, 1
      %p216 = por %p214, %p215
      %p218 = scmp.ne.s32.totalorder %s201, %s217
      %p219 = scmp.eq.s32.totalorder %s42, 0
      %p220 = por %p218, %p219
      %s221 = ssub.s32 %s36, %s43
      %p222 = scmp.eq.s32.totalorder %s221, 0
      %s224 = sadd.s32 %s223, 1
      %s225 = scalar_select %p222, %s223, %s224
      %p228 = pneg %p222
      %p229 = scmp.eq.s32.totalorder %s36, 1
      %p230 = por %p228, %p229
      %p231 = scmp.ne.s32.totalorder %s223, %s226
      %p232 = scmp.eq.s32.totalorder %s36, 0
      %p233 = por %p231, %p232
      %p234 = scmp.ne.s32.totalorder %s223, %s226
      %p235 = scmp.eq.s32.totalorder %s41, 1
      %p236 = por %p234, %p235
      %p237 = scmp.ne.s32.totalorder %s226, %s227
      %p238 = scmp.eq.s32.totalorder %s41, 0
      %p239 = por %p237, %p238
      %p240 = scmp.ne.s32.totalorder %s226, %s227
      %p241 = scmp.eq.s32.totalorder %s42, 1
      %p242 = por %p240, %p241
      %p244 = scmp.ne.s32.totalorder %s227, %s243
      %p245 = scmp.eq.s32.totalorder %s42, 0
      %p246 = por %p244, %p245
      %s247 = ssub.s32 %s36, %s43
      %p248 = scmp.eq.s32.totalorder %s247, 0
      %s250 = sadd.s32 %s249, 1
      %s251 = scalar_select %p248, %s249, %s250
      %p254 = pneg %p248
      %p255 = scmp.eq.s32.totalorder %s36, 1
      %p256 = por %p254, %p255
      %p257 = scmp.ne.s32.totalorder %s249, %s252
      %p258 = scmp.eq.s32.totalorder %s36, 0
      %p259 = por %p257, %p258
      %p260 = scmp.ne.s32.totalorder %s249, %s252
      %p261 = scmp.eq.s32.totalorder %s41, 1
      %p262 = por %p260, %p261
      %p263 = scmp.ne.s32.totalorder %s252, %s253
      %p264 = scmp.eq.s32.totalorder %s41, 0
      %p265 = por %p263, %p264
      %p266 = scmp.ne.s32.totalorder %s252, %s253
      %p267 = scmp.eq.s32.totalorder %s42, 1
      %p268 = por %p266, %p267
      %p270 = scmp.ne.s32.totalorder %s253, %s269
      %p271 = scmp.eq.s32.totalorder %s42, 0
      %p272 = por %p270, %p271
      %s273 = ssub.s32 %s36, %s43
      %p274 = scmp.eq.s32.totalorder %s273, 0
      %s276 = sadd.s32 %s275, 1
      %s277 = scalar_select %p274, %s275, %s276
      %p280 = pneg %p274
      %p281 = scmp.eq.s32.totalorder %s36, 1
      %p282 = por %p280, %p281
      %p283 = scmp.ne.s32.totalorder %s275, %s278
      %p284 = scmp.eq.s32.totalorder %s36, 0
      %p285 = por %p283, %p284
      %p286 = scmp.ne.s32.totalorder %s275, %s278
      %p287 = scmp.eq.s32.totalorder %s41, 1
      %p288 = por %p286, %p287
      %p289 = scmp.ne.s32.totalorder %s278, %s279
      %p290 = scmp.eq.s32.totalorder %s41, 0
      %p291 = por %p289, %p290
      %p292 = scmp.ne.s32.totalorder %s278, %s279
      %p293 = scmp.eq.s32.totalorder %s42, 1
      %p294 = por %p292, %p293
      %p296 = scmp.ne.s32.totalorder %s279, %s295
      %p297 = scmp.eq.s32.totalorder %s42, 0
      %p298 = por %p296, %p297
      %s299 = ssub.s32 %s36, %s43
      %p300 = scmp.eq.s32.totalorder %s299, 0
      %s302 = sadd.s32 %s301, 1
      %s303 = scalar_select %p300, %s301, %s302
      %p306 = pneg %p300
      %p307 = scmp.eq.s32.totalorder %s36, 1
      %p308 = por %p306, %p307
      %p309 = scmp.ne.s32.totalorder %s301, %s304
      %p310 = scmp.eq.s32.totalorder %s36, 0
      %p311 = por %p309, %p310
      %p312 = scmp.ne.s32.totalorder %s301, %s304
      %p313 = scmp.eq.s32.totalorder %s41, 1
      %p314 = por %p312, %p313
      %p315 = scmp.ne.s32.totalorder %s304, %s305
      %p316 = scmp.eq.s32.totalorder %s41, 0
      %p317 = por %p315, %p316
      %p318 = scmp.ne.s32.totalorder %s304, %s305
      %p319 = scmp.eq.s32.totalorder %s42, 1
      %p320 = por %p318, %p319
      %p322 = scmp.ne.s32.totalorder %s305, %s321
      %p323 = scmp.eq.s32.totalorder %s42, 0
      %p324 = por %p322, %p323
      %s325 = ssub.s32 %s36, %s43
      %p326 = scmp.eq.s32.totalorder %s325, 0
      %s328 = sadd.s32 %s327, 1
      %s329 = scalar_select %p326, %s327, %s328
      %p332 = pneg %p326
      %p333 = scmp.eq.s32.totalorder %s36, 1
      %p334 = por %p332, %p333
      %p335 = scmp.ne.s32.totalorder %s327, %s330
      %p336 = scmp.eq.s32.totalorder %s36, 0
      %p337 = por %p335, %p336
      %p338 = scmp.ne.s32.totalorder %s327, %s330
      %p339 = scmp.eq.s32.totalorder %s41, 1
      %p340 = por %p338, %p339
      %p341 = scmp.ne.s32.totalorder %s330, %s331
      %p342 = scmp.eq.s32.totalorder %s41, 0
      %p343 = por %p341, %p342
      %p344 = scmp.ne.s32.totalorder %s330, %s331
      %p345 = scmp.eq.s32.totalorder %s42, 1
      %p346 = por %p344, %p345
      %p348 = scmp.ne.s32.totalorder %s331, %s347
      %p349 = scmp.eq.s32.totalorder %s42, 0
      %p350 = por %p348, %p349
      %s351 = ssub.s32 %s36, %s43
      %p352 = scmp.eq.s32.totalorder %s351, 0
      %s354 = sadd.s32 %s353, 1
      %s355 = scalar_select %p352, %s353, %s354
      %p358 = pneg %p352
      %p359 = scmp.eq.s32.totalorder %s36, 1
      %p360 = por %p358, %p359
      %p361 = scmp.ne.s32.totalorder %s353, %s356
      %p362 = scmp.eq.s32.totalorder %s36, 0
      %p363 = por %p361, %p362
      %p364 = scmp.ne.s32.totalorder %s353, %s356
      %p365 = scmp.eq.s32.totalorder %s41, 1
      %p366 = por %p364, %p365
      %p367 = scmp.ne.s32.totalorder %s356, %s357
      %p368 = scmp.eq.s32.totalorder %s41, 0
      %p369 = por %p367, %p368
      %p370 = scmp.ne.s32.totalorder %s356, %s357
      %p371 = scmp.eq.s32.totalorder %s42, 1
      %p372 = por %p370, %p371
      %p374 = scmp.ne.s32.totalorder %s357, %s373
      %p375 = scmp.eq.s32.totalorder %s42, 0
      %p376 = por %p374, %p375
      %s377 = ssub.s32 %s36, %s43
      %p378 = scmp.eq.s32.totalorder %s377, 0
      %s380 = sadd.s32 %s379, 1
      %s381 = scalar_select %p378, %s379, %s380
      %p384 = pneg %p378
      %p385 = scmp.eq.s32.totalorder %s36, 1
      %p386 = por %p384, %p385
      %p387 = scmp.ne.s32.totalorder %s379, %s382
      %p388 = scmp.eq.s32.totalorder %s36, 0
      %p389 = por %p387, %p388
      %p390 = scmp.ne.s32.totalorder %s379, %s382
      %p391 = scmp.eq.s32.totalorder %s41, 1
      %p392 = por %p390, %p391
      %p393 = scmp.ne.s32.totalorder %s382, %s383
      %p394 = scmp.eq.s32.totalorder %s41, 0
      %p395 = por %p393, %p394
      %p396 = scmp.ne.s32.totalorder %s382, %s383
      %p397 = scmp.eq.s32.totalorder %s42, 1
      %p398 = por %p396, %p397
      %p400 = scmp.ne.s32.totalorder %s383, %s399
      %p401 = scmp.eq.s32.totalorder %s42, 0
      %p402 = por %p400, %p401
      %s403 = ssub.s32 %s36, %s43
      %p404 = scmp.eq.s32.totalorder %s403, 0
      %s406 = sadd.s32 %s405, 1
      %s407 = scalar_select %p404, %s405, %s406
      %p410 = pneg %p404
      %p411 = scmp.eq.s32.totalorder %s36, 1
      %p412 = por %p410, %p411
      %p413 = scmp.ne.s32.totalorder %s405, %s408
      %p414 = scmp.eq.s32.totalorder %s36, 0
      %p415 = por %p413, %p414
      %p416 = scmp.ne.s32.totalorder %s405, %s408
      %p417 = scmp.eq.s32.totalorder %s41, 1
      %p418 = por %p416, %p417
      %p419 = scmp.ne.s32.totalorder %s408, %s409
      %p420 = scmp.eq.s32.totalorder %s41, 0
      %p421 = por %p419, %p420
      %p422 = scmp.ne.s32.totalorder %s408, %s409
      %p423 = scmp.eq.s32.totalorder %s42, 1
      %p424 = por %p422, %p423
      %p426 = scmp.ne.s32.totalorder %s409, %s425
      %p427 = scmp.eq.s32.totalorder %s42, 0
      %p428 = por %p426, %p427
      %s429 = ssub.s32 %s36, %s43
      %p430 = scmp.eq.s32.totalorder %s429, 0
      %s432 = sadd.s32 %s431, 1
      %s433 = scalar_select %p430, %s431, %s432
      %p436 = pneg %p430
      %p437 = scmp.eq.s32.totalorder %s36, 1
      %p438 = por %p436, %p437
      %p439 = scmp.ne.s32.totalorder %s431, %s434
      %p440 = scmp.eq.s32.totalorder %s36, 0
      %p441 = por %p439, %p440
      %p442 = scmp.ne.s32.totalorder %s431, %s434
      %p443 = scmp.eq.s32.totalorder %s41, 1
      %p444 = por %p442, %p443
      %p445 = scmp.ne.s32.totalorder %s434, %s435
      %p446 = scmp.eq.s32.totalorder %s41, 0
      %p447 = por %p445, %p446
      %p448 = scmp.ne.s32.totalorder %s434, %s435
      %p449 = scmp.eq.s32.totalorder %s42, 1
      %p450 = por %p448, %p449
      %p452 = scmp.ne.s32.totalorder %s435, %s451
      %p453 = scmp.eq.s32.totalorder %s42, 0
      %p454 = por %p452, %p453
      %s455 = ssub.s32 %s36, %s43
      %p456 = scmp.eq.s32.totalorder %s455, 0
      %s458 = sadd.s32 %s457, 1
      %s459 = scalar_select %p456, %s457, %s458
      %p462 = pneg %p456
      %p463 = scmp.eq.s32.totalorder %s36, 1
      %p464 = por %p462, %p463
      %p465 = scmp.ne.s32.totalorder %s457, %s460
      %p466 = scmp.eq.s32.totalorder %s36, 0
      %p467 = por %p465, %p466
      %p468 = scmp.ne.s32.totalorder %s457, %s460
      %p469 = scmp.eq.s32.totalorder %s41, 1
      %p470 = por %p468, %p469
      %p471 = scmp.ne.s32.totalorder %s460, %s461
      %p472 = scmp.eq.s32.totalorder %s41, 0
      %p473 = por %p471, %p472
      %p474 = scmp.ne.s32.totalorder %s460, %s461
      %p475 = scmp.eq.s32.totalorder %s42, 1
      %p476 = por %p474, %p475
      %p478 = scmp.ne.s32.totalorder %s461, %s477
      %p479 = scmp.eq.s32.totalorder %s42, 0
      %p480 = por %p478, %p479
      %s482 = sadd.s32 %s481, 1
      %p485 = scmp.eq.s32.totalorder %s36, 1
      %p486 = scmp.ne.s32.totalorder %s481, %s483
      %p487 = scmp.eq.s32.totalorder %s36, 0
      %p488 = por %p486, %p487
      %p489 = scmp.ne.s32.totalorder %s481, %s483
      %p490 = scmp.eq.s32.totalorder %s41, 1
      %p491 = por %p489, %p490
      %p492 = scmp.ne.s32.totalorder %s483, %s484
      %p493 = scmp.eq.s32.totalorder %s41, 0
      %p494 = por %p492, %p493
      %p495 = scmp.ne.s32.totalorder %s483, %s484
      %p496 = scmp.eq.s32.totalorder %s42, 1
      %p497 = por %p495, %p496
      %p499 = scmp.ne.s32.totalorder %s484, %s498
      %p500 = scmp.eq.s32.totalorder %s42, 0
      %p501 = por %p499, %p500
      %s503 = sadd.s32 %s502, 1
      %p506 = scmp.eq.s32.totalorder %s36, 1
      %p507 = scmp.ne.s32.totalorder %s502, %s504
      %p508 = scmp.eq.s32.totalorder %s36, 0
      %p509 = por %p507, %p508
      %p510 = scmp.ne.s32.totalorder %s502, %s504
      %p511 = scmp.eq.s32.totalorder %s41, 1
      %p512 = por %p510, %p511
      %p513 = scmp.ne.s32.totalorder %s504, %s505
      %p514 = scmp.eq.s32.totalorder %s41, 0
      %p515 = por %p513, %p514
      %p516 = scmp.ne.s32.totalorder %s504, %s505
      %p517 = scmp.eq.s32.totalorder %s42, 1
      %p518 = por %p516, %p517
      %p520 = scmp.ne.s32.totalorder %s505, %s519
      %p521 = scmp.eq.s32.totalorder %s42, 0
      %p522 = por %p520, %p521
      %s524 = sadd.s32 %s523, 1
      %p527 = scmp.eq.s32.totalorder %s36, 1
      %p528 = scmp.ne.s32.totalorder %s523, %s525
      %p529 = scmp.eq.s32.totalorder %s36, 0
      %p530 = por %p528, %p529
      %p531 = scmp.ne.s32.totalorder %s523, %s525
      %p532 = scmp.eq.s32.totalorder %s41, 1
      %p533 = por %p531, %p532
      %p534 = scmp.ne.s32.totalorder %s525, %s526
      %p535 = scmp.eq.s32.totalorder %s41, 0
      %p536 = por %p534, %p535
      %p537 = scmp.ne.s32.totalorder %s525, %s526
      %p538 = scmp.eq.s32.totalorder %s42, 1
      %p539 = por %p537, %p538
      %p541 = scmp.ne.s32.totalorder %s526, %s540
      %p542 = scmp.eq.s32.totalorder %s42, 0
      %p543 = por %p541, %p542
      %p544 = scmp.le.s32.totalorder 1, %s36
      %p545 = scmp.lt.s32.totalorder %s36, 3
      %p546 = pnand %p544, %p545
      %p547 = pneg %p546
      // Predicated region
      $region9: #{tpu_custom_call.1} parent=5 // pred_check
        _
      $region10: #{tpu_custom_call.1} parent=5 // pred_check_branch
        %549 = sbr.rel (%p546) target = $region12
      $region11: #{tpu_custom_call.1} parent=5 // pred_region
        %s550 = ssub.s32 %s36, 1
        // Predicated region
        $region13: #{tpu_custom_call.1} parent=11 // pred_check
          %p551 = pneg %p57
        $region14: #{tpu_custom_call.1} parent=11 // pred_check_branch
          %553 = sbr.rel (%p551) target = $region16
        $region15: #{tpu_custom_call.1} parent=11 // pred_region
          %s555 = ssub.s32 256, 256
          %556 = vsyncadd [#allocation4], %s555
          %s557 = sshll.u32 [#allocation3], 4
          %s558 = int_to_ptr.vmem [resolvable:$true] %s557
          %563 = dma.hbm_to_vmem [thread:$0]  %s0, 256, %s558, [#allocation4], 128, 128, 8
        $region16: #{tpu_custom_call.1} parent=11 // pred_fallthru
          _
        // Predicated region
        $region17: #{tpu_custom_call.1} parent=11 // pred_check
          %p564 = pneg %p494
        $region18: #{tpu_custom_call.1} parent=11 // pred_check_branch
          %566 = sbr.rel (%p564) target = $region20
        $region19: #{tpu_custom_call.1} parent=11 // pred_region
          _
        $region20: #{tpu_custom_call.1} parent=11 // pred_fallthru
          _
        // Predicated region
        $region21: #{tpu_custom_call.1} parent=11 // pred_check
          %p567 = pneg %p515
        $region22: #{tpu_custom_call.1} parent=11 // pred_check_branch
          %569 = sbr.rel (%p567) target = $region24
        $region23: #{tpu_custom_call.1} parent=11 // pred_region
          _
        $region24: #{tpu_custom_call.1} parent=11 // pred_fallthru
          _
      $region12: #{tpu_custom_call.1} parent=5 // pred_fallthru
        _
      %p570 = scmp.lt.s32.totalorder %s36, 2
      // Predicated region
      $region25: #{tpu_custom_call.1} parent=5 // pred_check
        %p571 = pneg %p570
      $region26: #{tpu_custom_call.1} parent=5 // pred_check_branch
        %573 = sbr.rel (%p571) target = $region28
      $region27: #{tpu_custom_call.1} parent=5 // pred_region
        // Predicated region
        $region29: #{tpu_custom_call.1} parent=27 // pred_check
          %p574 = pneg %p77
        $region30: #{tpu_custom_call.1} parent=27 // pred_check_branch
          %576 = sbr.rel (%p574) target = $region32
        $region31: #{tpu_custom_call.1} parent=27 // pred_region
          %s577 = sand.u32 %s36, 1
          %s578 = scalar_lea.sflag [#allocation7], %s577
          %s579 = sand.u32 %s67, 1
          %s580 = scalar_lea.vmem [#allocation6], %s579
          %s582 = ssub.s32 16, 16
          %583 = vsyncadd %s578, %s582
          %s584 = smul.addr %s36, 16
          %s585 = scalar_lea.hbm %s1, %s584
          %s587 = sshll.u32 %s580, 4
          %s588 = int_to_ptr.vmem [resolvable:$true] %s587
          %590 = dma.hbm_to_vmem [thread:$0]  %s585, 16, %s588, %s578
        $region32: #{tpu_custom_call.1} parent=27 // pred_fallthru
          _
        // Predicated region
        $region33: #{tpu_custom_call.1} parent=27 // pred_check
          %p591 = pneg %p103
        $region34: #{tpu_custom_call.1} parent=27 // pred_check_branch
          %593 = sbr.rel (%p591) target = $region36
        $region35: #{tpu_custom_call.1} parent=27 // pred_region
          %s594 = sand.u32 %s36, 1
          %s595 = scalar_lea.sflag [#allocation7], %s594
          %s596 = sand.u32 %s93, 1
          %s597 = scalar_lea.vmem [#allocation8], %s596
          %s599 = ssub.s32 16, 16
          %600 = vsyncadd %s595, %s599
          %s601 = smul.addr %s36, 16
          %s602 = scalar_lea.hbm %s2, %s601
          %s604 = sshll.u32 %s597, 4
          %s605 = int_to_ptr.vmem [resolvable:$true] %s604
          %607 = dma.hbm_to_vmem [thread:$0]  %s602, 16, %s605, %s595
        $region36: #{tpu_custom_call.1} parent=27 // pred_fallthru
          _
        // Predicated region
        $region37: #{tpu_custom_call.1} parent=27 // pred_check
          %p608 = pneg %p129
        $region38: #{tpu_custom_call.1} parent=27 // pred_check_branch
          %610 = sbr.rel (%p608) target = $region40
        $region39: #{tpu_custom_call.1} parent=27 // pred_region
          %p611 = scmp.lt.s32.totalorder %s36, 1
          %s612 = scalar_select %p611, %s36, 1
          %s613 = smul.addr %s612, 4
          %s614 = smul.addr %s613, 4
          %s615 = scalar_lea.vmem %s3, %s614
        $region40: #{tpu_custom_call.1} parent=27 // pred_fallthru
          _
        // Predicated region
        $region41: #{tpu_custom_call.1} parent=27 // pred_check
          %p616 = pneg %p155
        $region42: #{tpu_custom_call.1} parent=27 // pred_check_branch
          %618 = sbr.rel (%p616) target = $region44
        $region43: #{tpu_custom_call.1} parent=27 // pred_region
          %p619 = scmp.lt.s32.totalorder %s36, 1
          %s620 = scalar_select %p619, %s36, 1
          %s621 = smul.addr %s620, 4
          %s622 = scalar_lea.vmem %s4, %s621
        $region44: #{tpu_custom_call.1} parent=27 // pred_fallthru
          _
        // Predicated region
        $region45: #{tpu_custom_call.1} parent=27 // pred_check
          %p623 = pneg %p181
        $region46: #{tpu_custom_call.1} parent=27 // pred_check_branch
          %625 = sbr.rel (%p623) target = $region48
        $region47: #{tpu_custom_call.1} parent=27 // pred_region
          %p626 = scmp.lt.s32.totalorder %s36, 1
          %s627 = scalar_select %p626, %s36, 1
          %s628 = smul.addr %s627, 4
          %s629 = smul.addr %s628, 4
          %s630 = scalar_lea.vmem %s5, %s629
        $region48: #{tpu_custom_call.1} parent=27 // pred_fallthru
          _
        // Predicated region
        $region49: #{tpu_custom_call.1} parent=27 // pred_check
          %p631 = pneg %p207
        $region50: #{tpu_custom_call.1} parent=27 // pred_check_branch
          %633 = sbr.rel (%p631) target = $region52
        $region51: #{tpu_custom_call.1} parent=27 // pred_region
          %p634 = scmp.lt.s32.totalorder %s36, 1
          %s635 = scalar_select %p634, %s36, 1
          %s636 = smul.addr %s635, 4
          %s637 = scalar_lea.vmem %s6, %s636
        $region52: #{tpu_custom_call.1} parent=27 // pred_fallthru
          _
        // Predicated region
        $region53: #{tpu_custom_call.1} parent=27 // pred_check
          %p638 = pneg %p233
        $region54: #{tpu_custom_call.1} parent=27 // pred_check_branch
          %640 = sbr.rel (%p638) target = $region56
        $region55: #{tpu_custom_call.1} parent=27 // pred_region
          %p641 = scmp.lt.s32.totalorder %s36, 1
          %s642 = scalar_select %p641, %s36, 1
          %s643 = smul.addr %s642, 4
          %s644 = smul.addr %s643, 4
          %s645 = scalar_lea.vmem %s7, %s644
        $region56: #{tpu_custom_call.1} parent=27 // pred_fallthru
          _
        // Predicated region
        $region57: #{tpu_custom_call.1} parent=27 // pred_check
          %p646 = pneg %p259
        $region58: #{tpu_custom_call.1} parent=27 // pred_check_branch
          %648 = sbr.rel (%p646) target = $region60
        $region59: #{tpu_custom_call.1} parent=27 // pred_region
          %p649 = scmp.lt.s32.totalorder %s36, 1
          %s650 = scalar_select %p649, %s36, 1
          %s651 = smul.addr %s650, 4
          %s652 = scalar_lea.vmem %s8, %s651
        $region60: #{tpu_custom_call.1} parent=27 // pred_fallthru
          _
        // Predicated region
        $region61: #{tpu_custom_call.1} parent=27 // pred_check
          %p653 = pneg %p285
        $region62: #{tpu_custom_call.1} parent=27 // pred_check_branch
          %655 = sbr.rel (%p653) target = $region64
        $region63: #{tpu_custom_call.1} parent=27 // pred_region
          %p656 = scmp.lt.s32.totalorder %s36, 1
          %s657 = scalar_select %p656, %s36, 1
          %s658 = smul.addr %s657, 4
          %s659 = smul.addr %s658, 4
          %s660 = scalar_lea.vmem %s9, %s659
        $region64: #{tpu_custom_call.1} parent=27 // pred_fallthru
          _
        // Predicated region
        $region65: #{tpu_custom_call.1} parent=27 // pred_check
          %p661 = pneg %p311
        $region66: #{tpu_custom_call.1} parent=27 // pred_check_branch
          %663 = sbr.rel (%p661) target = $region68
        $region67: #{tpu_custom_call.1} parent=27 // pred_region
          %s664 = sand.u32 %s36, 1
          %s665 = scalar_lea.sflag [#allocation10], %s664
          %s666 = sand.u32 %s301, 1
          %s667 = scalar_lea.vmem [#allocation9], %s666
          %s669 = ssub.s32 16, 16
          %670 = vsyncadd %s665, %s669
          %s671 = smul.addr %s36, 16
          %s672 = scalar_lea.hbm %s10, %s671
          %s674 = sshll.u32 %s667, 4
          %s675 = int_to_ptr.vmem [resolvable:$true] %s674
          %677 = dma.hbm_to_vmem [thread:$0]  %s672, 16, %s675, %s665
        $region68: #{tpu_custom_call.1} parent=27 // pred_fallthru
          _
        // Predicated region
        $region69: #{tpu_custom_call.1} parent=27 // pred_check
          %p678 = pneg %p337
        $region70: #{tpu_custom_call.1} parent=27 // pred_check_branch
          %680 = sbr.rel (%p678) target = $region72
        $region71: #{tpu_custom_call.1} parent=27 // pred_region
          %s681 = sand.u32 %s36, 1
          %s682 = scalar_lea.sflag [#allocation10], %s681
          %s683 = sand.u32 %s327, 1
          %s684 = scalar_lea.vmem [#allocation11], %s683
          %s686 = ssub.s32 16, 16
          %687 = vsyncadd %s682, %s686
          %s688 = smul.addr %s36, 16
          %s689 = scalar_lea.hbm %s11, %s688
          %s691 = sshll.u32 %s684, 4
          %s692 = int_to_ptr.vmem [resolvable:$true] %s691
          %694 = dma.hbm_to_vmem [thread:$0]  %s689, 16, %s692, %s682
        $region72: #{tpu_custom_call.1} parent=27 // pred_fallthru
          _
        // Predicated region
        $region73: #{tpu_custom_call.1} parent=27 // pred_check
          %p695 = pneg %p363
        $region74: #{tpu_custom_call.1} parent=27 // pred_check_branch
          %697 = sbr.rel (%p695) target = $region76
        $region75: #{tpu_custom_call.1} parent=27 // pred_region
          %s698 = sand.u32 %s36, 1
          %s699 = scalar_lea.sflag [#allocation13], %s698
          %s700 = sand.u32 %s353, 1
          %s701 = scalar_lea.vmem [#allocation12], %s700
          %s703 = ssub.s32 16, 16
          %704 = vsyncadd %s699, %s703
          %s705 = smul.addr %s36, 16
          %s706 = scalar_lea.hbm %s12, %s705
          %s708 = sshll.u32 %s701, 4
          %s709 = int_to_ptr.vmem [resolvable:$true] %s708
          %711 = dma.hbm_to_vmem [thread:$0]  %s706, 16, %s709, %s699
        $region76: #{tpu_custom_call.1} parent=27 // pred_fallthru
          _
        // Predicated region
        $region77: #{tpu_custom_call.1} parent=27 // pred_check
          %p712 = pneg %p389
        $region78: #{tpu_custom_call.1} parent=27 // pred_check_branch
          %714 = sbr.rel (%p712) target = $region80
        $region79: #{tpu_custom_call.1} parent=27 // pred_region
          %p715 = scmp.lt.s32.totalorder %s36, 1
          %s716 = scalar_select %p715, %s36, 1
          %s717 = smul.addr %s716, 4
          %s718 = smul.addr %s717, 4
          %s719 = scalar_lea.vmem %s13, %s718
        $region80: #{tpu_custom_call.1} parent=27 // pred_fallthru
          _
        // Predicated region
        $region81: #{tpu_custom_call.1} parent=27 // pred_check
          %p720 = pneg %p415
        $region82: #{tpu_custom_call.1} parent=27 // pred_check_branch
          %722 = sbr.rel (%p720) target = $region84
        $region83: #{tpu_custom_call.1} parent=27 // pred_region
          %s723 = sand.u32 %s36, 1
          %s724 = scalar_lea.sflag [#allocation13], %s723
          %s725 = sand.u32 %s405, 1
          %s726 = scalar_lea.vmem [#allocation14], %s725
          %s728 = ssub.s32 16, 16
          %729 = vsyncadd %s724, %s728
          %s730 = smul.addr %s36, 16
          %s731 = scalar_lea.hbm %s14, %s730
          %s733 = sshll.u32 %s726, 4
          %s734 = int_to_ptr.vmem [resolvable:$true] %s733
          %736 = dma.hbm_to_vmem [thread:$0]  %s731, 16, %s734, %s724
        $region84: #{tpu_custom_call.1} parent=27 // pred_fallthru
          _
        // Predicated region
        $region85: #{tpu_custom_call.1} parent=27 // pred_check
          %p737 = pneg %p441
        $region86: #{tpu_custom_call.1} parent=27 // pred_check_branch
          %739 = sbr.rel (%p737) target = $region88
        $region87: #{tpu_custom_call.1} parent=27 // pred_region
          %p740 = scmp.lt.s32.totalorder %s36, 1
          %s741 = scalar_select %p740, %s36, 1
          %s742 = smul.addr %s741, 16
          %s743 = smul.addr %s742, 4
          %s744 = scalar_lea.vmem %s15, %s743
        $region88: #{tpu_custom_call.1} parent=27 // pred_fallthru
          _
        // Predicated region
        $region89: #{tpu_custom_call.1} parent=27 // pred_check
          %p745 = pneg %p467
        $region90: #{tpu_custom_call.1} parent=27 // pred_check_branch
          %747 = sbr.rel (%p745) target = $region92
        $region91: #{tpu_custom_call.1} parent=27 // pred_region
          %p748 = scmp.lt.s32.totalorder %s36, 1
          %s749 = scalar_select %p748, %s36, 1
          %s750 = scalar_lea.vmem %s16, %s749
        $region92: #{tpu_custom_call.1} parent=27 // pred_fallthru
          _
      $region28: #{tpu_custom_call.1} parent=5 // pred_fallthru
        _
      %p751 = scmp.le.s32.totalorder 1, %s36
      %p752 = scmp.lt.s32.totalorder %s36, 3
      %p753 = pnand %p751, %p752
      %p754 = pneg %p753
      // Predicated region
      $region93: #{tpu_custom_call.1} parent=5 // pred_check
        _
      $region94: #{tpu_custom_call.1} parent=5 // pred_check_branch
        %756 = sbr.rel (%p753) target = $region96
      $region95: #{tpu_custom_call.1} parent=5 // pred_region
        %s757 = ssub.s32 %s36, 1
        // Predicated region
        $region97: #{tpu_custom_call.1} parent=95 // pred_check
          %p758 = pneg %p57
        $region98: #{tpu_custom_call.1} parent=95 // pred_check_branch
          %760 = sbr.rel (%p758) target = $region100
        $region99: #{tpu_custom_call.1} parent=95 // pred_region
          %761 = dma.done [#allocation4], 256
        $region100: #{tpu_custom_call.1} parent=95 // pred_fallthru
          _
        %s762 = sand.u32 %s41, 1
        %s763 = scalar_lea.sflag [#allocation7], %s762
        %s764 = sand.u32 %s70, 1
        %s765 = scalar_lea.vmem [#allocation6], %s764
        // Predicated region
        $region101: #{tpu_custom_call.1} parent=95 // pred_check
          %p766 = pneg %p83
        $region102: #{tpu_custom_call.1} parent=95 // pred_check_branch
          %768 = sbr.rel (%p766) target = $region104
        $region103: #{tpu_custom_call.1} parent=95 // pred_region
          %769 = dma.done %s763, 16
        $region104: #{tpu_custom_call.1} parent=95 // pred_fallthru
          _
        %s770 = sand.u32 %s41, 1
        %s771 = scalar_lea.sflag [#allocation7], %s770
        %s772 = sand.u32 %s96, 1
        %s773 = scalar_lea.vmem [#allocation8], %s772
        // Predicated region
        $region105: #{tpu_custom_call.1} parent=95 // pred_check
          %p774 = pneg %p109
        $region106: #{tpu_custom_call.1} parent=95 // pred_check_branch
          %776 = sbr.rel (%p774) target = $region108
        $region107: #{tpu_custom_call.1} parent=95 // pred_region
          %777 = dma.done %s771, 16
        $region108: #{tpu_custom_call.1} parent=95 // pred_fallthru
          _
        %s778 = sand.u32 %s41, 1
        %s779 = scalar_lea.sflag [#allocation10], %s778
        %s780 = sand.u32 %s304, 1
        %s781 = scalar_lea.vmem [#allocation9], %s780
        // Predicated region
        $region109: #{tpu_custom_call.1} parent=95 // pred_check
          %p782 = pneg %p317
        $region110: #{tpu_custom_call.1} parent=95 // pred_check_branch
          %784 = sbr.rel (%p782) target = $region112
        $region111: #{tpu_custom_call.1} parent=95 // pred_region
          %785 = dma.done %s779, 16
        $region112: #{tpu_custom_call.1} parent=95 // pred_fallthru
          _
        %s786 = sand.u32 %s41, 1
        %s787 = scalar_lea.sflag [#allocation10], %s786
        %s788 = sand.u32 %s330, 1
        %s789 = scalar_lea.vmem [#allocation11], %s788
        // Predicated region
        $region113: #{tpu_custom_call.1} parent=95 // pred_check
          %p790 = pneg %p343
        $region114: #{tpu_custom_call.1} parent=95 // pred_check_branch
          %792 = sbr.rel (%p790) target = $region116
        $region115: #{tpu_custom_call.1} parent=95 // pred_region
          %793 = dma.done %s787, 16
        $region116: #{tpu_custom_call.1} parent=95 // pred_fallthru
          _
        %s794 = sand.u32 %s41, 1
        %s795 = scalar_lea.sflag [#allocation13], %s794
        %s796 = sand.u32 %s356, 1
        %s797 = scalar_lea.vmem [#allocation12], %s796
        // Predicated region
        $region117: #{tpu_custom_call.1} parent=95 // pred_check
          %p798 = pneg %p369
        $region118: #{tpu_custom_call.1} parent=95 // pred_check_branch
          %800 = sbr.rel (%p798) target = $region120
        $region119: #{tpu_custom_call.1} parent=95 // pred_region
          %801 = dma.done %s795, 16
        $region120: #{tpu_custom_call.1} parent=95 // pred_fallthru
          _
        %s802 = sand.u32 %s41, 1
        %s803 = scalar_lea.sflag [#allocation13], %s802
        %s804 = sand.u32 %s408, 1
        %s805 = scalar_lea.vmem [#allocation14], %s804
        // Predicated region
        $region121: #{tpu_custom_call.1} parent=95 // pred_check
          %p806 = pneg %p421
        $region122: #{tpu_custom_call.1} parent=95 // pred_check_branch
          %808 = sbr.rel (%p806) target = $region124
        $region123: #{tpu_custom_call.1} parent=95 // pred_region
          %809 = dma.done %s803, 16
        $region124: #{tpu_custom_call.1} parent=95 // pred_fallthru
          _
        %p810 = pneg %p57
        %p811 = pneg %p54
        %s812 = sand.u32 %s41, 1
        %s813 = scalar_lea.sflag [#allocation7], %s812
        %s814 = sand.u32 %s70, 1
        %s815 = scalar_lea.vmem [#allocation6], %s814
        %p816 = pneg %p83
        %p817 = pneg %p80
        %s818 = sand.u32 %s41, 1
        %s819 = scalar_lea.sflag [#allocation7], %s818
        %s820 = sand.u32 %s96, 1
        %s821 = scalar_lea.vmem [#allocation8], %s820
        %p822 = pneg %p109
        %p823 = pneg %p106
        %p824 = scmp.lt.s32.totalorder %s41, 1
        %s825 = scalar_select %p824, %s41, 1
        %s826 = smul.addr %s825, 4
        %s827 = smul.addr %s826, 4
        %s828 = scalar_lea.vmem %s3, %s827
        %p829 = pneg %p135
        %p830 = pneg %p132
        %p831 = scmp.lt.s32.totalorder %s41, 1
        %s832 = scalar_select %p831, %s41, 1
        %s833 = smul.addr %s832, 4
        %s834 = scalar_lea.vmem %s4, %s833
        %p835 = pneg %p161
        %p836 = pneg %p158
        %p837 = scmp.lt.s32.totalorder %s41, 1
        %s838 = scalar_select %p837, %s41, 1
        %s839 = smul.addr %s838, 4
        %s840 = smul.addr %s839, 4
        %s841 = scalar_lea.vmem %s5, %s840
        %p842 = pneg %p187
        %p843 = pneg %p184
        %p844 = scmp.lt.s32.totalorder %s41, 1
        %s845 = scalar_select %p844, %s41, 1
        %s846 = smul.addr %s845, 4
        %s847 = scalar_lea.vmem %s6, %s846
        %p848 = pneg %p213
        %p849 = pneg %p210
        %p850 = scmp.lt.s32.totalorder %s41, 1
        %s851 = scalar_select %p850, %s41, 1
        %s852 = smul.addr %s851, 4
        %s853 = smul.addr %s852, 4
        %s854 = scalar_lea.vmem %s7, %s853
        %p855 = pneg %p239
        %p856 = pneg %p236
        %p857 = scmp.lt.s32.totalorder %s41, 1
        %s858 = scalar_select %p857, %s41, 1
        %s859 = smul.addr %s858, 4
        %s860 = scalar_lea.vmem %s8, %s859
        %p861 = pneg %p265
        %p862 = pneg %p262
        %p863 = scmp.lt.s32.totalorder %s41, 1
        %s864 = scalar_select %p863, %s41, 1
        %s865 = smul.addr %s864, 4
        %s866 = smul.addr %s865, 4
        %s867 = scalar_lea.vmem %s9, %s866
        %p868 = pneg %p291
        %p869 = pneg %p288
        %s870 = sand.u32 %s41, 1
        %s871 = scalar_lea.sflag [#allocation10], %s870
        %s872 = sand.u32 %s304, 1
        %s873 = scalar_lea.vmem [#allocation9], %s872
        %p874 = pneg %p317
        %p875 = pneg %p314
        %s876 = sand.u32 %s41, 1
        %s877 = scalar_lea.sflag [#allocation10], %s876
        %s878 = sand.u32 %s330, 1
        %s879 = scalar_lea.vmem [#allocation11], %s878
        %p880 = pneg %p343
        %p881 = pneg %p340
        %s882 = sand.u32 %s41, 1
        %s883 = scalar_lea.sflag [#allocation13], %s882
        %s884 = sand.u32 %s356, 1
        %s885 = scalar_lea.vmem [#allocation12], %s884
        %p886 = pneg %p369
        %p887 = pneg %p366
        %p888 = scmp.lt.s32.totalorder %s41, 1
        %s889 = scalar_select %p888, %s41, 1
        %s890 = smul.addr %s889, 4
        %s891 = smul.addr %s890, 4
        %s892 = scalar_lea.vmem %s13, %s891
        %p893 = pneg %p395
        %p894 = pneg %p392
        %s895 = sand.u32 %s41, 1
        %s896 = scalar_lea.sflag [#allocation13], %s895
        %s897 = sand.u32 %s408, 1
        %s898 = scalar_lea.vmem [#allocation14], %s897
        %p899 = pneg %p421
        %p900 = pneg %p418
        %p901 = scmp.lt.s32.totalorder %s41, 1
        %s902 = scalar_select %p901, %s41, 1
        %s903 = smul.addr %s902, 16
        %s904 = smul.addr %s903, 4
        %s905 = scalar_lea.vmem %s15, %s904
        %p906 = pneg %p447
        %p907 = pneg %p444
        %p908 = scmp.lt.s32.totalorder %s41, 1
        %s909 = scalar_select %p908, %s41, 1
        %s910 = scalar_lea.vmem %s16, %s909
        %p911 = pneg %p473
        %p912 = pneg %p470
        %p913 = pneg %p494
        %p914 = pneg %p491
        %p915 = pneg %p515
        %p916 = pneg %p512
        %p917 = pneg %p536
        %p918 = pneg %p533
        %p919 = scmp.lt.s32.totalorder %s41, 1
        %s920 = scalar_select %p919, %s41, 1
        %s921 = smul.addr %s920, 4
        %s922 = smul.addr %s921, 4
        %s923 = scalar_lea.vmem %s3, %s922
        %p924 = scmp.lt.s32.totalorder %s41, 1
        %s925 = scalar_select %p924, %s41, 1
        %s926 = smul.addr %s925, 4
        %s927 = scalar_lea.vmem %s4, %s926
        %p928 = scmp.lt.s32.totalorder %s41, 1
        %s929 = scalar_select %p928, %s41, 1
        %s930 = smul.addr %s929, 4
        %s931 = smul.addr %s930, 4
        %s932 = scalar_lea.vmem %s5, %s931
        %p933 = scmp.lt.s32.totalorder %s41, 1
        %s934 = scalar_select %p933, %s41, 1
        %s935 = smul.addr %s934, 4
        %s936 = scalar_lea.vmem %s6, %s935
        %p937 = scmp.lt.s32.totalorder %s41, 1
        %s938 = scalar_select %p937, %s41, 1
        %s939 = smul.addr %s938, 4
        %s940 = smul.addr %s939, 4
        %s941 = scalar_lea.vmem %s7, %s940
        %p942 = scmp.lt.s32.totalorder %s41, 1
        %s943 = scalar_select %p942, %s41, 1
        %s944 = smul.addr %s943, 4
        %s945 = scalar_lea.vmem %s8, %s944
        %p946 = scmp.lt.s32.totalorder %s41, 1
        %s947 = scalar_select %p946, %s41, 1
        %s948 = smul.addr %s947, 4
        %s949 = smul.addr %s948, 4
        %s950 = scalar_lea.vmem %s9, %s949
        %p951 = scmp.lt.s32.totalorder %s41, 1
        %s952 = scalar_select %p951, %s41, 1
        %s953 = smul.addr %s952, 4
        %s954 = smul.addr %s953, 4
        %s955 = scalar_lea.vmem %s13, %s954
        %p956 = scmp.lt.s32.totalorder %s41, 1
        %s957 = scalar_select %p956, %s41, 1
        %s958 = smul.addr %s957, 16
        %s959 = smul.addr %s958, 4
        %s960 = scalar_lea.vmem %s15, %s959
        %p961 = scmp.lt.s32.totalorder %s41, 1
        %s962 = scalar_select %p961, %s41, 1
        %s963 = scalar_lea.vmem %s16, %s962
        %p965 = scmp.eq.s32.totalorder %s41, 0
        // Predicated region
        $region125: #{tpu_custom_call.1} parent=95 // pred_check
          %p966 = pneg %p965
        $region126: #{tpu_custom_call.1} parent=95 // pred_check_branch
          %968 = sbr.rel (%p966) target = $region128
        $region127: #{tpu_custom_call.1} parent=95 // pred_region
          %v969 = vld [vmem:[#allocation3] sm:$0xff]
          %v970 = vld [vmem:[#allocation3 + $0x8] sm:$0xff]
          %vm971 = vcmask 261120
          %972 = vst.msk [vmem:[#allocation2] sm:$0xff] %vm971, %v969
          %973 = vst.msk [vmem:[#allocation2 + $0x8] sm:$0xff] %vm971, %v970
        $region128: #{tpu_custom_call.1} parent=95 // pred_fallthru
          _
        %v974 = vld [vmem:[#allocation2] sm:$0xff]
        %v975 = vld [vmem:[#allocation2 + $0x8] sm:$0xff]
        %v976 = vld [vmem:[%s765] sm:$0x1]
        %v977 = vld [vmem:[%s773] sm:$0x1]
        %vm978 = vcmask 261120
        %v979 = vsel %vm978, %v974, 0.0
        %980 = vadd.xlane.f32.xlu0 %v979
        %v981 = vpop.xlane.xlu0 %980
        %v982 = vsel %vm978, %v975, 0.0
        %983 = vadd.xlane.f32.xlu0 %v982
        %v984 = vpop.xlane.xlu0 %983
        %v985 = vrcp.pop 32.0
        %v986 = vmul.f32 %v981, %v985
        %v987 = vmul.f32 %v984, %v985
        %v988 = vsub.f32 %v974, %v986
        %v989 = vsub.f32 %v975, %v987
        %v990 = vmul.f32 %v988, %v988
        %v991 = vmul.f32 %v989, %v989
        %v992 = vsel %vm978, %v990, 0.0
        %993 = vadd.xlane.f32.xlu0 %v992
        %v994 = vpop.xlane.xlu0 %993
        %v995 = vsel %vm978, %v991, 0.0
        %996 = vadd.xlane.f32.xlu0 %v995
        %v997 = vpop.xlane.xlu0 %996
        %v998 = vmul.f32 %v994, %v985
        %v999 = vmul.f32 %v997, %v985
        %v1000 = vadd.f32 %v998, 1e-05
        %v1001 = vadd.f32 %v999, 1e-05
        %v1002 = vrsqrt.pop %v1000
        %v1003 = vrsqrt.pop %v1001
        %v1004 = vmul.f32 %v988, %v1002
        %v1005 = vmul.f32 %v989, %v1003
        %v1007 = vlaneseq
        %v1008 = vshrl.u32 %v1007, 7
        %v1009 = vsub.s32 0, %v1008
        %v1010 = vrot.slane %v976, %v1009
        %v1012 = vmul.f32 %v1004, %v1010
        %v1013 = vmul.f32 %v1005, %v1010
        %v1015 = vlaneseq
        %v1016 = vshrl.u32 %v1015, 7
        %v1017 = vsub.s32 0, %v1016
        %v1018 = vrot.slane %v977, %v1017
        %v1020 = vadd.f32 %v1012, %v1018
        %v1021 = vadd.f32 %v1013, %v1018
        %v1022 = vpack.c.bf16 %v1021, %v1020
        %v1023 = vld [vmem:[%s923] sm:$0xf]
        %v1024 = vld [vmem:[%s923 + $0x4] sm:$0xf]
        %v1025 = vld [vmem:[%s923 + $0x8] sm:$0xf]
        %v1026 = vld [vmem:[%s923 + $0xc] sm:$0xf]
        %v1027 = vld [vmem:[%s932] sm:$0xf]
        %v1028 = vld [vmem:[%s932 + $0x4] sm:$0xf]
        %v1029 = vld [vmem:[%s932 + $0x8] sm:$0xf]
        %v1030 = vld [vmem:[%s932 + $0xc] sm:$0xf]
        %v1031 = vld [vmem:[%s941] sm:$0xf]
        %v1032 = vld [vmem:[%s941 + $0x4] sm:$0xf]
        %v1033 = vld [vmem:[%s941 + $0x8] sm:$0xf]
        %v1034 = vld [vmem:[%s941 + $0xc] sm:$0xf]
        %v1035 = vld [vmem:[%s950] sm:$0xf]
        %v1036 = vld [vmem:[%s950 + $0x4] sm:$0xf]
        %v1037 = vld [vmem:[%s950 + $0x8] sm:$0xf]
        %v1038 = vld [vmem:[%s950 + $0xc] sm:$0xf]
        %v1039 = vld [vmem:[%s927] sm:$0x1]
        %v1040 = vld [vmem:[%s927 + $0x1] sm:$0x1]
        %v1041 = vld [vmem:[%s927 + $0x2] sm:$0x1]
        %v1042 = vld [vmem:[%s927 + $0x3] sm:$0x1]
        %v1043 = vld [vmem:[%s936] sm:$0x1]
        %v1044 = vld [vmem:[%s936 + $0x1] sm:$0x1]
        %v1045 = vld [vmem:[%s936 + $0x2] sm:$0x1]
        %v1046 = vld [vmem:[%s936 + $0x3] sm:$0x1]
        %v1047 = vld [vmem:[%s945] sm:$0x1]
        %v1048 = vld [vmem:[%s945 + $0x1] sm:$0x1]
        %v1049 = vld [vmem:[%s945 + $0x2] sm:$0x1]
        %v1050 = vld [vmem:[%s945 + $0x3] sm:$0x1]
        %v1051 = vlaneseq
        %v1052 = vshrl.u32 %v1051, 7
        %v1053 = vlaneseq
        %v1054 = vand.u32 %v1053, 127
        %vm1055 = vcmp.ge.s32.totalorder %v1052, %v1054
        %v1060 = vlaneseq
        %v1061 = vshrl.u32 %v1060, 7
        %v1062 = vsub.s32 0, %v1061
        %v1063 = vrot.slane %v1039, %v1062
        %v1064 = vlaneseq
        %v1065 = vshrl.u32 %v1064, 7
        %v1066 = vsub.s32 0, %v1065
        %v1067 = vrot.slane %v1040, %v1066
        %v1068 = vlaneseq
        %v1069 = vshrl.u32 %v1068, 7
        %v1070 = vsub.s32 0, %v1069
        %v1071 = vrot.slane %v1041, %v1070
        %v1072 = vlaneseq
        %v1073 = vshrl.u32 %v1072, 7
        %v1074 = vsub.s32 0, %v1073
        %v1075 = vrot.slane %v1042, %v1074
        %v1081 = vsel %vm978, %v1022, 0
        %v1084 = vsel %vm978, %v1023, 0
        %1086 = vmatprep.subr.bf16.mxu0 0
        %1087 = vmatpush1.bf16.xpose.msra.mxu0 %v1084
        %1088 = vmatprep.subr.bf16.mxu0 0
        %1089 = vmatpush1.bf16.xpose.msra.mxu0 0
        %1090 = vmatprep.subr.bf16.mxu0 0
        %1091 = vmatpush1.bf16.xpose.msra.mxu0 0
        %1092 = vmatprep.subr.bf16.mxu0 0
        %1093 = vmatpush1.bf16.xpose.msra.mxu0 0
        %1094 = vmatprep.subr.bf16.mxu0 0
        %1095 = vmatpush1.bf16.xpose.msra.mxu0 0
        %1096 = vmatprep.subr.bf16.mxu0 0
        %1097 = vmatpush1.bf16.xpose.msra.mxu0 0
        %1098 = vmatprep.subr.bf16.mxu0 0
        %1099 = vmatpush1.bf16.xpose.msra.mxu0 0
        %1100 = vmatprep.subr.bf16.mxu0 0
        %1101 = vmatpush1.bf16.xpose.msra.mxu0 0
        %1102 = vmatprep.subr.bf16.mxu0 0
        %1103 = vmatpush1.bf16.xpose.msra.mxu0 0
        %1104 = vmatprep.subr.bf16.mxu0 0
        %1105 = vmatpush1.bf16.xpose.msra.mxu0 0
        %1106 = vmatprep.subr.bf16.mxu0 0
        %1107 = vmatpush1.bf16.xpose.msra.mxu0 0
        %1108 = vmatprep.subr.bf16.mxu0 0
        %1109 = vmatpush1.bf16.xpose.msra.mxu0 0
        %1110 = vmatprep.subr.bf16.mxu0 0
        %1111 = vmatpush1.bf16.xpose.msra.mxu0 0
        %1112 = vmatprep.subr.bf16.mxu0 0
        %1113 = vmatpush1.bf16.xpose.msra.mxu0 0
        %1114 = vmatprep.subr.bf16.mxu0 0
        %1115 = vmatpush1.bf16.xpose.msra.mxu0 0
        %1116 = vmatprep.subr.bf16.mxu0 0
        %1117 = vmatpush1.bf16.xpose.msra.mxu0 0
        %1118 = vmatprep.mubr.bf16.mxu0 0
        %1119 = vmatmul.mubr.bf16.gmra.mrb[0].mxu0 %v1081
        %v1120 = vpop.f32.mrb[0].mxu0
        %v1121 = vadd.f32 %v1063, %v1120
        %v1122 = vpop.f32.mrb[0].mxu0
        %v1123 = vpop.f32.mrb[0].mxu0
        %v1124 = vpop.f32.mrb[0].mxu0
        %1125 = vdwg.mxu0
        %v1127 = vsel %vm978, %v1024, 0
        %1129 = vmatprep.subr.bf16.mxu0 0
        %1130 = vmatpush1.bf16.xpose.msra.mxu0 %v1127
        %1131 = vmatprep.subr.bf16.mxu0 0
        %1132 = vmatpush1.bf16.xpose.msra.mxu0 0
        %1133 = vmatprep.subr.bf16.mxu0 0
        %1134 = vmatpush1.bf16.xpose.msra.mxu0 0
        %1135 = vmatprep.subr.bf16.mxu0 0
        %1136 = vmatpush1.bf16.xpose.msra.mxu0 0
        %1137 = vmatprep.subr.bf16.mxu0 0
        %1138 = vmatpush1.bf16.xpose.msra.mxu0 0
        %1139 = vmatprep.subr.bf16.mxu0 0
        %1140 = vmatpush1.bf16.xpose.msra.mxu0 0
        %1141 = vmatprep.subr.bf16.mxu0 0
        %1142 = vmatpush1.bf16.xpose.msra.mxu0 0
        %1143 = vmatprep.subr.bf16.mxu0 0
        %1144 = vmatpush1.bf16.xpose.msra.mxu0 0
        %1145 = vmatprep.subr.bf16.mxu0 0
        %1146 = vmatpush1.bf16.xpose.msra.mxu0 0
        %1147 = vmatprep.subr.bf16.mxu0 0
        %1148 = vmatpush1.bf16.xpose.msra.mxu0 0
        %1149 = vmatprep.subr.bf16.mxu0 0
        %1150 = vmatpush1.bf16.xpose.msra.mxu0 0
        %1151 = vmatprep.subr.bf16.mxu0 0
        %1152 = vmatpush1.bf16.xpose.msra.mxu0 0
        %1153 = vmatprep.subr.bf16.mxu0 0
        %1154 = vmatpush1.bf16.xpose.msra.mxu0 0
        %1155 = vmatprep.subr.bf16.mxu0 0
        %1156 = vmatpush1.bf16.xpose.msra.mxu0 0
        %1157 = vmatprep.subr.bf16.mxu0 0
        %1158 = vmatpush1.bf16.xpose.msra.mxu0 0
        %1159 = vmatprep.subr.bf16.mxu0 0
        %1160 = vmatpush1.bf16.xpose.msra.mxu0 0
        %1161 = vmatprep.mubr.bf16.mxu0 0
        %1162 = vmatmul.mubr.bf16.gmra.mrb[0].mxu0 %v1081
        %v1163 = vpop.f32.mrb[0].mxu0
        %v1164 = vadd.f32 %v1067, %v1163
        %v1165 = vpop.f32.mrb[0].mxu0
        %v1166 = vpop.f32.mrb[0].mxu0
        %v1167 = vpop.f32.mrb[0].mxu0
        %1168 = vdwg.mxu0
        %v1170 = vsel %vm978, %v1025, 0
        %1172 = vmatprep.subr.bf16.mxu0 0
        %1173 = vmatpush1.bf16.xpose.msra.mxu0 %v1170
        %1174 = vmatprep.subr.bf16.mxu0 0
        %1175 = vmatpush1.bf16.xpose.msra.mxu0 0
        %1176 = vmatprep.subr.bf16.mxu0 0
        %1177 = vmatpush1.bf16.xpose.msra.mxu0 0
        %1178 = vmatprep.subr.bf16.mxu0 0
        %1179 = vmatpush1.bf16.xpose.msra.mxu0 0
        %1180 = vmatprep.subr.bf16.mxu0 0
        %1181 = vmatpush1.bf16.xpose.msra.mxu0 0
        %1182 = vmatprep.subr.bf16.mxu0 0
        %1183 = vmatpush1.bf16.xpose.msra.mxu0 0
        %1184 = vmatprep.subr.bf16.mxu0 0
        %1185 = vmatpush1.bf16.xpose.msra.mxu0 0
        %1186 = vmatprep.subr.bf16.mxu0 0
        %1187 = vmatpush1.bf16.xpose.msra.mxu0 0
        %1188 = vmatprep.subr.bf16.mxu0 0
        %1189 = vmatpush1.bf16.xpose.msra.mxu0 0
        %1190 = vmatprep.subr.bf16.mxu0 0
        %1191 = vmatpush1.bf16.xpose.msra.mxu0 0
        %1192 = vmatprep.subr.bf16.mxu0 0
        %1193 = vmatpush1.bf16.xpose.msra.mxu0 0
        %1194 = vmatprep.subr.bf16.mxu0 0
        %1195 = vmatpush1.bf16.xpose.msra.mxu0 0
        %1196 = vmatprep.subr.bf16.mxu0 0
        %1197 = vmatpush1.bf16.xpose.msra.mxu0 0
        %1198 = vmatprep.subr.bf16.mxu0 0
        %1199 = vmatpush1.bf16.xpose.msra.mxu0 0
        %1200 = vmatprep.subr.bf16.mxu0 0
        %1201 = vmatpush1.bf16.xpose.msra.mxu0 0
        %1202 = vmatprep.subr.bf16.mxu0 0
        %1203 = vmatpush1.bf16.xpose.msra.mxu0 0
        %1204 = vmatprep.mubr.bf16.mxu0 0
        %1205 = vmatmul.mubr.bf16.gmra.mrb[0].mxu0 %v1081
        %v1206 = vpop.f32.mrb[0].mxu0
        %v1207 = vadd.f32 %v1071, %v1206
        %v1208 = vpop.f32.mrb[0].mxu0
        %v1209 = vpop.f32.mrb[0].mxu0
        %v1210 = vpop.f32.mrb[0].mxu0
        %1211 = vdwg.mxu0
        %v1213 = vsel %vm978, %v1026, 0
        %1215 = vmatprep.subr.bf16.mxu0 0
        %1216 = vmatpush1.bf16.xpose.msra.mxu0 %v1213
        %1217 = vmatprep.subr.bf16.mxu0 0
        %1218 = vmatpush1.bf16.xpose.msra.mxu0 0
        %1219 = vmatprep.subr.bf16.mxu0 0
        %1220 = vmatpush1.bf16.xpose.msra.mxu0 0
        %1221 = vmatprep.subr.bf16.mxu0 0
        %1222 = vmatpush1.bf16.xpose.msra.mxu0 0
        %1223 = vmatprep.subr.bf16.mxu0 0
        %1224 = vmatpush1.bf16.xpose.msra.mxu0 0
        %1225 = vmatprep.subr.bf16.mxu0 0
        %1226 = vmatpush1.bf16.xpose.msra.mxu0 0
        %1227 = vmatprep.subr.bf16.mxu0 0
        %1228 = vmatpush1.bf16.xpose.msra.mxu0 0
        %1229 = vmatprep.subr.bf16.mxu0 0
        %1230 = vmatpush1.bf16.xpose.msra.mxu0 0
        %1231 = vmatprep.subr.bf16.mxu0 0
        %1232 = vmatpush1.bf16.xpose.msra.mxu0 0
        %1233 = vmatprep.subr.bf16.mxu0 0
        %1234 = vmatpush1.bf16.xpose.msra.mxu0 0
        %1235 = vmatprep.subr.bf16.mxu0 0
        %1236 = vmatpush1.bf16.xpose.msra.mxu0 0
        %1237 = vmatprep.subr.bf16.mxu0 0
        %1238 = vmatpush1.bf16.xpose.msra.mxu0 0
        %1239 = vmatprep.subr.bf16.mxu0 0
        %1240 = vmatpush1.bf16.xpose.msra.mxu0 0
        %1241 = vmatprep.subr.bf16.mxu0 0
        %1242 = vmatpush1.bf16.xpose.msra.mxu0 0
        %1243 = vmatprep.subr.bf16.mxu0 0
        %1244 = vmatpush1.bf16.xpose.msra.mxu0 0
        %1245 = vmatprep.subr.bf16.mxu0 0
        %1246 = vmatpush1.bf16.xpose.msra.mxu0 0
        %1247 = vmatprep.mubr.bf16.mxu0 0
        %1248 = vmatmul.mubr.bf16.gmra.mrb[0].mxu0 %v1081
        %v1249 = vpop.f32.mrb[0].mxu0
        %v1250 = vadd.f32 %v1075, %v1249
        %v1251 = vpop.f32.mrb[0].mxu0
        %v1252 = vpop.f32.mrb[0].mxu0
        %v1253 = vpop.f32.mrb[0].mxu0
        %1254 = vdwg.mxu0
        %v1259 = vlaneseq
        %v1260 = vshrl.u32 %v1259, 7
        %v1261 = vsub.s32 0, %v1260
        %v1262 = vrot.slane %v1043, %v1261
        %v1263 = vlaneseq
        %v1264 = vshrl.u32 %v1263, 7
        %v1265 = vsub.s32 0, %v1264
        %v1266 = vrot.slane %v1044, %v1265
        %v1267 = vlaneseq
        %v1268 = vshrl.u32 %v1267, 7
        %v1269 = vsub.s32 0, %v1268
        %v1270 = vrot.slane %v1045, %v1269
        %v1271 = vlaneseq
        %v1272 = vshrl.u32 %v1271, 7
        %v1273 = vsub.s32 0, %v1272
        %v1274 = vrot.slane %v1046, %v1273
        %v1280 = vsel %vm978, %v1027, 0
        %1282 = vmatprep.subr.bf16.mxu0 0
        %1283 = vmatpush1.bf16.xpose.msra.mxu0 %v1280
        %1284 = vmatprep.subr.bf16.mxu0 0
        %1285 = vmatpush1.bf16.xpose.msra.mxu0 0
        %1286 = vmatprep.subr.bf16.mxu0 0
        %1287 = vmatpush1.bf16.xpose.msra.mxu0 0
        %1288 = vmatprep.subr.bf16.mxu0 0
        %1289 = vmatpush1.bf16.xpose.msra.mxu0 0
        %1290 = vmatprep.subr.bf16.mxu0 0
        %1291 = vmatpush1.bf16.xpose.msra.mxu0 0
        %1292 = vmatprep.subr.bf16.mxu0 0
        %1293 = vmatpush1.bf16.xpose.msra.mxu0 0
        %1294 = vmatprep.subr.bf16.mxu0 0
        %1295 = vmatpush1.bf16.xpose.msra.mxu0 0
        %1296 = vmatprep.subr.bf16.mxu0 0
        %1297 = vmatpush1.bf16.xpose.msra.mxu0 0
        %1298 = vmatprep.subr.bf16.mxu0 0
        %1299 = vmatpush1.bf16.xpose.msra.mxu0 0
        %1300 = vmatprep.subr.bf16.mxu0 0
        %1301 = vmatpush1.bf16.xpose.msra.mxu0 0
        %1302 = vmatprep.subr.bf16.mxu0 0
        %1303 = vmatpush1.bf16.xpose.msra.mxu0 0
        %1304 = vmatprep.subr.bf16.mxu0 0
        %1305 = vmatpush1.bf16.xpose.msra.mxu0 0
        %1306 = vmatprep.subr.bf16.mxu0 0
        %1307 = vmatpush1.bf16.xpose.msra.mxu0 0
        %1308 = vmatprep.subr.bf16.mxu0 0
        %1309 = vmatpush1.bf16.xpose.msra.mxu0 0
        %1310 = vmatprep.subr.bf16.mxu0 0
        %1311 = vmatpush1.bf16.xpose.msra.mxu0 0
        %1312 = vmatprep.subr.bf16.mxu0 0
        %1313 = vmatpush1.bf16.xpose.msra.mxu0 0
        %1314 = vmatprep.mubr.bf16.mxu0 0
        %1315 = vmatmul.mubr.bf16.gmra.mrb[0].mxu0 %v1081
        %v1316 = vpop.f32.mrb[0].mxu0
        %v1317 = vadd.f32 %v1262, %v1316
        %v1318 = vpop.f32.mrb[0].mxu0
        %v1319 = vpop.f32.mrb[0].mxu0
        %v1320 = vpop.f32.mrb[0].mxu0
        %1321 = vdwg.mxu0
        %v1323 = vsel %vm978, %v1028, 0
        %1325 = vmatprep.subr.bf16.mxu0 0
        %1326 = vmatpush1.bf16.xpose.msra.mxu0 %v1323
        %1327 = vmatprep.subr.bf16.mxu0 0
        %1328 = vmatpush1.bf16.xpose.msra.mxu0 0
        %1329 = vmatprep.subr.bf16.mxu0 0
        %1330 = vmatpush1.bf16.xpose.msra.mxu0 0
        %1331 = vmatprep.subr.bf16.mxu0 0
        %1332 = vmatpush1.bf16.xpose.msra.mxu0 0
        %1333 = vmatprep.subr.bf16.mxu0 0
        %1334 = vmatpush1.bf16.xpose.msra.mxu0 0
        %1335 = vmatprep.subr.bf16.mxu0 0
        %1336 = vmatpush1.bf16.xpose.msra.mxu0 0
        %1337 = vmatprep.subr.bf16.mxu0 0
        %1338 = vmatpush1.bf16.xpose.msra.mxu0 0
        %1339 = vmatprep.subr.bf16.mxu0 0
        %1340 = vmatpush1.bf16.xpose.msra.mxu0 0
        %1341 = vmatprep.subr.bf16.mxu0 0
        %1342 = vmatpush1.bf16.xpose.msra.mxu0 0
        %1343 = vmatprep.subr.bf16.mxu0 0
        %1344 = vmatpush1.bf16.xpose.msra.mxu0 0
        %1345 = vmatprep.subr.bf16.mxu0 0
        %1346 = vmatpush1.bf16.xpose.msra.mxu0 0
        %1347 = vmatprep.subr.bf16.mxu0 0
        %1348 = vmatpush1.bf16.xpose.msra.mxu0 0
        %1349 = vmatprep.subr.bf16.mxu0 0
        %1350 = vmatpush1.bf16.xpose.msra.mxu0 0
        %1351 = vmatprep.subr.bf16.mxu0 0
        %1352 = vmatpush1.bf16.xpose.msra.mxu0 0
        %1353 = vmatprep.subr.bf16.mxu0 0
        %1354 = vmatpush1.bf16.xpose.msra.mxu0 0
        %1355 = vmatprep.subr.bf16.mxu0 0
        %1356 = vmatpush1.bf16.xpose.msra.mxu0 0
        %1357 = vmatprep.mubr.bf16.mxu0 0
        %1358 = vmatmul.mubr.bf16.gmra.mrb[0].mxu0 %v1081
        %v1359 = vpop.f32.mrb[0].mxu0
        %v1360 = vadd.f32 %v1266, %v1359
        %v1361 = vpop.f32.mrb[0].mxu0
        %v1362 = vpop.f32.mrb[0].mxu0
        %v1363 = vpop.f32.mrb[0].mxu0
        %1364 = vdwg.mxu0
        %v1366 = vsel %vm978, %v1029, 0
        %1368 = vmatprep.subr.bf16.mxu0 0
        %1369 = vmatpush1.bf16.xpose.msra.mxu0 %v1366
        %1370 = vmatprep.subr.bf16.mxu0 0
        %1371 = vmatpush1.bf16.xpose.msra.mxu0 0
        %1372 = vmatprep.subr.bf16.mxu0 0
        %1373 = vmatpush1.bf16.xpose.msra.mxu0 0
        %1374 = vmatprep.subr.bf16.mxu0 0
        %1375 = vmatpush1.bf16.xpose.msra.mxu0 0
        %1376 = vmatprep.subr.bf16.mxu0 0
        %1377 = vmatpush1.bf16.xpose.msra.mxu0 0
        %1378 = vmatprep.subr.bf16.mxu0 0
        %1379 = vmatpush1.bf16.xpose.msra.mxu0 0
        %1380 = vmatprep.subr.bf16.mxu0 0
        %1381 = vmatpush1.bf16.xpose.msra.mxu0 0
        %1382 = vmatprep.subr.bf16.mxu0 0
        %1383 = vmatpush1.bf16.xpose.msra.mxu0 0
        %1384 = vmatprep.subr.bf16.mxu0 0
        %1385 = vmatpush1.bf16.xpose.msra.mxu0 0
        %1386 = vmatprep.subr.bf16.mxu0 0
        %1387 = vmatpush1.bf16.xpose.msra.mxu0 0
        %1388 = vmatprep.subr.bf16.mxu0 0
        %1389 = vmatpush1.bf16.xpose.msra.mxu0 0
        %1390 = vmatprep.subr.bf16.mxu0 0
        %1391 = vmatpush1.bf16.xpose.msra.mxu0 0
        %1392 = vmatprep.subr.bf16.mxu0 0
        %1393 = vmatpush1.bf16.xpose.msra.mxu0 0
        %1394 = vmatprep.subr.bf16.mxu0 0
        %1395 = vmatpush1.bf16.xpose.msra.mxu0 0
        %1396 = vmatprep.subr.bf16.mxu0 0
        %1397 = vmatpush1.bf16.xpose.msra.mxu0 0
        %1398 = vmatprep.subr.bf16.mxu0 0
        %1399 = vmatpush1.bf16.xpose.msra.mxu0 0
        %1400 = vmatprep.mubr.bf16.mxu0 0
        %1401 = vmatmul.mubr.bf16.gmra.mrb[0].mxu0 %v1081
        %v1402 = vpop.f32.mrb[0].mxu0
        %v1403 = vadd.f32 %v1270, %v1402
        %v1404 = vpop.f32.mrb[0].mxu0
        %v1405 = vpop.f32.mrb[0].mxu0
        %v1406 = vpop.f32.mrb[0].mxu0
        %1407 = vdwg.mxu0
        %v1409 = vsel %vm978, %v1030, 0
        %1411 = vmatprep.subr.bf16.mxu0 0
        %1412 = vmatpush1.bf16.xpose.msra.mxu0 %v1409
        %1413 = vmatprep.subr.bf16.mxu0 0
        %1414 = vmatpush1.bf16.xpose.msra.mxu0 0
        %1415 = vmatprep.subr.bf16.mxu0 0
        %1416 = vmatpush1.bf16.xpose.msra.mxu0 0
        %1417 = vmatprep.subr.bf16.mxu0 0
        %1418 = vmatpush1.bf16.xpose.msra.mxu0 0
        %1419 = vmatprep.subr.bf16.mxu0 0
        %1420 = vmatpush1.bf16.xpose.msra.mxu0 0
        %1421 = vmatprep.subr.bf16.mxu0 0
        %1422 = vmatpush1.bf16.xpose.msra.mxu0 0
        %1423 = vmatprep.subr.bf16.mxu0 0
        %1424 = vmatpush1.bf16.xpose.msra.mxu0 0
        %1425 = vmatprep.subr.bf16.mxu0 0
        %1426 = vmatpush1.bf16.xpose.msra.mxu0 0
        %1427 = vmatprep.subr.bf16.mxu0 0
        %1428 = vmatpush1.bf16.xpose.msra.mxu0 0
        %1429 = vmatprep.subr.bf16.mxu0 0
        %1430 = vmatpush1.bf16.xpose.msra.mxu0 0
        %1431 = vmatprep.subr.bf16.mxu0 0
        %1432 = vmatpush1.bf16.xpose.msra.mxu0 0
        %1433 = vmatprep.subr.bf16.mxu0 0
        %1434 = vmatpush1.bf16.xpose.msra.mxu0 0
        %1435 = vmatprep.subr.bf16.mxu0 0
        %1436 = vmatpush1.bf16.xpose.msra.mxu0 0
        %1437 = vmatprep.subr.bf16.mxu0 0
        %1438 = vmatpush1.bf16.xpose.msra.mxu0 0
        %1439 = vmatprep.subr.bf16.mxu0 0
        %1440 = vmatpush1.bf16.xpose.msra.mxu0 0
        %1441 = vmatprep.subr.bf16.mxu0 0
        %1442 = vmatpush1.bf16.xpose.msra.mxu0 0
        %1443 = vmatprep.mubr.bf16.mxu0 0
        %1444 = vmatmul.mubr.bf16.gmra.mrb[0].mxu0 %v1081
        %v1445 = vpop.f32.mrb[0].mxu0
        %v1446 = vadd.f32 %v1274, %v1445
        %v1447 = vpop.f32.mrb[0].mxu0
        %v1448 = vpop.f32.mrb[0].mxu0
        %v1449 = vpop.f32.mrb[0].mxu0
        %1450 = vdwg.mxu0
        %v1455 = vlaneseq
        %v1456 = vshrl.u32 %v1455, 7
        %v1457 = vsub.s32 0, %v1456
        %v1458 = vrot.slane %v1047, %v1457
        %v1459 = vlaneseq
        %v1460 = vshrl.u32 %v1459, 7
        %v1461 = vsub.s32 0, %v1460
        %v1462 = vrot.slane %v1048, %v1461
        %v1463 = vlaneseq
        %v1464 = vshrl.u32 %v1463, 7
        %v1465 = vsub.s32 0, %v1464
        %v1466 = vrot.slane %v1049, %v1465
        %v1467 = vlaneseq
        %v1468 = vshrl.u32 %v1467, 7
        %v1469 = vsub.s32 0, %v1468
        %v1470 = vrot.slane %v1050, %v1469
        %v1476 = vsel %vm978, %v1031, 0
        %1478 = vmatprep.subr.bf16.mxu0 0
        %1479 = vmatpush1.bf16.xpose.msra.mxu0 %v1476
        %1480 = vmatprep.subr.bf16.mxu0 0
        %1481 = vmatpush1.bf16.xpose.msra.mxu0 0
        %1482 = vmatprep.subr.bf16.mxu0 0
        %1483 = vmatpush1.bf16.xpose.msra.mxu0 0
        %1484 = vmatprep.subr.bf16.mxu0 0
        %1485 = vmatpush1.bf16.xpose.msra.mxu0 0
        %1486 = vmatprep.subr.bf16.mxu0 0
        %1487 = vmatpush1.bf16.xpose.msra.mxu0 0
        %1488 = vmatprep.subr.bf16.mxu0 0
        %1489 = vmatpush1.bf16.xpose.msra.mxu0 0
        %1490 = vmatprep.subr.bf16.mxu0 0
        %1491 = vmatpush1.bf16.xpose.msra.mxu0 0
        %1492 = vmatprep.subr.bf16.mxu0 0
        %1493 = vmatpush1.bf16.xpose.msra.mxu0 0
        %1494 = vmatprep.subr.bf16.mxu0 0
        %1495 = vmatpush1.bf16.xpose.msra.mxu0 0
        %1496 = vmatprep.subr.bf16.mxu0 0
        %1497 = vmatpush1.bf16.xpose.msra.mxu0 0
        %1498 = vmatprep.subr.bf16.mxu0 0
        %1499 = vmatpush1.bf16.xpose.msra.mxu0 0
        %1500 = vmatprep.subr.bf16.mxu0 0
        %1501 = vmatpush1.bf16.xpose.msra.mxu0 0
        %1502 = vmatprep.subr.bf16.mxu0 0
        %1503 = vmatpush1.bf16.xpose.msra.mxu0 0
        %1504 = vmatprep.subr.bf16.mxu0 0
        %1505 = vmatpush1.bf16.xpose.msra.mxu0 0
        %1506 = vmatprep.subr.bf16.mxu0 0
        %1507 = vmatpush1.bf16.xpose.msra.mxu0 0
        %1508 = vmatprep.subr.bf16.mxu0 0
        %1509 = vmatpush1.bf16.xpose.msra.mxu0 0
        %1510 = vmatprep.mubr.bf16.mxu0 0
        %1511 = vmatmul.mubr.bf16.gmra.mrb[0].mxu0 %v1081
        %v1512 = vpop.f32.mrb[0].mxu0
        %v1513 = vadd.f32 %v1458, %v1512
        %v1514 = vpop.f32.mrb[0].mxu0
        %v1515 = vpop.f32.mrb[0].mxu0
        %v1516 = vpop.f32.mrb[0].mxu0
        %1517 = vdwg.mxu0
        %v1519 = vsel %vm978, %v1032, 0
        %1521 = vmatprep.subr.bf16.mxu0 0
        %1522 = vmatpush1.bf16.xpose.msra.mxu0 %v1519
        %1523 = vmatprep.subr.bf16.mxu0 0
        %1524 = vmatpush1.bf16.xpose.msra.mxu0 0
        %1525 = vmatprep.subr.bf16.mxu0 0
        %1526 = vmatpush1.bf16.xpose.msra.mxu0 0
        %1527 = vmatprep.subr.bf16.mxu0 0
        %1528 = vmatpush1.bf16.xpose.msra.mxu0 0
        %1529 = vmatprep.subr.bf16.mxu0 0
        %1530 = vmatpush1.bf16.xpose.msra.mxu0 0
        %1531 = vmatprep.subr.bf16.mxu0 0
        %1532 = vmatpush1.bf16.xpose.msra.mxu0 0
        %1533 = vmatprep.subr.bf16.mxu0 0
        %1534 = vmatpush1.bf16.xpose.msra.mxu0 0
        %1535 = vmatprep.subr.bf16.mxu0 0
        %1536 = vmatpush1.bf16.xpose.msra.mxu0 0
        %1537 = vmatprep.subr.bf16.mxu0 0
        %1538 = vmatpush1.bf16.xpose.msra.mxu0 0
        %1539 = vmatprep.subr.bf16.mxu0 0
        %1540 = vmatpush1.bf16.xpose.msra.mxu0 0
        %1541 = vmatprep.subr.bf16.mxu0 0
        %1542 = vmatpush1.bf16.xpose.msra.mxu0 0
        %1543 = vmatprep.subr.bf16.mxu0 0
        %1544 = vmatpush1.bf16.xpose.msra.mxu0 0
        %1545 = vmatprep.subr.bf16.mxu0 0
        %1546 = vmatpush1.bf16.xpose.msra.mxu0 0
        %1547 = vmatprep.subr.bf16.mxu0 0
        %1548 = vmatpush1.bf16.xpose.msra.mxu0 0
        %1549 = vmatprep.subr.bf16.mxu0 0
        %1550 = vmatpush1.bf16.xpose.msra.mxu0 0
        %1551 = vmatprep.subr.bf16.mxu0 0
        %1552 = vmatpush1.bf16.xpose.msra.mxu0 0
        %1553 = vmatprep.mubr.bf16.mxu0 0
        %1554 = vmatmul.mubr.bf16.gmra.mrb[0].mxu0 %v1081
        %v1555 = vpop.f32.mrb[0].mxu0
        %v1556 = vadd.f32 %v1462, %v1555
        %v1557 = vpop.f32.mrb[0].mxu0
        %v1558 = vpop.f32.mrb[0].mxu0
        %v1559 = vpop.f32.mrb[0].mxu0
        %1560 = vdwg.mxu0
        %v1562 = vsel %vm978, %v1033, 0
        %1564 = vmatprep.subr.bf16.mxu0 0
        %1565 = vmatpush1.bf16.xpose.msra.mxu0 %v1562
        %1566 = vmatprep.subr.bf16.mxu0 0
        %1567 = vmatpush1.bf16.xpose.msra.mxu0 0
        %1568 = vmatprep.subr.bf16.mxu0 0
        %1569 = vmatpush1.bf16.xpose.msra.mxu0 0
        %1570 = vmatprep.subr.bf16.mxu0 0
        %1571 = vmatpush1.bf16.xpose.msra.mxu0 0
        %1572 = vmatprep.subr.bf16.mxu0 0
        %1573 = vmatpush1.bf16.xpose.msra.mxu0 0
        %1574 = vmatprep.subr.bf16.mxu0 0
        %1575 = vmatpush1.bf16.xpose.msra.mxu0 0
        %1576 = vmatprep.subr.bf16.mxu0 0
        %1577 = vmatpush1.bf16.xpose.msra.mxu0 0
        %1578 = vmatprep.subr.bf16.mxu0 0
        %1579 = vmatpush1.bf16.xpose.msra.mxu0 0
        %1580 = vmatprep.subr.bf16.mxu0 0
        %1581 = vmatpush1.bf16.xpose.msra.mxu0 0
        %1582 = vmatprep.subr.bf16.mxu0 0
        %1583 = vmatpush1.bf16.xpose.msra.mxu0 0
        %1584 = vmatprep.subr.bf16.mxu0 0
        %1585 = vmatpush1.bf16.xpose.msra.mxu0 0
        %1586 = vmatprep.subr.bf16.mxu0 0
        %1587 = vmatpush1.bf16.xpose.msra.mxu0 0
        %1588 = vmatprep.subr.bf16.mxu0 0
        %1589 = vmatpush1.bf16.xpose.msra.mxu0 0
        %1590 = vmatprep.subr.bf16.mxu0 0
        %1591 = vmatpush1.bf16.xpose.msra.mxu0 0
        %1592 = vmatprep.subr.bf16.mxu0 0
        %1593 = vmatpush1.bf16.xpose.msra.mxu0 0
        %1594 = vmatprep.subr.bf16.mxu0 0
        %1595 = vmatpush1.bf16.xpose.msra.mxu0 0
        %1596 = vmatprep.mubr.bf16.mxu0 0
        %1597 = vmatmul.mubr.bf16.gmra.mrb[0].mxu0 %v1081
        %v1598 = vpop.f32.mrb[0].mxu0
        %v1599 = vadd.f32 %v1466, %v1598
        %v1600 = vpop.f32.mrb[0].mxu0
        %v1601 = vpop.f32.mrb[0].mxu0
        %v1602 = vpop.f32.mrb[0].mxu0
        %1603 = vdwg.mxu0
        %v1605 = vsel %vm978, %v1034, 0
        %1607 = vmatprep.subr.bf16.mxu0 0
        %1608 = vmatpush1.bf16.xpose.msra.mxu0 %v1605
        %1609 = vmatprep.subr.bf16.mxu0 0
        %1610 = vmatpush1.bf16.xpose.msra.mxu0 0
        %1611 = vmatprep.subr.bf16.mxu0 0
        %1612 = vmatpush1.bf16.xpose.msra.mxu0 0
        %1613 = vmatprep.subr.bf16.mxu0 0
        %1614 = vmatpush1.bf16.xpose.msra.mxu0 0
        %1615 = vmatprep.subr.bf16.mxu0 0
        %1616 = vmatpush1.bf16.xpose.msra.mxu0 0
        %1617 = vmatprep.subr.bf16.mxu0 0
        %1618 = vmatpush1.bf16.xpose.msra.mxu0 0
        %1619 = vmatprep.subr.bf16.mxu0 0
        %1620 = vmatpush1.bf16.xpose.msra.mxu0 0
        %1621 = vmatprep.subr.bf16.mxu0 0
        %1622 = vmatpush1.bf16.xpose.msra.mxu0 0
        %1623 = vmatprep.subr.bf16.mxu0 0
        %1624 = vmatpush1.bf16.xpose.msra.mxu0 0
        %1625 = vmatprep.subr.bf16.mxu0 0
        %1626 = vmatpush1.bf16.xpose.msra.mxu0 0
        %1627 = vmatprep.subr.bf16.mxu0 0
        %1628 = vmatpush1.bf16.xpose.msra.mxu0 0
        %1629 = vmatprep.subr.bf16.mxu0 0
        %1630 = vmatpush1.bf16.xpose.msra.mxu0 0
        %1631 = vmatprep.subr.bf16.mxu0 0
        %1632 = vmatpush1.bf16.xpose.msra.mxu0 0
        %1633 = vmatprep.subr.bf16.mxu0 0
        %1634 = vmatpush1.bf16.xpose.msra.mxu0 0
        %1635 = vmatprep.subr.bf16.mxu0 0
        %1636 = vmatpush1.bf16.xpose.msra.mxu0 0
        %1637 = vmatprep.subr.bf16.mxu0 0
        %1638 = vmatpush1.bf16.xpose.msra.mxu0 0
        %1639 = vmatprep.mubr.bf16.mxu0 0
        %1640 = vmatmul.mubr.bf16.gmra.mrb[0].mxu0 %v1081
        %v1641 = vpop.f32.mrb[0].mxu0
        %v1642 = vadd.f32 %v1470, %v1641
        %v1643 = vpop.f32.mrb[0].mxu0
        %v1644 = vpop.f32.mrb[0].mxu0
        %v1645 = vpop.f32.mrb[0].mxu0
        %1646 = vdwg.mxu0
        %v1647 = vmul.f32 %v1121, 0.35355338
        %v1648 = vmul.f32 %v1164, 0.35355338
        %v1649 = vmul.f32 %v1207, 0.35355338
        %v1650 = vmul.f32 %v1250, 0.35355338
        %v1651 = vpack.c.bf16 %v1647, %v1647
        %v1652 = vpack.c.bf16 %v1648, %v1648
        %v1653 = vpack.c.bf16 %v1649, %v1649
        %v1654 = vpack.c.bf16 %v1650, %v1650
        %v1655 = vpack.c.bf16 %v1317, %v1317
        %v1656 = vpack.c.bf16 %v1360, %v1360
        %v1657 = vpack.c.bf16 %v1403, %v1403
        %v1658 = vpack.c.bf16 %v1446, %v1446
        %vm1659 = vcmask 64512
        %v1661 = vsel %vm1659, %v1651, 0
        %v1664 = vsel %vm1659, %v1655, 0
        %1666 = vmatprep.subr.bf16.mxu0 0
        %1667 = vmatpush1.bf16.xpose.msra.mxu0 %v1664
        %1668 = vmatprep.subr.bf16.mxu0 0
        %1669 = vmatpush1.bf16.xpose.msra.mxu0 0
        %1670 = vmatprep.subr.bf16.mxu0 0
        %1671 = vmatpush1.bf16.xpose.msra.mxu0 0
        %1672 = vmatprep.subr.bf16.mxu0 0
        %1673 = vmatpush1.bf16.xpose.msra.mxu0 0
        %1674 = vmatprep.subr.bf16.mxu0 0
        %1675 = vmatpush1.bf16.xpose.msra.mxu0 0
        %1676 = vmatprep.subr.bf16.mxu0 0
        %1677 = vmatpush1.bf16.xpose.msra.mxu0 0
        %1678 = vmatprep.subr.bf16.mxu0 0
        %1679 = vmatpush1.bf16.xpose.msra.mxu0 0
        %1680 = vmatprep.subr.bf16.mxu0 0
        %1681 = vmatpush1.bf16.xpose.msra.mxu0 0
        %1682 = vmatprep.subr.bf16.mxu0 0
        %1683 = vmatpush1.bf16.xpose.msra.mxu0 0
        %1684 = vmatprep.subr.bf16.mxu0 0
        %1685 = vmatpush1.bf16.xpose.msra.mxu0 0
        %1686 = vmatprep.subr.bf16.mxu0 0
        %1687 = vmatpush1.bf16.xpose.msra.mxu0 0
        %1688 = vmatprep.subr.bf16.mxu0 0
        %1689 = vmatpush1.bf16.xpose.msra.mxu0 0
        %1690 = vmatprep.subr.bf16.mxu0 0
        %1691 = vmatpush1.bf16.xpose.msra.mxu0 0
        %1692 = vmatprep.subr.bf16.mxu0 0
        %1693 = vmatpush1.bf16.xpose.msra.mxu0 0
        %1694 = vmatprep.subr.bf16.mxu0 0
        %1695 = vmatpush1.bf16.xpose.msra.mxu0 0
        %1696 = vmatprep.subr.bf16.mxu0 0
        %1697 = vmatpush1.bf16.xpose.msra.mxu0 0
        %1698 = vmatprep.mubr.bf16.mxu0 0
        %1699 = vmatmul.mubr.bf16.gmra.mrb[0].mxu0 %v1661
        %v1700 = vpop.f32.mrb[0].mxu0
        %v1701 = vadd.f32 0.0, %v1700
        %v1702 = vpop.f32.mrb[0].mxu0
        %v1703 = vpop.f32.mrb[0].mxu0
        %v1704 = vpop.f32.mrb[0].mxu0
        %1705 = vdwg.mxu0
        %v1707 = vsel %vm1659, %v1652, 0
        %v1710 = vsel %vm1659, %v1656, 0
        %1712 = vmatprep.subr.bf16.mxu0 0
        %1713 = vmatpush1.bf16.xpose.msra.mxu0 %v1710
        %1714 = vmatprep.subr.bf16.mxu0 0
        %1715 = vmatpush1.bf16.xpose.msra.mxu0 0
        %1716 = vmatprep.subr.bf16.mxu0 0
        %1717 = vmatpush1.bf16.xpose.msra.mxu0 0
        %1718 = vmatprep.subr.bf16.mxu0 0
        %1719 = vmatpush1.bf16.xpose.msra.mxu0 0
        %1720 = vmatprep.subr.bf16.mxu0 0
        %1721 = vmatpush1.bf16.xpose.msra.mxu0 0
        %1722 = vmatprep.subr.bf16.mxu0 0
        %1723 = vmatpush1.bf16.xpose.msra.mxu0 0
        %1724 = vmatprep.subr.bf16.mxu0 0
        %1725 = vmatpush1.bf16.xpose.msra.mxu0 0
        %1726 = vmatprep.subr.bf16.mxu0 0
        %1727 = vmatpush1.bf16.xpose.msra.mxu0 0
        %1728 = vmatprep.subr.bf16.mxu0 0
        %1729 = vmatpush1.bf16.xpose.msra.mxu0 0
        %1730 = vmatprep.subr.bf16.mxu0 0
        %1731 = vmatpush1.bf16.xpose.msra.mxu0 0
        %1732 = vmatprep.subr.bf16.mxu0 0
        %1733 = vmatpush1.bf16.xpose.msra.mxu0 0
        %1734 = vmatprep.subr.bf16.mxu0 0
        %1735 = vmatpush1.bf16.xpose.msra.mxu0 0
        %1736 = vmatprep.subr.bf16.mxu0 0
        %1737 = vmatpush1.bf16.xpose.msra.mxu0 0
        %1738 = vmatprep.subr.bf16.mxu0 0
        %1739 = vmatpush1.bf16.xpose.msra.mxu0 0
        %1740 = vmatprep.subr.bf16.mxu0 0
        %1741 = vmatpush1.bf16.xpose.msra.mxu0 0
        %1742 = vmatprep.subr.bf16.mxu0 0
        %1743 = vmatpush1.bf16.xpose.msra.mxu0 0
        %1744 = vmatprep.mubr.bf16.mxu0 0
        %1745 = vmatmul.mubr.bf16.gmra.mrb[0].mxu0 %v1707
        %v1746 = vpop.f32.mrb[0].mxu0
        %v1747 = vadd.f32 0.0, %v1746
        %v1748 = vpop.f32.mrb[0].mxu0
        %v1749 = vpop.f32.mrb[0].mxu0
        %v1750 = vpop.f32.mrb[0].mxu0
        %1751 = vdwg.mxu0
        %v1753 = vsel %vm1659, %v1653, 0
        %v1756 = vsel %vm1659, %v1657, 0
        %1758 = vmatprep.subr.bf16.mxu0 0
        %1759 = vmatpush1.bf16.xpose.msra.mxu0 %v1756
        %1760 = vmatprep.subr.bf16.mxu0 0
        %1761 = vmatpush1.bf16.xpose.msra.mxu0 0
        %1762 = vmatprep.subr.bf16.mxu0 0
        %1763 = vmatpush1.bf16.xpose.msra.mxu0 0
        %1764 = vmatprep.subr.bf16.mxu0 0
        %1765 = vmatpush1.bf16.xpose.msra.mxu0 0
        %1766 = vmatprep.subr.bf16.mxu0 0
        %1767 = vmatpush1.bf16.xpose.msra.mxu0 0
        %1768 = vmatprep.subr.bf16.mxu0 0
        %1769 = vmatpush1.bf16.xpose.msra.mxu0 0
        %1770 = vmatprep.subr.bf16.mxu0 0
        %1771 = vmatpush1.bf16.xpose.msra.mxu0 0
        %1772 = vmatprep.subr.bf16.mxu0 0
        %1773 = vmatpush1.bf16.xpose.msra.mxu0 0
        %1774 = vmatprep.subr.bf16.mxu0 0
        %1775 = vmatpush1.bf16.xpose.msra.mxu0 0
        %1776 = vmatprep.subr.bf16.mxu0 0
        %1777 = vmatpush1.bf16.xpose.msra.mxu0 0
        %1778 = vmatprep.subr.bf16.mxu0 0
        %1779 = vmatpush1.bf16.xpose.msra.mxu0 0
        %1780 = vmatprep.subr.bf16.mxu0 0
        %1781 = vmatpush1.bf16.xpose.msra.mxu0 0
        %1782 = vmatprep.subr.bf16.mxu0 0
        %1783 = vmatpush1.bf16.xpose.msra.mxu0 0
        %1784 = vmatprep.subr.bf16.mxu0 0
        %1785 = vmatpush1.bf16.xpose.msra.mxu0 0
        %1786 = vmatprep.subr.bf16.mxu0 0
        %1787 = vmatpush1.bf16.xpose.msra.mxu0 0
        %1788 = vmatprep.subr.bf16.mxu0 0
        %1789 = vmatpush1.bf16.xpose.msra.mxu0 0
        %1790 = vmatprep.mubr.bf16.mxu0 0
        %1791 = vmatmul.mubr.bf16.gmra.mrb[0].mxu0 %v1753
        %v1792 = vpop.f32.mrb[0].mxu0
        %v1793 = vadd.f32 0.0, %v1792
        %v1794 = vpop.f32.mrb[0].mxu0
        %v1795 = vpop.f32.mrb[0].mxu0
        %v1796 = vpop.f32.mrb[0].mxu0
        %1797 = vdwg.mxu0
        %v1799 = vsel %vm1659, %v1654, 0
        %v1802 = vsel %vm1659, %v1658, 0
        %1804 = vmatprep.subr.bf16.mxu0 0
        %1805 = vmatpush1.bf16.xpose.msra.mxu0 %v1802
        %1806 = vmatprep.subr.bf16.mxu0 0
        %1807 = vmatpush1.bf16.xpose.msra.mxu0 0
        %1808 = vmatprep.subr.bf16.mxu0 0
        %1809 = vmatpush1.bf16.xpose.msra.mxu0 0
        %1810 = vmatprep.subr.bf16.mxu0 0
        %1811 = vmatpush1.bf16.xpose.msra.mxu0 0
        %1812 = vmatprep.subr.bf16.mxu0 0
        %1813 = vmatpush1.bf16.xpose.msra.mxu0 0
        %1814 = vmatprep.subr.bf16.mxu0 0
        %1815 = vmatpush1.bf16.xpose.msra.mxu0 0
        %1816 = vmatprep.subr.bf16.mxu0 0
        %1817 = vmatpush1.bf16.xpose.msra.mxu0 0
        %1818 = vmatprep.subr.bf16.mxu0 0
        %1819 = vmatpush1.bf16.xpose.msra.mxu0 0
        %1820 = vmatprep.subr.bf16.mxu0 0
        %1821 = vmatpush1.bf16.xpose.msra.mxu0 0
        %1822 = vmatprep.subr.bf16.mxu0 0
        %1823 = vmatpush1.bf16.xpose.msra.mxu0 0
        %1824 = vmatprep.subr.bf16.mxu0 0
        %1825 = vmatpush1.bf16.xpose.msra.mxu0 0
        %1826 = vmatprep.subr.bf16.mxu0 0
        %1827 = vmatpush1.bf16.xpose.msra.mxu0 0
        %1828 = vmatprep.subr.bf16.mxu0 0
        %1829 = vmatpush1.bf16.xpose.msra.mxu0 0
        %1830 = vmatprep.subr.bf16.mxu0 0
        %1831 = vmatpush1.bf16.xpose.msra.mxu0 0
        %1832 = vmatprep.subr.bf16.mxu0 0
        %1833 = vmatpush1.bf16.xpose.msra.mxu0 0
        %1834 = vmatprep.subr.bf16.mxu0 0
        %1835 = vmatpush1.bf16.xpose.msra.mxu0 0
        %1836 = vmatprep.mubr.bf16.mxu0 0
        %1837 = vmatmul.mubr.bf16.gmra.mrb[0].mxu0 %v1799
        %v1838 = vpop.f32.mrb[0].mxu0
        %v1839 = vadd.f32 0.0, %v1838
        %v1840 = vpop.f32.mrb[0].mxu0
        %v1841 = vpop.f32.mrb[0].mxu0
        %v1842 = vpop.f32.mrb[0].mxu0
        %1843 = vdwg.mxu0
        %v1844 = vsel %vm1055, %v1701, -1e+09
        %v1845 = vsel %vm1055, %v1747, -1e+09
        %v1846 = vsel %vm1055, %v1793, -1e+09
        %v1847 = vsel %vm1055, %v1839, -1e+09
        %v1848 = vsel %vm1659, %v1844, -inf
        %1849 = vmax.xlane.f32.xlu0 %v1848
        %v1850 = vpop.xlane.xlu0 %1849
        %v1851 = vsel %vm1659, %v1845, -inf
        %1852 = vmax.xlane.f32.xlu0 %v1851
        %v1853 = vpop.xlane.xlu0 %1852
        %v1854 = vsel %vm1659, %v1846, -inf
        %1855 = vmax.xlane.f32.xlu0 %v1854
        %v1856 = vpop.xlane.xlu0 %1855
        %v1857 = vsel %vm1659, %v1847, -inf
        %1858 = vmax.xlane.f32.xlu0 %v1857
        %v1859 = vpop.xlane.xlu0 %1858
        %v1860 = vsub.f32 %v1844, %v1850
        %v1861 = vsub.f32 %v1845, %v1853
        %v1862 = vsub.f32 %v1846, %v1856
        %v1863 = vsub.f32 %v1847, %v1859
        %v1864 = vmul.f32 %v1860, 1.442695
        %v1865 = vpow.pop %v1864
        %v1866 = vmul.f32 %v1861, 1.442695
        %v1867 = vpow.pop %v1866
        %v1868 = vmul.f32 %v1862, 1.442695
        %v1869 = vpow.pop %v1868
        %v1870 = vmul.f32 %v1863, 1.442695
        %v1871 = vpow.pop %v1870
        %v1872 = vsel %vm1659, %v1865, 0.0
        %1873 = vadd.xlane.f32.xlu0 %v1872
        %v1874 = vpop.xlane.xlu0 %1873
        %v1875 = vsel %vm1659, %v1867, 0.0
        %1876 = vadd.xlane.f32.xlu0 %v1875
        %v1877 = vpop.xlane.xlu0 %1876
        %v1878 = vsel %vm1659, %v1869, 0.0
        %1879 = vadd.xlane.f32.xlu0 %v1878
        %v1880 = vpop.xlane.xlu0 %1879
        %v1881 = vsel %vm1659, %v1871, 0.0
        %1882 = vadd.xlane.f32.xlu0 %v1881
        %v1883 = vpop.xlane.xlu0 %1882
        %v1884 = vrcp.pop %v1874
        %v1885 = vrcp.pop %v1877
        %v1886 = vrcp.pop %v1880
        %v1887 = vrcp.pop %v1883
        %v1888 = vmul.f32 %v1865, %v1884
        %v1889 = vmul.f32 %v1867, %v1885
        %v1890 = vmul.f32 %v1869, %v1886
        %v1891 = vmul.f32 %v1871, %v1887
        %v1892 = vpack.c.bf16 %v1888, %v1888
        %v1893 = vpack.c.bf16 %v1889, %v1889
        %v1894 = vpack.c.bf16 %v1890, %v1890
        %v1895 = vpack.c.bf16 %v1891, %v1891
        %v1896 = vpack.c.bf16 %v1513, %v1513
        %v1897 = vpack.c.bf16 %v1556, %v1556
        %v1898 = vpack.c.bf16 %v1599, %v1599
        %v1899 = vpack.c.bf16 %v1642, %v1642
        %v1901 = vsel %vm1659, %v1892, 0
        %vm1903 = vcmask 1043456
        %v1905 = vsel %vm1903, %v1896, 0
        %1907 = vmatprep.subr.bf16.mxu0 0
        %1908 = vmatpush1.bf16.msra.mxu0 %v1905
        %1909 = vmatprep.subr.bf16.mxu0 0
        %1910 = vmatpush1.bf16.msra.mxu0 0
        %1911 = vmatprep.subr.bf16.mxu0 0
        %1912 = vmatpush1.bf16.msra.mxu0 0
        %1913 = vmatprep.subr.bf16.mxu0 0
        %1914 = vmatpush1.bf16.msra.mxu0 0
        %1915 = vmatprep.subr.bf16.mxu0 0
        %1916 = vmatpush1.bf16.msra.mxu0 0
        %1917 = vmatprep.subr.bf16.mxu0 0
        %1918 = vmatpush1.bf16.msra.mxu0 0
        %1919 = vmatprep.subr.bf16.mxu0 0
        %1920 = vmatpush1.bf16.msra.mxu0 0
        %1921 = vmatprep.subr.bf16.mxu0 0
        %1922 = vmatpush1.bf16.msra.mxu0 0
        %1923 = vmatprep.subr.bf16.mxu0 0
        %1924 = vmatpush1.bf16.msra.mxu0 0
        %1925 = vmatprep.subr.bf16.mxu0 0
        %1926 = vmatpush1.bf16.msra.mxu0 0
        %1927 = vmatprep.subr.bf16.mxu0 0
        %1928 = vmatpush1.bf16.msra.mxu0 0
        %1929 = vmatprep.subr.bf16.mxu0 0
        %1930 = vmatpush1.bf16.msra.mxu0 0
        %1931 = vmatprep.subr.bf16.mxu0 0
        %1932 = vmatpush1.bf16.msra.mxu0 0
        %1933 = vmatprep.subr.bf16.mxu0 0
        %1934 = vmatpush1.bf16.msra.mxu0 0
        %1935 = vmatprep.subr.bf16.mxu0 0
        %1936 = vmatpush1.bf16.msra.mxu0 0
        %1937 = vmatprep.subr.bf16.mxu0 0
        %1938 = vmatpush1.bf16.msra.mxu0 0
        %1939 = vmatprep.mubr.bf16.mxu0 0
        %1940 = vmatmul.mubr.bf16.gmra.mrb[0].mxu0 %v1901
        %v1941 = vpop.f32.mrb[0].mxu0
        %v1942 = vadd.f32 0.0, %v1941
        %v1943 = vpop.f32.mrb[0].mxu0
        %v1944 = vpop.f32.mrb[0].mxu0
        %v1945 = vpop.f32.mrb[0].mxu0
        %1946 = vdwg.mxu0
        %v1948 = vsel %vm1659, %v1893, 0
        %v1951 = vsel %vm1903, %v1897, 0
        %1953 = vmatprep.subr.bf16.mxu0 0
        %1954 = vmatpush1.bf16.msra.mxu0 %v1951
        %1955 = vmatprep.subr.bf16.mxu0 0
        %1956 = vmatpush1.bf16.msra.mxu0 0
        %1957 = vmatprep.subr.bf16.mxu0 0
        %1958 = vmatpush1.bf16.msra.mxu0 0
        %1959 = vmatprep.subr.bf16.mxu0 0
        %1960 = vmatpush1.bf16.msra.mxu0 0
        %1961 = vmatprep.subr.bf16.mxu0 0
        %1962 = vmatpush1.bf16.msra.mxu0 0
        %1963 = vmatprep.subr.bf16.mxu0 0
        %1964 = vmatpush1.bf16.msra.mxu0 0
        %1965 = vmatprep.subr.bf16.mxu0 0
        %1966 = vmatpush1.bf16.msra.mxu0 0
        %1967 = vmatprep.subr.bf16.mxu0 0
        %1968 = vmatpush1.bf16.msra.mxu0 0
        %1969 = vmatprep.subr.bf16.mxu0 0
        %1970 = vmatpush1.bf16.msra.mxu0 0
        %1971 = vmatprep.subr.bf16.mxu0 0
        %1972 = vmatpush1.bf16.msra.mxu0 0
        %1973 = vmatprep.subr.bf16.mxu0 0
        %1974 = vmatpush1.bf16.msra.mxu0 0
        %1975 = vmatprep.subr.bf16.mxu0 0
        %1976 = vmatpush1.bf16.msra.mxu0 0
        %1977 = vmatprep.subr.bf16.mxu0 0
        %1978 = vmatpush1.bf16.msra.mxu0 0
        %1979 = vmatprep.subr.bf16.mxu0 0
        %1980 = vmatpush1.bf16.msra.mxu0 0
        %1981 = vmatprep.subr.bf16.mxu0 0
        %1982 = vmatpush1.bf16.msra.mxu0 0
        %1983 = vmatprep.subr.bf16.mxu0 0
        %1984 = vmatpush1.bf16.msra.mxu0 0
        %1985 = vmatprep.mubr.bf16.mxu0 0
        %1986 = vmatmul.mubr.bf16.gmra.mrb[0].mxu0 %v1948
        %v1987 = vpop.f32.mrb[0].mxu0
        %v1988 = vadd.f32 0.0, %v1987
        %v1989 = vpop.f32.mrb[0].mxu0
        %v1990 = vpop.f32.mrb[0].mxu0
        %v1991 = vpop.f32.mrb[0].mxu0
        %1992 = vdwg.mxu0
        %v1994 = vsel %vm1659, %v1894, 0
        %v1997 = vsel %vm1903, %v1898, 0
        %1999 = vmatprep.subr.bf16.mxu0 0
        %2000 = vmatpush1.bf16.msra.mxu0 %v1997
        %2001 = vmatprep.subr.bf16.mxu0 0
        %2002 = vmatpush1.bf16.msra.mxu0 0
        %2003 = vmatprep.subr.bf16.mxu0 0
        %2004 = vmatpush1.bf16.msra.mxu0 0
        %2005 = vmatprep.subr.bf16.mxu0 0
        %2006 = vmatpush1.bf16.msra.mxu0 0
        %2007 = vmatprep.subr.bf16.mxu0 0
        %2008 = vmatpush1.bf16.msra.mxu0 0
        %2009 = vmatprep.subr.bf16.mxu0 0
        %2010 = vmatpush1.bf16.msra.mxu0 0
        %2011 = vmatprep.subr.bf16.mxu0 0
        %2012 = vmatpush1.bf16.msra.mxu0 0
        %2013 = vmatprep.subr.bf16.mxu0 0
        %2014 = vmatpush1.bf16.msra.mxu0 0
        %2015 = vmatprep.subr.bf16.mxu0 0
        %2016 = vmatpush1.bf16.msra.mxu0 0
        %2017 = vmatprep.subr.bf16.mxu0 0
        %2018 = vmatpush1.bf16.msra.mxu0 0
        %2019 = vmatprep.subr.bf16.mxu0 0
        %2020 = vmatpush1.bf16.msra.mxu0 0
        %2021 = vmatprep.subr.bf16.mxu0 0
        %2022 = vmatpush1.bf16.msra.mxu0 0
        %2023 = vmatprep.subr.bf16.mxu0 0
        %2024 = vmatpush1.bf16.msra.mxu0 0
        %2025 = vmatprep.subr.bf16.mxu0 0
        %2026 = vmatpush1.bf16.msra.mxu0 0
        %2027 = vmatprep.subr.bf16.mxu0 0
        %2028 = vmatpush1.bf16.msra.mxu0 0
        %2029 = vmatprep.subr.bf16.mxu0 0
        %2030 = vmatpush1.bf16.msra.mxu0 0
        %2031 = vmatprep.mubr.bf16.mxu0 0
        %2032 = vmatmul.mubr.bf16.gmra.mrb[0].mxu0 %v1994
        %v2033 = vpop.f32.mrb[0].mxu0
        %v2034 = vadd.f32 0.0, %v2033
        %v2035 = vpop.f32.mrb[0].mxu0
        %v2036 = vpop.f32.mrb[0].mxu0
        %v2037 = vpop.f32.mrb[0].mxu0
        %2038 = vdwg.mxu0
        %v2040 = vsel %vm1659, %v1895, 0
        %v2043 = vsel %vm1903, %v1899, 0
        %2045 = vmatprep.subr.bf16.mxu0 0
        %2046 = vmatpush1.bf16.msra.mxu0 %v2043
        %2047 = vmatprep.subr.bf16.mxu0 0
        %2048 = vmatpush1.bf16.msra.mxu0 0
        %2049 = vmatprep.subr.bf16.mxu0 0
        %2050 = vmatpush1.bf16.msra.mxu0 0
        %2051 = vmatprep.subr.bf16.mxu0 0
        %2052 = vmatpush1.bf16.msra.mxu0 0
        %2053 = vmatprep.subr.bf16.mxu0 0
        %2054 = vmatpush1.bf16.msra.mxu0 0
        %2055 = vmatprep.subr.bf16.mxu0 0
        %2056 = vmatpush1.bf16.msra.mxu0 0
        %2057 = vmatprep.subr.bf16.mxu0 0
        %2058 = vmatpush1.bf16.msra.mxu0 0
        %2059 = vmatprep.subr.bf16.mxu0 0
        %2060 = vmatpush1.bf16.msra.mxu0 0
        %2061 = vmatprep.subr.bf16.mxu0 0
        %2062 = vmatpush1.bf16.msra.mxu0 0
        %2063 = vmatprep.subr.bf16.mxu0 0
        %2064 = vmatpush1.bf16.msra.mxu0 0
        %2065 = vmatprep.subr.bf16.mxu0 0
        %2066 = vmatpush1.bf16.msra.mxu0 0
        %2067 = vmatprep.subr.bf16.mxu0 0
        %2068 = vmatpush1.bf16.msra.mxu0 0
        %2069 = vmatprep.subr.bf16.mxu0 0
        %2070 = vmatpush1.bf16.msra.mxu0 0
        %2071 = vmatprep.subr.bf16.mxu0 0
        %2072 = vmatpush1.bf16.msra.mxu0 0
        %2073 = vmatprep.subr.bf16.mxu0 0
        %2074 = vmatpush1.bf16.msra.mxu0 0
        %2075 = vmatprep.subr.bf16.mxu0 0
        %2076 = vmatpush1.bf16.msra.mxu0 0
        %2077 = vmatprep.mubr.bf16.mxu0 0
        %2078 = vmatmul.mubr.bf16.gmra.mrb[0].mxu0 %v2040
        %v2079 = vpop.f32.mrb[0].mxu0
        %v2080 = vadd.f32 0.0, %v2079
        %v2081 = vpop.f32.mrb[0].mxu0
        %v2082 = vpop.f32.mrb[0].mxu0
        %v2083 = vpop.f32.mrb[0].mxu0
        %2084 = vdwg.mxu0
        %v2085 = vpack.c.bf16 %v1942, %v1942
        %v2086 = vpack.c.bf16 %v1988, %v1988
        %v2087 = vpack.c.bf16 %v2034, %v2034
        %v2088 = vpack.c.bf16 %v2080, %v2080
        %v2090 = vsel %vm1659, %v2085, 0
        %v2093 = vsel %vm1903, %v1035, 0
        %2095 = vmatprep.subr.bf16.mxu0 0
        %2096 = vmatpush1.bf16.msra.mxu0 %v2093
        %2097 = vmatprep.subr.bf16.mxu0 0
        %2098 = vmatpush1.bf16.msra.mxu0 0
        %2099 = vmatprep.subr.bf16.mxu0 0
        %2100 = vmatpush1.bf16.msra.mxu0 0
        %2101 = vmatprep.subr.bf16.mxu0 0
        %2102 = vmatpush1.bf16.msra.mxu0 0
        %2103 = vmatprep.subr.bf16.mxu0 0
        %2104 = vmatpush1.bf16.msra.mxu0 0
        %2105 = vmatprep.subr.bf16.mxu0 0
        %2106 = vmatpush1.bf16.msra.mxu0 0
        %2107 = vmatprep.subr.bf16.mxu0 0
        %2108 = vmatpush1.bf16.msra.mxu0 0
        %2109 = vmatprep.subr.bf16.mxu0 0
        %2110 = vmatpush1.bf16.msra.mxu0 0
        %2111 = vmatprep.subr.bf16.mxu0 0
        %2112 = vmatpush1.bf16.msra.mxu0 0
        %2113 = vmatprep.subr.bf16.mxu0 0
        %2114 = vmatpush1.bf16.msra.mxu0 0
        %2115 = vmatprep.subr.bf16.mxu0 0
        %2116 = vmatpush1.bf16.msra.mxu0 0
        %2117 = vmatprep.subr.bf16.mxu0 0
        %2118 = vmatpush1.bf16.msra.mxu0 0
        %2119 = vmatprep.subr.bf16.mxu0 0
        %2120 = vmatpush1.bf16.msra.mxu0 0
        %2121 = vmatprep.subr.bf16.mxu0 0
        %2122 = vmatpush1.bf16.msra.mxu0 0
        %2123 = vmatprep.subr.bf16.mxu0 0
        %2124 = vmatpush1.bf16.msra.mxu0 0
        %2125 = vmatprep.subr.bf16.mxu0 0
        %2126 = vmatpush1.bf16.msra.mxu0 0
        %2127 = vmatprep.mubr.bf16.mxu0 0
        %2128 = vmatmul.mubr.bf16.gmra.mrb[0].mxu0 %v2090
        %v2129 = vpop.f32.mrb[0].mxu0
        %v2130 = vadd.f32 0.0, %v2129
        %v2131 = vpop.f32.mrb[0].mxu0
        %v2132 = vpop.f32.mrb[0].mxu0
        %v2133 = vpop.f32.mrb[0].mxu0
        %2134 = vdwg.mxu0
        %v2136 = vsel %vm1659, %v2086, 0
        %v2139 = vsel %vm1903, %v1036, 0
        %2141 = vmatprep.subr.bf16.mxu0 0
        %2142 = vmatpush1.bf16.msra.mxu0 %v2139
        %2143 = vmatprep.subr.bf16.mxu0 0
        %2144 = vmatpush1.bf16.msra.mxu0 0
        %2145 = vmatprep.subr.bf16.mxu0 0
        %2146 = vmatpush1.bf16.msra.mxu0 0
        %2147 = vmatprep.subr.bf16.mxu0 0
        %2148 = vmatpush1.bf16.msra.mxu0 0
        %2149 = vmatprep.subr.bf16.mxu0 0
        %2150 = vmatpush1.bf16.msra.mxu0 0
        %2151 = vmatprep.subr.bf16.mxu0 0
        %2152 = vmatpush1.bf16.msra.mxu0 0
        %2153 = vmatprep.subr.bf16.mxu0 0
        %2154 = vmatpush1.bf16.msra.mxu0 0
        %2155 = vmatprep.subr.bf16.mxu0 0
        %2156 = vmatpush1.bf16.msra.mxu0 0
        %2157 = vmatprep.subr.bf16.mxu0 0
        %2158 = vmatpush1.bf16.msra.mxu0 0
        %2159 = vmatprep.subr.bf16.mxu0 0
        %2160 = vmatpush1.bf16.msra.mxu0 0
        %2161 = vmatprep.subr.bf16.mxu0 0
        %2162 = vmatpush1.bf16.msra.mxu0 0
        %2163 = vmatprep.subr.bf16.mxu0 0
        %2164 = vmatpush1.bf16.msra.mxu0 0
        %2165 = vmatprep.subr.bf16.mxu0 0
        %2166 = vmatpush1.bf16.msra.mxu0 0
        %2167 = vmatprep.subr.bf16.mxu0 0
        %2168 = vmatpush1.bf16.msra.mxu0 0
        %2169 = vmatprep.subr.bf16.mxu0 0
        %2170 = vmatpush1.bf16.msra.mxu0 0
        %2171 = vmatprep.subr.bf16.mxu0 0
        %2172 = vmatpush1.bf16.msra.mxu0 0
        %2173 = vmatprep.mubr.bf16.mxu0 0
        %2174 = vmatmul.mubr.bf16.gmra.mrb[0].mxu0 %v2136
        %v2175 = vpop.f32.mrb[0].mxu0
        %v2176 = vadd.f32 0.0, %v2175
        %v2177 = vpop.f32.mrb[0].mxu0
        %v2178 = vpop.f32.mrb[0].mxu0
        %v2179 = vpop.f32.mrb[0].mxu0
        %2180 = vdwg.mxu0
        %v2182 = vsel %vm1659, %v2087, 0
        %v2185 = vsel %vm1903, %v1037, 0
        %2187 = vmatprep.subr.bf16.mxu0 0
        %2188 = vmatpush1.bf16.msra.mxu0 %v2185
        %2189 = vmatprep.subr.bf16.mxu0 0
        %2190 = vmatpush1.bf16.msra.mxu0 0
        %2191 = vmatprep.subr.bf16.mxu0 0
        %2192 = vmatpush1.bf16.msra.mxu0 0
        %2193 = vmatprep.subr.bf16.mxu0 0
        %2194 = vmatpush1.bf16.msra.mxu0 0
        %2195 = vmatprep.subr.bf16.mxu0 0
        %2196 = vmatpush1.bf16.msra.mxu0 0
        %2197 = vmatprep.subr.bf16.mxu0 0
        %2198 = vmatpush1.bf16.msra.mxu0 0
        %2199 = vmatprep.subr.bf16.mxu0 0
        %2200 = vmatpush1.bf16.msra.mxu0 0
        %2201 = vmatprep.subr.bf16.mxu0 0
        %2202 = vmatpush1.bf16.msra.mxu0 0
        %2203 = vmatprep.subr.bf16.mxu0 0
        %2204 = vmatpush1.bf16.msra.mxu0 0
        %2205 = vmatprep.subr.bf16.mxu0 0
        %2206 = vmatpush1.bf16.msra.mxu0 0
        %2207 = vmatprep.subr.bf16.mxu0 0
        %2208 = vmatpush1.bf16.msra.mxu0 0
        %2209 = vmatprep.subr.bf16.mxu0 0
        %2210 = vmatpush1.bf16.msra.mxu0 0
        %2211 = vmatprep.subr.bf16.mxu0 0
        %2212 = vmatpush1.bf16.msra.mxu0 0
        %2213 = vmatprep.subr.bf16.mxu0 0
        %2214 = vmatpush1.bf16.msra.mxu0 0
        %2215 = vmatprep.subr.bf16.mxu0 0
        %2216 = vmatpush1.bf16.msra.mxu0 0
        %2217 = vmatprep.subr.bf16.mxu0 0
        %2218 = vmatpush1.bf16.msra.mxu0 0
        %2219 = vmatprep.mubr.bf16.mxu0 0
        %2220 = vmatmul.mubr.bf16.gmra.mrb[0].mxu0 %v2182
        %v2221 = vpop.f32.mrb[0].mxu0
        %v2222 = vadd.f32 0.0, %v2221
        %v2223 = vpop.f32.mrb[0].mxu0
        %v2224 = vpop.f32.mrb[0].mxu0
        %v2225 = vpop.f32.mrb[0].mxu0
        %2226 = vdwg.mxu0
        %v2228 = vsel %vm1659, %v2088, 0
        %v2231 = vsel %vm1903, %v1038, 0
        %2233 = vmatprep.subr.bf16.mxu0 0
        %2234 = vmatpush1.bf16.msra.mxu0 %v2231
        %2235 = vmatprep.subr.bf16.mxu0 0
        %2236 = vmatpush1.bf16.msra.mxu0 0
        %2237 = vmatprep.subr.bf16.mxu0 0
        %2238 = vmatpush1.bf16.msra.mxu0 0
        %2239 = vmatprep.subr.bf16.mxu0 0
        %2240 = vmatpush1.bf16.msra.mxu0 0
        %2241 = vmatprep.subr.bf16.mxu0 0
        %2242 = vmatpush1.bf16.msra.mxu0 0
        %2243 = vmatprep.subr.bf16.mxu0 0
        %2244 = vmatpush1.bf16.msra.mxu0 0
        %2245 = vmatprep.subr.bf16.mxu0 0
        %2246 = vmatpush1.bf16.msra.mxu0 0
        %2247 = vmatprep.subr.bf16.mxu0 0
        %2248 = vmatpush1.bf16.msra.mxu0 0
        %2249 = vmatprep.subr.bf16.mxu0 0
        %2250 = vmatpush1.bf16.msra.mxu0 0
        %2251 = vmatprep.subr.bf16.mxu0 0
        %2252 = vmatpush1.bf16.msra.mxu0 0
        %2253 = vmatprep.subr.bf16.mxu0 0
        %2254 = vmatpush1.bf16.msra.mxu0 0
        %2255 = vmatprep.subr.bf16.mxu0 0
        %2256 = vmatpush1.bf16.msra.mxu0 0
        %2257 = vmatprep.subr.bf16.mxu0 0
        %2258 = vmatpush1.bf16.msra.mxu0 0
        %2259 = vmatprep.subr.bf16.mxu0 0
        %2260 = vmatpush1.bf16.msra.mxu0 0
        %2261 = vmatprep.subr.bf16.mxu0 0
        %2262 = vmatpush1.bf16.msra.mxu0 0
        %2263 = vmatprep.subr.bf16.mxu0 0
        %2264 = vmatpush1.bf16.msra.mxu0 0
        %2265 = vmatprep.mubr.bf16.mxu0 0
        %2266 = vmatmul.mubr.bf16.gmra.mrb[0].mxu0 %v2228
        %v2267 = vpop.f32.mrb[0].mxu0
        %v2268 = vadd.f32 0.0, %v2267
        %v2269 = vpop.f32.mrb[0].mxu0
        %v2270 = vpop.f32.mrb[0].mxu0
        %v2271 = vpop.f32.mrb[0].mxu0
        %2272 = vdwg.mxu0
        %v2273 = vsel %vm978, %v2130, 0.0
        %v2274 = vsel %vm978, %v2176, 0.0
        %v2275 = vadd.f32 %v2273, %v2274
        %v2276 = vsel %vm978, %v2222, 0.0
        %v2277 = vadd.f32 %v2275, %v2276
        %v2278 = vsel %vm978, %v2268, 0.0
        %v2279 = vadd.f32 %v2277, %v2278
        %v2281 = vrot.slane %v1022, 4
        %v2283 = vsel %vm978, %v2281, 0
        %2285 = vmatprep.subr.bf16.mxu0 0
        %2286 = vmatpush1.bf16.xpose.msra.mxu0 %v1084
        %2287 = vmatprep.subr.bf16.mxu0 0
        %2288 = vmatpush1.bf16.xpose.msra.mxu0 0
        %2289 = vmatprep.subr.bf16.mxu0 0
        %2290 = vmatpush1.bf16.xpose.msra.mxu0 0
        %2291 = vmatprep.subr.bf16.mxu0 0
        %2292 = vmatpush1.bf16.xpose.msra.mxu0 0
        %2293 = vmatprep.subr.bf16.mxu0 0
        %2294 = vmatpush1.bf16.xpose.msra.mxu0 0
        %2295 = vmatprep.subr.bf16.mxu0 0
        %2296 = vmatpush1.bf16.xpose.msra.mxu0 0
        %2297 = vmatprep.subr.bf16.mxu0 0
        %2298 = vmatpush1.bf16.xpose.msra.mxu0 0
        %2299 = vmatprep.subr.bf16.mxu0 0
        %2300 = vmatpush1.bf16.xpose.msra.mxu0 0
        %2301 = vmatprep.subr.bf16.mxu0 0
        %2302 = vmatpush1.bf16.xpose.msra.mxu0 0
        %2303 = vmatprep.subr.bf16.mxu0 0
        %2304 = vmatpush1.bf16.xpose.msra.mxu0 0
        %2305 = vmatprep.subr.bf16.mxu0 0
        %2306 = vmatpush1.bf16.xpose.msra.mxu0 0
        %2307 = vmatprep.subr.bf16.mxu0 0
        %2308 = vmatpush1.bf16.xpose.msra.mxu0 0
        %2309 = vmatprep.subr.bf16.mxu0 0
        %2310 = vmatpush1.bf16.xpose.msra.mxu0 0
        %2311 = vmatprep.subr.bf16.mxu0 0
        %2312 = vmatpush1.bf16.xpose.msra.mxu0 0
        %2313 = vmatprep.subr.bf16.mxu0 0
        %2314 = vmatpush1.bf16.xpose.msra.mxu0 0
        %2315 = vmatprep.subr.bf16.mxu0 0
        %2316 = vmatpush1.bf16.xpose.msra.mxu0 0
        %2317 = vmatprep.mubr.bf16.mxu0 0
        %2318 = vmatmul.mubr.bf16.gmra.mrb[0].mxu0 %v2283
        %v2319 = vpop.f32.mrb[0].mxu0
        %v2320 = vadd.f32 %v1063, %v2319
        %v2321 = vpop.f32.mrb[0].mxu0
        %v2322 = vpop.f32.mrb[0].mxu0
        %v2323 = vpop.f32.mrb[0].mxu0
        %2324 = vdwg.mxu0
        %2325 = vmatprep.subr.bf16.mxu0 0
        %2326 = vmatpush1.bf16.xpose.msra.mxu0 %v1127
        %2327 = vmatprep.subr.bf16.mxu0 0
        %2328 = vmatpush1.bf16.xpose.msra.mxu0 0
        %2329 = vmatprep.subr.bf16.mxu0 0
        %2330 = vmatpush1.bf16.xpose.msra.mxu0 0
        %2331 = vmatprep.subr.bf16.mxu0 0
        %2332 = vmatpush1.bf16.xpose.msra.mxu0 0
        %2333 = vmatprep.subr.bf16.mxu0 0
        %2334 = vmatpush1.bf16.xpose.msra.mxu0 0
        %2335 = vmatprep.subr.bf16.mxu0 0
        %2336 = vmatpush1.bf16.xpose.msra.mxu0 0
        %2337 = vmatprep.subr.bf16.mxu0 0
        %2338 = vmatpush1.bf16.xpose.msra.mxu0 0
        %2339 = vmatprep.subr.bf16.mxu0 0
        %2340 = vmatpush1.bf16.xpose.msra.mxu0 0
        %2341 = vmatprep.subr.bf16.mxu0 0
        %2342 = vmatpush1.bf16.xpose.msra.mxu0 0
        %2343 = vmatprep.subr.bf16.mxu0 0
        %2344 = vmatpush1.bf16.xpose.msra.mxu0 0
        %2345 = vmatprep.subr.bf16.mxu0 0
        %2346 = vmatpush1.bf16.xpose.msra.mxu0 0
        %2347 = vmatprep.subr.bf16.mxu0 0
        %2348 = vmatpush1.bf16.xpose.msra.mxu0 0
        %2349 = vmatprep.subr.bf16.mxu0 0
        %2350 = vmatpush1.bf16.xpose.msra.mxu0 0
        %2351 = vmatprep.subr.bf16.mxu0 0
        %2352 = vmatpush1.bf16.xpose.msra.mxu0 0
        %2353 = vmatprep.subr.bf16.mxu0 0
        %2354 = vmatpush1.bf16.xpose.msra.mxu0 0
        %2355 = vmatprep.subr.bf16.mxu0 0
        %2356 = vmatpush1.bf16.xpose.msra.mxu0 0
        %2357 = vmatprep.mubr.bf16.mxu0 0
        %2358 = vmatmul.mubr.bf16.gmra.mrb[0].mxu0 %v2283
        %v2359 = vpop.f32.mrb[0].mxu0
        %v2360 = vadd.f32 %v1067, %v2359
        %v2361 = vpop.f32.mrb[0].mxu0
        %v2362 = vpop.f32.mrb[0].mxu0
        %v2363 = vpop.f32.mrb[0].mxu0
        %2364 = vdwg.mxu0
        %2365 = vmatprep.subr.bf16.mxu0 0
        %2366 = vmatpush1.bf16.xpose.msra.mxu0 %v1170
        %2367 = vmatprep.subr.bf16.mxu0 0
        %2368 = vmatpush1.bf16.xpose.msra.mxu0 0
        %2369 = vmatprep.subr.bf16.mxu0 0
        %2370 = vmatpush1.bf16.xpose.msra.mxu0 0
        %2371 = vmatprep.subr.bf16.mxu0 0
        %2372 = vmatpush1.bf16.xpose.msra.mxu0 0
        %2373 = vmatprep.subr.bf16.mxu0 0
        %2374 = vmatpush1.bf16.xpose.msra.mxu0 0
        %2375 = vmatprep.subr.bf16.mxu0 0
        %2376 = vmatpush1.bf16.xpose.msra.mxu0 0
        %2377 = vmatprep.subr.bf16.mxu0 0
        %2378 = vmatpush1.bf16.xpose.msra.mxu0 0
        %2379 = vmatprep.subr.bf16.mxu0 0
        %2380 = vmatpush1.bf16.xpose.msra.mxu0 0
        %2381 = vmatprep.subr.bf16.mxu0 0
        %2382 = vmatpush1.bf16.xpose.msra.mxu0 0
        %2383 = vmatprep.subr.bf16.mxu0 0
        %2384 = vmatpush1.bf16.xpose.msra.mxu0 0
        %2385 = vmatprep.subr.bf16.mxu0 0
        %2386 = vmatpush1.bf16.xpose.msra.mxu0 0
        %2387 = vmatprep.subr.bf16.mxu0 0
        %2388 = vmatpush1.bf16.xpose.msra.mxu0 0
        %2389 = vmatprep.subr.bf16.mxu0 0
        %2390 = vmatpush1.bf16.xpose.msra.mxu0 0
        %2391 = vmatprep.subr.bf16.mxu0 0
        %2392 = vmatpush1.bf16.xpose.msra.mxu0 0
        %2393 = vmatprep.subr.bf16.mxu0 0
        %2394 = vmatpush1.bf16.xpose.msra.mxu0 0
        %2395 = vmatprep.subr.bf16.mxu0 0
        %2396 = vmatpush1.bf16.xpose.msra.mxu0 0
        %2397 = vmatprep.mubr.bf16.mxu0 0
        %2398 = vmatmul.mubr.bf16.gmra.mrb[0].mxu0 %v2283
        %v2399 = vpop.f32.mrb[0].mxu0
        %v2400 = vadd.f32 %v1071, %v2399
        %v2401 = vpop.f32.mrb[0].mxu0
        %v2402 = vpop.f32.mrb[0].mxu0
        %v2403 = vpop.f32.mrb[0].mxu0
        %2404 = vdwg.mxu0
        %2405 = vmatprep.subr.bf16.mxu0 0
        %2406 = vmatpush1.bf16.xpose.msra.mxu0 %v1213
        %2407 = vmatprep.subr.bf16.mxu0 0
        %2408 = vmatpush1.bf16.xpose.msra.mxu0 0
        %2409 = vmatprep.subr.bf16.mxu0 0
        %2410 = vmatpush1.bf16.xpose.msra.mxu0 0
        %2411 = vmatprep.subr.bf16.mxu0 0
        %2412 = vmatpush1.bf16.xpose.msra.mxu0 0
        %2413 = vmatprep.subr.bf16.mxu0 0
        %2414 = vmatpush1.bf16.xpose.msra.mxu0 0
        %2415 = vmatprep.subr.bf16.mxu0 0
        %2416 = vmatpush1.bf16.xpose.msra.mxu0 0
        %2417 = vmatprep.subr.bf16.mxu0 0
        %2418 = vmatpush1.bf16.xpose.msra.mxu0 0
        %2419 = vmatprep.subr.bf16.mxu0 0
        %2420 = vmatpush1.bf16.xpose.msra.mxu0 0
        %2421 = vmatprep.subr.bf16.mxu0 0
        %2422 = vmatpush1.bf16.xpose.msra.mxu0 0
        %2423 = vmatprep.subr.bf16.mxu0 0
        %2424 = vmatpush1.bf16.xpose.msra.mxu0 0
        %2425 = vmatprep.subr.bf16.mxu0 0
        %2426 = vmatpush1.bf16.xpose.msra.mxu0 0
        %2427 = vmatprep.subr.bf16.mxu0 0
        %2428 = vmatpush1.bf16.xpose.msra.mxu0 0
        %2429 = vmatprep.subr.bf16.mxu0 0
        %2430 = vmatpush1.bf16.xpose.msra.mxu0 0
        %2431 = vmatprep.subr.bf16.mxu0 0
        %2432 = vmatpush1.bf16.xpose.msra.mxu0 0
        %2433 = vmatprep.subr.bf16.mxu0 0
        %2434 = vmatpush1.bf16.xpose.msra.mxu0 0
        %2435 = vmatprep.subr.bf16.mxu0 0
        %2436 = vmatpush1.bf16.xpose.msra.mxu0 0
        %2437 = vmatprep.mubr.bf16.mxu0 0
        %2438 = vmatmul.mubr.bf16.gmra.mrb[0].mxu0 %v2283
        %v2439 = vpop.f32.mrb[0].mxu0
        %v2440 = vadd.f32 %v1075, %v2439
        %v2441 = vpop.f32.mrb[0].mxu0
        %v2442 = vpop.f32.mrb[0].mxu0
        %v2443 = vpop.f32.mrb[0].mxu0
        %2444 = vdwg.mxu0
        %2445 = vmatprep.subr.bf16.mxu0 0
        %2446 = vmatpush1.bf16.xpose.msra.mxu0 %v1280
        %2447 = vmatprep.subr.bf16.mxu0 0
        %2448 = vmatpush1.bf16.xpose.msra.mxu0 0
        %2449 = vmatprep.subr.bf16.mxu0 0
        %2450 = vmatpush1.bf16.xpose.msra.mxu0 0
        %2451 = vmatprep.subr.bf16.mxu0 0
        %2452 = vmatpush1.bf16.xpose.msra.mxu0 0
        %2453 = vmatprep.subr.bf16.mxu0 0
        %2454 = vmatpush1.bf16.xpose.msra.mxu0 0
        %2455 = vmatprep.subr.bf16.mxu0 0
        %2456 = vmatpush1.bf16.xpose.msra.mxu0 0
        %2457 = vmatprep.subr.bf16.mxu0 0
        %2458 = vmatpush1.bf16.xpose.msra.mxu0 0
        %2459 = vmatprep.subr.bf16.mxu0 0
        %2460 = vmatpush1.bf16.xpose.msra.mxu0 0
        %2461 = vmatprep.subr.bf16.mxu0 0
        %2462 = vmatpush1.bf16.xpose.msra.mxu0 0
        %2463 = vmatprep.subr.bf16.mxu0 0
        %2464 = vmatpush1.bf16.xpose.msra.mxu0 0
        %2465 = vmatprep.subr.bf16.mxu0 0
        %2466 = vmatpush1.bf16.xpose.msra.mxu0 0
        %2467 = vmatprep.subr.bf16.mxu0 0
        %2468 = vmatpush1.bf16.xpose.msra.mxu0 0
        %2469 = vmatprep.subr.bf16.mxu0 0
        %2470 = vmatpush1.bf16.xpose.msra.mxu0 0
        %2471 = vmatprep.subr.bf16.mxu0 0
        %2472 = vmatpush1.bf16.xpose.msra.mxu0 0
        %2473 = vmatprep.subr.bf16.mxu0 0
        %2474 = vmatpush1.bf16.xpose.msra.mxu0 0
        %2475 = vmatprep.subr.bf16.mxu0 0
        %2476 = vmatpush1.bf16.xpose.msra.mxu0 0
        %2477 = vmatprep.mubr.bf16.mxu0 0
        %2478 = vmatmul.mubr.bf16.gmra.mrb[0].mxu0 %v2283
        %v2479 = vpop.f32.mrb[0].mxu0
        %v2480 = vadd.f32 %v1262, %v2479
        %v2481 = vpop.f32.mrb[0].mxu0
        %v2482 = vpop.f32.mrb[0].mxu0
        %v2483 = vpop.f32.mrb[0].mxu0
        %2484 = vdwg.mxu0
        %2485 = vmatprep.subr.bf16.mxu0 0
        %2486 = vmatpush1.bf16.xpose.msra.mxu0 %v1323
        %2487 = vmatprep.subr.bf16.mxu0 0
        %2488 = vmatpush1.bf16.xpose.msra.mxu0 0
        %2489 = vmatprep.subr.bf16.mxu0 0
        %2490 = vmatpush1.bf16.xpose.msra.mxu0 0
        %2491 = vmatprep.subr.bf16.mxu0 0
        %2492 = vmatpush1.bf16.xpose.msra.mxu0 0
        %2493 = vmatprep.subr.bf16.mxu0 0
        %2494 = vmatpush1.bf16.xpose.msra.mxu0 0
        %2495 = vmatprep.subr.bf16.mxu0 0
        %2496 = vmatpush1.bf16.xpose.msra.mxu0 0
        %2497 = vmatprep.subr.bf16.mxu0 0
        %2498 = vmatpush1.bf16.xpose.msra.mxu0 0
        %2499 = vmatprep.subr.bf16.mxu0 0
        %2500 = vmatpush1.bf16.xpose.msra.mxu0 0
        %2501 = vmatprep.subr.bf16.mxu0 0
        %2502 = vmatpush1.bf16.xpose.msra.mxu0 0
        %2503 = vmatprep.subr.bf16.mxu0 0
        %2504 = vmatpush1.bf16.xpose.msra.mxu0 0
        %2505 = vmatprep.subr.bf16.mxu0 0
        %2506 = vmatpush1.bf16.xpose.msra.mxu0 0
        %2507 = vmatprep.subr.bf16.mxu0 0
        %2508 = vmatpush1.bf16.xpose.msra.mxu0 0
        %2509 = vmatprep.subr.bf16.mxu0 0
        %2510 = vmatpush1.bf16.xpose.msra.mxu0 0
        %2511 = vmatprep.subr.bf16.mxu0 0
        %2512 = vmatpush1.bf16.xpose.msra.mxu0 0
        %2513 = vmatprep.subr.bf16.mxu0 0
        %2514 = vmatpush1.bf16.xpose.msra.mxu0 0
        %2515 = vmatprep.subr.bf16.mxu0 0
        %2516 = vmatpush1.bf16.xpose.msra.mxu0 0
        %2517 = vmatprep.mubr.bf16.mxu0 0
        %2518 = vmatmul.mubr.bf16.gmra.mrb[0].mxu0 %v2283
        %v2519 = vpop.f32.mrb[0].mxu0
        %v2520 = vadd.f32 %v1266, %v2519
        %v2521 = vpop.f32.mrb[0].mxu0
        %v2522 = vpop.f32.mrb[0].mxu0
        %v2523 = vpop.f32.mrb[0].mxu0
        %2524 = vdwg.mxu0
        %2525 = vmatprep.subr.bf16.mxu0 0
        %2526 = vmatpush1.bf16.xpose.msra.mxu0 %v1366
        %2527 = vmatprep.subr.bf16.mxu0 0
        %2528 = vmatpush1.bf16.xpose.msra.mxu0 0
        %2529 = vmatprep.subr.bf16.mxu0 0
        %2530 = vmatpush1.bf16.xpose.msra.mxu0 0
        %2531 = vmatprep.subr.bf16.mxu0 0
        %2532 = vmatpush1.bf16.xpose.msra.mxu0 0
        %2533 = vmatprep.subr.bf16.mxu0 0
        %2534 = vmatpush1.bf16.xpose.msra.mxu0 0
        %2535 = vmatprep.subr.bf16.mxu0 0
        %2536 = vmatpush1.bf16.xpose.msra.mxu0 0
        %2537 = vmatprep.subr.bf16.mxu0 0
        %2538 = vmatpush1.bf16.xpose.msra.mxu0 0
        %2539 = vmatprep.subr.bf16.mxu0 0
        %2540 = vmatpush1.bf16.xpose.msra.mxu0 0
        %2541 = vmatprep.subr.bf16.mxu0 0
        %2542 = vmatpush1.bf16.xpose.msra.mxu0 0
        %2543 = vmatprep.subr.bf16.mxu0 0
        %2544 = vmatpush1.bf16.xpose.msra.mxu0 0
        %2545 = vmatprep.subr.bf16.mxu0 0
        %2546 = vmatpush1.bf16.xpose.msra.mxu0 0
        %2547 = vmatprep.subr.bf16.mxu0 0
        %2548 = vmatpush1.bf16.xpose.msra.mxu0 0
        %2549 = vmatprep.subr.bf16.mxu0 0
        %2550 = vmatpush1.bf16.xpose.msra.mxu0 0
        %2551 = vmatprep.subr.bf16.mxu0 0
        %2552 = vmatpush1.bf16.xpose.msra.mxu0 0
        %2553 = vmatprep.subr.bf16.mxu0 0
        %2554 = vmatpush1.bf16.xpose.msra.mxu0 0
        %2555 = vmatprep.subr.bf16.mxu0 0
        %2556 = vmatpush1.bf16.xpose.msra.mxu0 0
        %2557 = vmatprep.mubr.bf16.mxu0 0
        %2558 = vmatmul.mubr.bf16.gmra.mrb[0].mxu0 %v2283
        %v2559 = vpop.f32.mrb[0].mxu0
        %v2560 = vadd.f32 %v1270, %v2559
        %v2561 = vpop.f32.mrb[0].mxu0
        %v2562 = vpop.f32.mrb[0].mxu0
        %v2563 = vpop.f32.mrb[0].mxu0
        %2564 = vdwg.mxu0
        %2565 = vmatprep.subr.bf16.mxu0 0
        %2566 = vmatpush1.bf16.xpose.msra.mxu0 %v1409
        %2567 = vmatprep.subr.bf16.mxu0 0
        %2568 = vmatpush1.bf16.xpose.msra.mxu0 0
        %2569 = vmatprep.subr.bf16.mxu0 0
        %2570 = vmatpush1.bf16.xpose.msra.mxu0 0
        %2571 = vmatprep.subr.bf16.mxu0 0
        %2572 = vmatpush1.bf16.xpose.msra.mxu0 0
        %2573 = vmatprep.subr.bf16.mxu0 0
        %2574 = vmatpush1.bf16.xpose.msra.mxu0 0
        %2575 = vmatprep.subr.bf16.mxu0 0
        %2576 = vmatpush1.bf16.xpose.msra.mxu0 0
        %2577 = vmatprep.subr.bf16.mxu0 0
        %2578 = vmatpush1.bf16.xpose.msra.mxu0 0
        %2579 = vmatprep.subr.bf16.mxu0 0
        %2580 = vmatpush1.bf16.xpose.msra.mxu0 0
        %2581 = vmatprep.subr.bf16.mxu0 0
        %2582 = vmatpush1.bf16.xpose.msra.mxu0 0
        %2583 = vmatprep.subr.bf16.mxu0 0
        %2584 = vmatpush1.bf16.xpose.msra.mxu0 0
        %2585 = vmatprep.subr.bf16.mxu0 0
        %2586 = vmatpush1.bf16.xpose.msra.mxu0 0
        %2587 = vmatprep.subr.bf16.mxu0 0
        %2588 = vmatpush1.bf16.xpose.msra.mxu0 0
        %2589 = vmatprep.subr.bf16.mxu0 0
        %2590 = vmatpush1.bf16.xpose.msra.mxu0 0
        %2591 = vmatprep.subr.bf16.mxu0 0
        %2592 = vmatpush1.bf16.xpose.msra.mxu0 0
        %2593 = vmatprep.subr.bf16.mxu0 0
        %2594 = vmatpush1.bf16.xpose.msra.mxu0 0
        %2595 = vmatprep.subr.bf16.mxu0 0
        %2596 = vmatpush1.bf16.xpose.msra.mxu0 0
        %2597 = vmatprep.mubr.bf16.mxu0 0
        %2598 = vmatmul.mubr.bf16.gmra.mrb[0].mxu0 %v2283
        %v2599 = vpop.f32.mrb[0].mxu0
        %v2600 = vadd.f32 %v1274, %v2599
        %v2601 = vpop.f32.mrb[0].mxu0
        %v2602 = vpop.f32.mrb[0].mxu0
        %v2603 = vpop.f32.mrb[0].mxu0
        %2604 = vdwg.mxu0
        %2605 = vmatprep.subr.bf16.mxu0 0
        %2606 = vmatpush1.bf16.xpose.msra.mxu0 %v1476
        %2607 = vmatprep.subr.bf16.mxu0 0
        %2608 = vmatpush1.bf16.xpose.msra.mxu0 0
        %2609 = vmatprep.subr.bf16.mxu0 0
        %2610 = vmatpush1.bf16.xpose.msra.mxu0 0
        %2611 = vmatprep.subr.bf16.mxu0 0
        %2612 = vmatpush1.bf16.xpose.msra.mxu0 0
        %2613 = vmatprep.subr.bf16.mxu0 0
        %2614 = vmatpush1.bf16.xpose.msra.mxu0 0
        %2615 = vmatprep.subr.bf16.mxu0 0
        %2616 = vmatpush1.bf16.xpose.msra.mxu0 0
        %2617 = vmatprep.subr.bf16.mxu0 0
        %2618 = vmatpush1.bf16.xpose.msra.mxu0 0
        %2619 = vmatprep.subr.bf16.mxu0 0
        %2620 = vmatpush1.bf16.xpose.msra.mxu0 0
        %2621 = vmatprep.subr.bf16.mxu0 0
        %2622 = vmatpush1.bf16.xpose.msra.mxu0 0
        %2623 = vmatprep.subr.bf16.mxu0 0
        %2624 = vmatpush1.bf16.xpose.msra.mxu0 0
        %2625 = vmatprep.subr.bf16.mxu0 0
        %2626 = vmatpush1.bf16.xpose.msra.mxu0 0
        %2627 = vmatprep.subr.bf16.mxu0 0
        %2628 = vmatpush1.bf16.xpose.msra.mxu0 0
        %2629 = vmatprep.subr.bf16.mxu0 0
        %2630 = vmatpush1.bf16.xpose.msra.mxu0 0
        %2631 = vmatprep.subr.bf16.mxu0 0
        %2632 = vmatpush1.bf16.xpose.msra.mxu0 0
        %2633 = vmatprep.subr.bf16.mxu0 0
        %2634 = vmatpush1.bf16.xpose.msra.mxu0 0
        %2635 = vmatprep.subr.bf16.mxu0 0
        %2636 = vmatpush1.bf16.xpose.msra.mxu0 0
        %2637 = vmatprep.mubr.bf16.mxu0 0
        %2638 = vmatmul.mubr.bf16.gmra.mrb[0].mxu0 %v2283
        %v2639 = vpop.f32.mrb[0].mxu0
        %v2640 = vadd.f32 %v1458, %v2639
        %v2641 = vpop.f32.mrb[0].mxu0
        %v2642 = vpop.f32.mrb[0].mxu0
        %v2643 = vpop.f32.mrb[0].mxu0
        %2644 = vdwg.mxu0
        %2645 = vmatprep.subr.bf16.mxu0 0
        %2646 = vmatpush1.bf16.xpose.msra.mxu0 %v1519
        %2647 = vmatprep.subr.bf16.mxu0 0
        %2648 = vmatpush1.bf16.xpose.msra.mxu0 0
        %2649 = vmatprep.subr.bf16.mxu0 0
        %2650 = vmatpush1.bf16.xpose.msra.mxu0 0
        %2651 = vmatprep.subr.bf16.mxu0 0
        %2652 = vmatpush1.bf16.xpose.msra.mxu0 0
        %2653 = vmatprep.subr.bf16.mxu0 0
        %2654 = vmatpush1.bf16.xpose.msra.mxu0 0
        %2655 = vmatprep.subr.bf16.mxu0 0
        %2656 = vmatpush1.bf16.xpose.msra.mxu0 0
        %2657 = vmatprep.subr.bf16.mxu0 0
        %2658 = vmatpush1.bf16.xpose.msra.mxu0 0
        %2659 = vmatprep.subr.bf16.mxu0 0
        %2660 = vmatpush1.bf16.xpose.msra.mxu0 0
        %2661 = vmatprep.subr.bf16.mxu0 0
        %2662 = vmatpush1.bf16.xpose.msra.mxu0 0
        %2663 = vmatprep.subr.bf16.mxu0 0
        %2664 = vmatpush1.bf16.xpose.msra.mxu0 0
        %2665 = vmatprep.subr.bf16.mxu0 0
        %2666 = vmatpush1.bf16.xpose.msra.mxu0 0
        %2667 = vmatprep.subr.bf16.mxu0 0
        %2668 = vmatpush1.bf16.xpose.msra.mxu0 0
        %2669 = vmatprep.subr.bf16.mxu0 0
        %2670 = vmatpush1.bf16.xpose.msra.mxu0 0
        %2671 = vmatprep.subr.bf16.mxu0 0
        %2672 = vmatpush1.bf16.xpose.msra.mxu0 0
        %2673 = vmatprep.subr.bf16.mxu0 0
        %2674 = vmatpush1.bf16.xpose.msra.mxu0 0
        %2675 = vmatprep.subr.bf16.mxu0 0
        %2676 = vmatpush1.bf16.xpose.msra.mxu0 0
        %2677 = vmatprep.mubr.bf16.mxu0 0
        %2678 = vmatmul.mubr.bf16.gmra.mrb[0].mxu0 %v2283
        %v2679 = vpop.f32.mrb[0].mxu0
        %v2680 = vadd.f32 %v1462, %v2679
        %v2681 = vpop.f32.mrb[0].mxu0
        %v2682 = vpop.f32.mrb[0].mxu0
        %v2683 = vpop.f32.mrb[0].mxu0
        %2684 = vdwg.mxu0
        %2685 = vmatprep.subr.bf16.mxu0 0
        %2686 = vmatpush1.bf16.xpose.msra.mxu0 %v1562
        %2687 = vmatprep.subr.bf16.mxu0 0
        %2688 = vmatpush1.bf16.xpose.msra.mxu0 0
        %2689 = vmatprep.subr.bf16.mxu0 0
        %2690 = vmatpush1.bf16.xpose.msra.mxu0 0
        %2691 = vmatprep.subr.bf16.mxu0 0
        %2692 = vmatpush1.bf16.xpose.msra.mxu0 0
        %2693 = vmatprep.subr.bf16.mxu0 0
        %2694 = vmatpush1.bf16.xpose.msra.mxu0 0
        %2695 = vmatprep.subr.bf16.mxu0 0
        %2696 = vmatpush1.bf16.xpose.msra.mxu0 0
        %2697 = vmatprep.subr.bf16.mxu0 0
        %2698 = vmatpush1.bf16.xpose.msra.mxu0 0
        %2699 = vmatprep.subr.bf16.mxu0 0
        %2700 = vmatpush1.bf16.xpose.msra.mxu0 0
        %2701 = vmatprep.subr.bf16.mxu0 0
        %2702 = vmatpush1.bf16.xpose.msra.mxu0 0
        %2703 = vmatprep.subr.bf16.mxu0 0
        %2704 = vmatpush1.bf16.xpose.msra.mxu0 0
        %2705 = vmatprep.subr.bf16.mxu0 0
        %2706 = vmatpush1.bf16.xpose.msra.mxu0 0
        %2707 = vmatprep.subr.bf16.mxu0 0
        %2708 = vmatpush1.bf16.xpose.msra.mxu0 0
        %2709 = vmatprep.subr.bf16.mxu0 0
        %2710 = vmatpush1.bf16.xpose.msra.mxu0 0
        %2711 = vmatprep.subr.bf16.mxu0 0
        %2712 = vmatpush1.bf16.xpose.msra.mxu0 0
        %2713 = vmatprep.subr.bf16.mxu0 0
        %2714 = vmatpush1.bf16.xpose.msra.mxu0 0
        %2715 = vmatprep.subr.bf16.mxu0 0
        %2716 = vmatpush1.bf16.xpose.msra.mxu0 0
        %2717 = vmatprep.mubr.bf16.mxu0 0
        %2718 = vmatmul.mubr.bf16.gmra.mrb[0].mxu0 %v2283
        %v2719 = vpop.f32.mrb[0].mxu0
        %v2720 = vadd.f32 %v1466, %v2719
        %v2721 = vpop.f32.mrb[0].mxu0
        %v2722 = vpop.f32.mrb[0].mxu0
        %v2723 = vpop.f32.mrb[0].mxu0
        %2724 = vdwg.mxu0
        %2725 = vmatprep.subr.bf16.mxu0 0
        %2726 = vmatpush1.bf16.xpose.msra.mxu0 %v1605
        %2727 = vmatprep.subr.bf16.mxu0 0
        %2728 = vmatpush1.bf16.xpose.msra.mxu0 0
        %2729 = vmatprep.subr.bf16.mxu0 0
        %2730 = vmatpush1.bf16.xpose.msra.mxu0 0
        %2731 = vmatprep.subr.bf16.mxu0 0
        %2732 = vmatpush1.bf16.xpose.msra.mxu0 0
        %2733 = vmatprep.subr.bf16.mxu0 0
        %2734 = vmatpush1.bf16.xpose.msra.mxu0 0
        %2735 = vmatprep.subr.bf16.mxu0 0
        %2736 = vmatpush1.bf16.xpose.msra.mxu0 0
        %2737 = vmatprep.subr.bf16.mxu0 0
        %2738 = vmatpush1.bf16.xpose.msra.mxu0 0
        %2739 = vmatprep.subr.bf16.mxu0 0
        %2740 = vmatpush1.bf16.xpose.msra.mxu0 0
        %2741 = vmatprep.subr.bf16.mxu0 0
        %2742 = vmatpush1.bf16.xpose.msra.mxu0 0
        %2743 = vmatprep.subr.bf16.mxu0 0
        %2744 = vmatpush1.bf16.xpose.msra.mxu0 0
        %2745 = vmatprep.subr.bf16.mxu0 0
        %2746 = vmatpush1.bf16.xpose.msra.mxu0 0
        %2747 = vmatprep.subr.bf16.mxu0 0
        %2748 = vmatpush1.bf16.xpose.msra.mxu0 0
        %2749 = vmatprep.subr.bf16.mxu0 0
        %2750 = vmatpush1.bf16.xpose.msra.mxu0 0
        %2751 = vmatprep.subr.bf16.mxu0 0
        %2752 = vmatpush1.bf16.xpose.msra.mxu0 0
        %2753 = vmatprep.subr.bf16.mxu0 0
        %2754 = vmatpush1.bf16.xpose.msra.mxu0 0
        %2755 = vmatprep.subr.bf16.mxu0 0
        %2756 = vmatpush1.bf16.xpose.msra.mxu0 0
        %2757 = vmatprep.mubr.bf16.mxu0 0
        %2758 = vmatmul.mubr.bf16.gmra.mrb[0].mxu0 %v2283
        %v2759 = vpop.f32.mrb[0].mxu0
        %v2760 = vadd.f32 %v1470, %v2759
        %v2761 = vpop.f32.mrb[0].mxu0
        %v2762 = vpop.f32.mrb[0].mxu0
        %v2763 = vpop.f32.mrb[0].mxu0
        %2764 = vdwg.mxu0
        %v2765 = vmul.f32 %v2320, 0.35355338
        %v2766 = vmul.f32 %v2360, 0.35355338
        %v2767 = vmul.f32 %v2400, 0.35355338
        %v2768 = vmul.f32 %v2440, 0.35355338
        %v2769 = vpack.c.bf16 %v2765, %v2765
        %v2770 = vpack.c.bf16 %v2766, %v2766
        %v2771 = vpack.c.bf16 %v2767, %v2767
        %v2772 = vpack.c.bf16 %v2768, %v2768
        %v2773 = vpack.c.bf16 %v2480, %v2480
        %v2774 = vpack.c.bf16 %v2520, %v2520
        %v2775 = vpack.c.bf16 %v2560, %v2560
        %v2776 = vpack.c.bf16 %v2600, %v2600
        %v2778 = vsel %vm1659, %v2769, 0
        %v2781 = vsel %vm1659, %v2773, 0
        %2783 = vmatprep.subr.bf16.mxu0 0
        %2784 = vmatpush1.bf16.xpose.msra.mxu0 %v2781
        %2785 = vmatprep.subr.bf16.mxu0 0
        %2786 = vmatpush1.bf16.xpose.msra.mxu0 0
        %2787 = vmatprep.subr.bf16.mxu0 0
        %2788 = vmatpush1.bf16.xpose.msra.mxu0 0
        %2789 = vmatprep.subr.bf16.mxu0 0
        %2790 = vmatpush1.bf16.xpose.msra.mxu0 0
        %2791 = vmatprep.subr.bf16.mxu0 0
        %2792 = vmatpush1.bf16.xpose.msra.mxu0 0
        %2793 = vmatprep.subr.bf16.mxu0 0
        %2794 = vmatpush1.bf16.xpose.msra.mxu0 0
        %2795 = vmatprep.subr.bf16.mxu0 0
        %2796 = vmatpush1.bf16.xpose.msra.mxu0 0
        %2797 = vmatprep.subr.bf16.mxu0 0
        %2798 = vmatpush1.bf16.xpose.msra.mxu0 0
        %2799 = vmatprep.subr.bf16.mxu0 0
        %2800 = vmatpush1.bf16.xpose.msra.mxu0 0
        %2801 = vmatprep.subr.bf16.mxu0 0
        %2802 = vmatpush1.bf16.xpose.msra.mxu0 0
        %2803 = vmatprep.subr.bf16.mxu0 0
        %2804 = vmatpush1.bf16.xpose.msra.mxu0 0
        %2805 = vmatprep.subr.bf16.mxu0 0
        %2806 = vmatpush1.bf16.xpose.msra.mxu0 0
        %2807 = vmatprep.subr.bf16.mxu0 0
        %2808 = vmatpush1.bf16.xpose.msra.mxu0 0
        %2809 = vmatprep.subr.bf16.mxu0 0
        %2810 = vmatpush1.bf16.xpose.msra.mxu0 0
        %2811 = vmatprep.subr.bf16.mxu0 0
        %2812 = vmatpush1.bf16.xpose.msra.mxu0 0
        %2813 = vmatprep.subr.bf16.mxu0 0
        %2814 = vmatpush1.bf16.xpose.msra.mxu0 0
        %2815 = vmatprep.mubr.bf16.mxu0 0
        %2816 = vmatmul.mubr.bf16.gmra.mrb[0].mxu0 %v2778
        %v2817 = vpop.f32.mrb[0].mxu0
        %v2818 = vadd.f32 0.0, %v2817
        %v2819 = vpop.f32.mrb[0].mxu0
        %v2820 = vpop.f32.mrb[0].mxu0
        %v2821 = vpop.f32.mrb[0].mxu0
        %2822 = vdwg.mxu0
        %v2824 = vsel %vm1659, %v2770, 0
        %v2827 = vsel %vm1659, %v2774, 0
        %2829 = vmatprep.subr.bf16.mxu0 0
        %2830 = vmatpush1.bf16.xpose.msra.mxu0 %v2827
        %2831 = vmatprep.subr.bf16.mxu0 0
        %2832 = vmatpush1.bf16.xpose.msra.mxu0 0
        %2833 = vmatprep.subr.bf16.mxu0 0
        %2834 = vmatpush1.bf16.xpose.msra.mxu0 0
        %2835 = vmatprep.subr.bf16.mxu0 0
        %2836 = vmatpush1.bf16.xpose.msra.mxu0 0
        %2837 = vmatprep.subr.bf16.mxu0 0
        %2838 = vmatpush1.bf16.xpose.msra.mxu0 0
        %2839 = vmatprep.subr.bf16.mxu0 0
        %2840 = vmatpush1.bf16.xpose.msra.mxu0 0
        %2841 = vmatprep.subr.bf16.mxu0 0
        %2842 = vmatpush1.bf16.xpose.msra.mxu0 0
        %2843 = vmatprep.subr.bf16.mxu0 0
        %2844 = vmatpush1.bf16.xpose.msra.mxu0 0
        %2845 = vmatprep.subr.bf16.mxu0 0
        %2846 = vmatpush1.bf16.xpose.msra.mxu0 0
        %2847 = vmatprep.subr.bf16.mxu0 0
        %2848 = vmatpush1.bf16.xpose.msra.mxu0 0
        %2849 = vmatprep.subr.bf16.mxu0 0
        %2850 = vmatpush1.bf16.xpose.msra.mxu0 0
        %2851 = vmatprep.subr.bf16.mxu0 0
        %2852 = vmatpush1.bf16.xpose.msra.mxu0 0
        %2853 = vmatprep.subr.bf16.mxu0 0
        %2854 = vmatpush1.bf16.xpose.msra.mxu0 0
        %2855 = vmatprep.subr.bf16.mxu0 0
        %2856 = vmatpush1.bf16.xpose.msra.mxu0 0
        %2857 = vmatprep.subr.bf16.mxu0 0
        %2858 = vmatpush1.bf16.xpose.msra.mxu0 0
        %2859 = vmatprep.subr.bf16.mxu0 0
        %2860 = vmatpush1.bf16.xpose.msra.mxu0 0
        %2861 = vmatprep.mubr.bf16.mxu0 0
        %2862 = vmatmul.mubr.bf16.gmra.mrb[0].mxu0 %v2824
        %v2863 = vpop.f32.mrb[0].mxu0
        %v2864 = vadd.f32 0.0, %v2863
        %v2865 = vpop.f32.mrb[0].mxu0
        %v2866 = vpop.f32.mrb[0].mxu0
        %v2867 = vpop.f32.mrb[0].mxu0
        %2868 = vdwg.mxu0
        %v2870 = vsel %vm1659, %v2771, 0
        %v2873 = vsel %vm1659, %v2775, 0
        %2875 = vmatprep.subr.bf16.mxu0 0
        %2876 = vmatpush1.bf16.xpose.msra.mxu0 %v2873
        %2877 = vmatprep.subr.bf16.mxu0 0
        %2878 = vmatpush1.bf16.xpose.msra.mxu0 0
        %2879 = vmatprep.subr.bf16.mxu0 0
        %2880 = vmatpush1.bf16.xpose.msra.mxu0 0
        %2881 = vmatprep.subr.bf16.mxu0 0
        %2882 = vmatpush1.bf16.xpose.msra.mxu0 0
        %2883 = vmatprep.subr.bf16.mxu0 0
        %2884 = vmatpush1.bf16.xpose.msra.mxu0 0
        %2885 = vmatprep.subr.bf16.mxu0 0
        %2886 = vmatpush1.bf16.xpose.msra.mxu0 0
        %2887 = vmatprep.subr.bf16.mxu0 0
        %2888 = vmatpush1.bf16.xpose.msra.mxu0 0
        %2889 = vmatprep.subr.bf16.mxu0 0
        %2890 = vmatpush1.bf16.xpose.msra.mxu0 0
        %2891 = vmatprep.subr.bf16.mxu0 0
        %2892 = vmatpush1.bf16.xpose.msra.mxu0 0
        %2893 = vmatprep.subr.bf16.mxu0 0
        %2894 = vmatpush1.bf16.xpose.msra.mxu0 0
        %2895 = vmatprep.subr.bf16.mxu0 0
        %2896 = vmatpush1.bf16.xpose.msra.mxu0 0
        %2897 = vmatprep.subr.bf16.mxu0 0
        %2898 = vmatpush1.bf16.xpose.msra.mxu0 0
        %2899 = vmatprep.subr.bf16.mxu0 0
        %2900 = vmatpush1.bf16.xpose.msra.mxu0 0
        %2901 = vmatprep.subr.bf16.mxu0 0
        %2902 = vmatpush1.bf16.xpose.msra.mxu0 0
        %2903 = vmatprep.subr.bf16.mxu0 0
        %2904 = vmatpush1.bf16.xpose.msra.mxu0 0
        %2905 = vmatprep.subr.bf16.mxu0 0
        %2906 = vmatpush1.bf16.xpose.msra.mxu0 0
        %2907 = vmatprep.mubr.bf16.mxu0 0
        %2908 = vmatmul.mubr.bf16.gmra.mrb[0].mxu0 %v2870
        %v2909 = vpop.f32.mrb[0].mxu0
        %v2910 = vadd.f32 0.0, %v2909
        %v2911 = vpop.f32.mrb[0].mxu0
        %v2912 = vpop.f32.mrb[0].mxu0
        %v2913 = vpop.f32.mrb[0].mxu0
        %2914 = vdwg.mxu0
        %v2916 = vsel %vm1659, %v2772, 0
        %v2919 = vsel %vm1659, %v2776, 0
        %2921 = vmatprep.subr.bf16.mxu0 0
        %2922 = vmatpush1.bf16.xpose.msra.mxu0 %v2919
        %2923 = vmatprep.subr.bf16.mxu0 0
        %2924 = vmatpush1.bf16.xpose.msra.mxu0 0
        %2925 = vmatprep.subr.bf16.mxu0 0
        %2926 = vmatpush1.bf16.xpose.msra.mxu0 0
        %2927 = vmatprep.subr.bf16.mxu0 0
        %2928 = vmatpush1.bf16.xpose.msra.mxu0 0
        %2929 = vmatprep.subr.bf16.mxu0 0
        %2930 = vmatpush1.bf16.xpose.msra.mxu0 0
        %2931 = vmatprep.subr.bf16.mxu0 0
        %2932 = vmatpush1.bf16.xpose.msra.mxu0 0
        %2933 = vmatprep.subr.bf16.mxu0 0
        %2934 = vmatpush1.bf16.xpose.msra.mxu0 0
        %2935 = vmatprep.subr.bf16.mxu0 0
        %2936 = vmatpush1.bf16.xpose.msra.mxu0 0
        %2937 = vmatprep.subr.bf16.mxu0 0
        %2938 = vmatpush1.bf16.xpose.msra.mxu0 0
        %2939 = vmatprep.subr.bf16.mxu0 0
        %2940 = vmatpush1.bf16.xpose.msra.mxu0 0
        %2941 = vmatprep.subr.bf16.mxu0 0
        %2942 = vmatpush1.bf16.xpose.msra.mxu0 0
        %2943 = vmatprep.subr.bf16.mxu0 0
        %2944 = vmatpush1.bf16.xpose.msra.mxu0 0
        %2945 = vmatprep.subr.bf16.mxu0 0
        %2946 = vmatpush1.bf16.xpose.msra.mxu0 0
        %2947 = vmatprep.subr.bf16.mxu0 0
        %2948 = vmatpush1.bf16.xpose.msra.mxu0 0
        %2949 = vmatprep.subr.bf16.mxu0 0
        %2950 = vmatpush1.bf16.xpose.msra.mxu0 0
        %2951 = vmatprep.subr.bf16.mxu0 0
        %2952 = vmatpush1.bf16.xpose.msra.mxu0 0
        %2953 = vmatprep.mubr.bf16.mxu0 0
        %2954 = vmatmul.mubr.bf16.gmra.mrb[0].mxu0 %v2916
        %v2955 = vpop.f32.mrb[0].mxu0
        %v2956 = vadd.f32 0.0, %v2955
        %v2957 = vpop.f32.mrb[0].mxu0
        %v2958 = vpop.f32.mrb[0].mxu0
        %v2959 = vpop.f32.mrb[0].mxu0
        %2960 = vdwg.mxu0
        %v2961 = vsel %vm1055, %v2818, -1e+09
        %v2962 = vsel %vm1055, %v2864, -1e+09
        %v2963 = vsel %vm1055, %v2910, -1e+09
        %v2964 = vsel %vm1055, %v2956, -1e+09
        %v2965 = vsel %vm1659, %v2961, -inf
        %2966 = vmax.xlane.f32.xlu0 %v2965
        %v2967 = vpop.xlane.xlu0 %2966
        %v2968 = vsel %vm1659, %v2962, -inf
        %2969 = vmax.xlane.f32.xlu0 %v2968
        %v2970 = vpop.xlane.xlu0 %2969
        %v2971 = vsel %vm1659, %v2963, -inf
        %2972 = vmax.xlane.f32.xlu0 %v2971
        %v2973 = vpop.xlane.xlu0 %2972
        %v2974 = vsel %vm1659, %v2964, -inf
        %2975 = vmax.xlane.f32.xlu0 %v2974
        %v2976 = vpop.xlane.xlu0 %2975
        %v2977 = vsub.f32 %v2961, %v2967
        %v2978 = vsub.f32 %v2962, %v2970
        %v2979 = vsub.f32 %v2963, %v2973
        %v2980 = vsub.f32 %v2964, %v2976
        %v2981 = vmul.f32 %v2977, 1.442695
        %v2982 = vpow.pop %v2981
        %v2983 = vmul.f32 %v2978, 1.442695
        %v2984 = vpow.pop %v2983
        %v2985 = vmul.f32 %v2979, 1.442695
        %v2986 = vpow.pop %v2985
        %v2987 = vmul.f32 %v2980, 1.442695
        %v2988 = vpow.pop %v2987
        %v2989 = vsel %vm1659, %v2982, 0.0
        %2990 = vadd.xlane.f32.xlu0 %v2989
        %v2991 = vpop.xlane.xlu0 %2990
        %v2992 = vsel %vm1659, %v2984, 0.0
        %2993 = vadd.xlane.f32.xlu0 %v2992
        %v2994 = vpop.xlane.xlu0 %2993
        %v2995 = vsel %vm1659, %v2986, 0.0
        %2996 = vadd.xlane.f32.xlu0 %v2995
        %v2997 = vpop.xlane.xlu0 %2996
        %v2998 = vsel %vm1659, %v2988, 0.0
        %2999 = vadd.xlane.f32.xlu0 %v2998
        %v3000 = vpop.xlane.xlu0 %2999
        %v3001 = vrcp.pop %v2991
        %v3002 = vrcp.pop %v2994
        %v3003 = vrcp.pop %v2997
        %v3004 = vrcp.pop %v3000
        %v3005 = vmul.f32 %v2982, %v3001
        %v3006 = vmul.f32 %v2984, %v3002
        %v3007 = vmul.f32 %v2986, %v3003
        %v3008 = vmul.f32 %v2988, %v3004
        %v3009 = vpack.c.bf16 %v3005, %v3005
        %v3010 = vpack.c.bf16 %v3006, %v3006
        %v3011 = vpack.c.bf16 %v3007, %v3007
        %v3012 = vpack.c.bf16 %v3008, %v3008
        %v3013 = vpack.c.bf16 %v2640, %v2640
        %v3014 = vpack.c.bf16 %v2680, %v2680
        %v3015 = vpack.c.bf16 %v2720, %v2720
        %v3016 = vpack.c.bf16 %v2760, %v2760
        %v3018 = vsel %vm1659, %v3009, 0
        %v3021 = vsel %vm1903, %v3013, 0
        %3023 = vmatprep.subr.bf16.mxu0 0
        %3024 = vmatpush1.bf16.msra.mxu0 %v3021
        %3025 = vmatprep.subr.bf16.mxu0 0
        %3026 = vmatpush1.bf16.msra.mxu0 0
        %3027 = vmatprep.subr.bf16.mxu0 0
        %3028 = vmatpush1.bf16.msra.mxu0 0
        %3029 = vmatprep.subr.bf16.mxu0 0
        %3030 = vmatpush1.bf16.msra.mxu0 0
        %3031 = vmatprep.subr.bf16.mxu0 0
        %3032 = vmatpush1.bf16.msra.mxu0 0
        %3033 = vmatprep.subr.bf16.mxu0 0
        %3034 = vmatpush1.bf16.msra.mxu0 0
        %3035 = vmatprep.subr.bf16.mxu0 0
        %3036 = vmatpush1.bf16.msra.mxu0 0
        %3037 = vmatprep.subr.bf16.mxu0 0
        %3038 = vmatpush1.bf16.msra.mxu0 0
        %3039 = vmatprep.subr.bf16.mxu0 0
        %3040 = vmatpush1.bf16.msra.mxu0 0
        %3041 = vmatprep.subr.bf16.mxu0 0
        %3042 = vmatpush1.bf16.msra.mxu0 0
        %3043 = vmatprep.subr.bf16.mxu0 0
        %3044 = vmatpush1.bf16.msra.mxu0 0
        %3045 = vmatprep.subr.bf16.mxu0 0
        %3046 = vmatpush1.bf16.msra.mxu0 0
        %3047 = vmatprep.subr.bf16.mxu0 0
        %3048 = vmatpush1.bf16.msra.mxu0 0
        %3049 = vmatprep.subr.bf16.mxu0 0
        %3050 = vmatpush1.bf16.msra.mxu0 0
        %3051 = vmatprep.subr.bf16.mxu0 0
        %3052 = vmatpush1.bf16.msra.mxu0 0
        %3053 = vmatprep.subr.bf16.mxu0 0
        %3054 = vmatpush1.bf16.msra.mxu0 0
        %3055 = vmatprep.mubr.bf16.mxu0 0
        %3056 = vmatmul.mubr.bf16.gmra.mrb[0].mxu0 %v3018
        %v3057 = vpop.f32.mrb[0].mxu0
        %v3058 = vadd.f32 0.0, %v3057
        %v3059 = vpop.f32.mrb[0].mxu0
        %v3060 = vpop.f32.mrb[0].mxu0
        %v3061 = vpop.f32.mrb[0].mxu0
        %3062 = vdwg.mxu0
        %v3064 = vsel %vm1659, %v3010, 0
        %v3067 = vsel %vm1903, %v3014, 0
        %3069 = vmatprep.subr.bf16.mxu0 0
        %3070 = vmatpush1.bf16.msra.mxu0 %v3067
        %3071 = vmatprep.subr.bf16.mxu0 0
        %3072 = vmatpush1.bf16.msra.mxu0 0
        %3073 = vmatprep.subr.bf16.mxu0 0
        %3074 = vmatpush1.bf16.msra.mxu0 0
        %3075 = vmatprep.subr.bf16.mxu0 0
        %3076 = vmatpush1.bf16.msra.mxu0 0
        %3077 = vmatprep.subr.bf16.mxu0 0
        %3078 = vmatpush1.bf16.msra.mxu0 0
        %3079 = vmatprep.subr.bf16.mxu0 0
        %3080 = vmatpush1.bf16.msra.mxu0 0
        %3081 = vmatprep.subr.bf16.mxu0 0
        %3082 = vmatpush1.bf16.msra.mxu0 0
        %3083 = vmatprep.subr.bf16.mxu0 0
        %3084 = vmatpush1.bf16.msra.mxu0 0
        %3085 = vmatprep.subr.bf16.mxu0 0
        %3086 = vmatpush1.bf16.msra.mxu0 0
        %3087 = vmatprep.subr.bf16.mxu0 0
        %3088 = vmatpush1.bf16.msra.mxu0 0
        %3089 = vmatprep.subr.bf16.mxu0 0
        %3090 = vmatpush1.bf16.msra.mxu0 0
        %3091 = vmatprep.subr.bf16.mxu0 0
        %3092 = vmatpush1.bf16.msra.mxu0 0
        %3093 = vmatprep.subr.bf16.mxu0 0
        %3094 = vmatpush1.bf16.msra.mxu0 0
        %3095 = vmatprep.subr.bf16.mxu0 0
        %3096 = vmatpush1.bf16.msra.mxu0 0
        %3097 = vmatprep.subr.bf16.mxu0 0
        %3098 = vmatpush1.bf16.msra.mxu0 0
        %3099 = vmatprep.subr.bf16.mxu0 0
        %3100 = vmatpush1.bf16.msra.mxu0 0
        %3101 = vmatprep.mubr.bf16.mxu0 0
        %3102 = vmatmul.mubr.bf16.gmra.mrb[0].mxu0 %v3064
        %v3103 = vpop.f32.mrb[0].mxu0
        %v3104 = vadd.f32 0.0, %v3103
        %v3105 = vpop.f32.mrb[0].mxu0
        %v3106 = vpop.f32.mrb[0].mxu0
        %v3107 = vpop.f32.mrb[0].mxu0
        %3108 = vdwg.mxu0
        %v3110 = vsel %vm1659, %v3011, 0
        %v3113 = vsel %vm1903, %v3015, 0
        %3115 = vmatprep.subr.bf16.mxu0 0
        %3116 = vmatpush1.bf16.msra.mxu0 %v3113
        %3117 = vmatprep.subr.bf16.mxu0 0
        %3118 = vmatpush1.bf16.msra.mxu0 0
        %3119 = vmatprep.subr.bf16.mxu0 0
        %3120 = vmatpush1.bf16.msra.mxu0 0
        %3121 = vmatprep.subr.bf16.mxu0 0
        %3122 = vmatpush1.bf16.msra.mxu0 0
        %3123 = vmatprep.subr.bf16.mxu0 0
        %3124 = vmatpush1.bf16.msra.mxu0 0
        %3125 = vmatprep.subr.bf16.mxu0 0
        %3126 = vmatpush1.bf16.msra.mxu0 0
        %3127 = vmatprep.subr.bf16.mxu0 0
        %3128 = vmatpush1.bf16.msra.mxu0 0
        %3129 = vmatprep.subr.bf16.mxu0 0
        %3130 = vmatpush1.bf16.msra.mxu0 0
        %3131 = vmatprep.subr.bf16.mxu0 0
        %3132 = vmatpush1.bf16.msra.mxu0 0
        %3133 = vmatprep.subr.bf16.mxu0 0
        %3134 = vmatpush1.bf16.msra.mxu0 0
        %3135 = vmatprep.subr.bf16.mxu0 0
        %3136 = vmatpush1.bf16.msra.mxu0 0
        %3137 = vmatprep.subr.bf16.mxu0 0
        %3138 = vmatpush1.bf16.msra.mxu0 0
        %3139 = vmatprep.subr.bf16.mxu0 0
        %3140 = vmatpush1.bf16.msra.mxu0 0
        %3141 = vmatprep.subr.bf16.mxu0 0
        %3142 = vmatpush1.bf16.msra.mxu0 0
        %3143 = vmatprep.subr.bf16.mxu0 0
        %3144 = vmatpush1.bf16.msra.mxu0 0
        %3145 = vmatprep.subr.bf16.mxu0 0
        %3146 = vmatpush1.bf16.msra.mxu0 0
        %3147 = vmatprep.mubr.bf16.mxu0 0
        %3148 = vmatmul.mubr.bf16.gmra.mrb[0].mxu0 %v3110
        %v3149 = vpop.f32.mrb[0].mxu0
        %v3150 = vadd.f32 0.0, %v3149
        %v3151 = vpop.f32.mrb[0].mxu0
        %v3152 = vpop.f32.mrb[0].mxu0
        %v3153 = vpop.f32.mrb[0].mxu0
        %3154 = vdwg.mxu0
        %v3156 = vsel %vm1659, %v3012, 0
        %v3159 = vsel %vm1903, %v3016, 0
        %3161 = vmatprep.subr.bf16.mxu0 0
        %3162 = vmatpush1.bf16.msra.mxu0 %v3159
        %3163 = vmatprep.subr.bf16.mxu0 0
        %3164 = vmatpush1.bf16.msra.mxu0 0
        %3165 = vmatprep.subr.bf16.mxu0 0
        %3166 = vmatpush1.bf16.msra.mxu0 0
        %3167 = vmatprep.subr.bf16.mxu0 0
        %3168 = vmatpush1.bf16.msra.mxu0 0
        %3169 = vmatprep.subr.bf16.mxu0 0
        %3170 = vmatpush1.bf16.msra.mxu0 0
        %3171 = vmatprep.subr.bf16.mxu0 0
        %3172 = vmatpush1.bf16.msra.mxu0 0
        %3173 = vmatprep.subr.bf16.mxu0 0
        %3174 = vmatpush1.bf16.msra.mxu0 0
        %3175 = vmatprep.subr.bf16.mxu0 0
        %3176 = vmatpush1.bf16.msra.mxu0 0
        %3177 = vmatprep.subr.bf16.mxu0 0
        %3178 = vmatpush1.bf16.msra.mxu0 0
        %3179 = vmatprep.subr.bf16.mxu0 0
        %3180 = vmatpush1.bf16.msra.mxu0 0
        %3181 = vmatprep.subr.bf16.mxu0 0
        %3182 = vmatpush1.bf16.msra.mxu0 0
        %3183 = vmatprep.subr.bf16.mxu0 0
        %3184 = vmatpush1.bf16.msra.mxu0 0
        %3185 = vmatprep.subr.bf16.mxu0 0
        %3186 = vmatpush1.bf16.msra.mxu0 0
        %3187 = vmatprep.subr.bf16.mxu0 0
        %3188 = vmatpush1.bf16.msra.mxu0 0
        %3189 = vmatprep.subr.bf16.mxu0 0
        %3190 = vmatpush1.bf16.msra.mxu0 0
        %3191 = vmatprep.subr.bf16.mxu0 0
        %3192 = vmatpush1.bf16.msra.mxu0 0
        %3193 = vmatprep.mubr.bf16.mxu0 0
        %3194 = vmatmul.mubr.bf16.gmra.mrb[0].mxu0 %v3156
        %v3195 = vpop.f32.mrb[0].mxu0
        %v3196 = vadd.f32 0.0, %v3195
        %v3197 = vpop.f32.mrb[0].mxu0
        %v3198 = vpop.f32.mrb[0].mxu0
        %v3199 = vpop.f32.mrb[0].mxu0
        %3200 = vdwg.mxu0
        %v3201 = vpack.c.bf16 %v3058, %v3058
        %v3202 = vpack.c.bf16 %v3104, %v3104
        %v3203 = vpack.c.bf16 %v3150, %v3150
        %v3204 = vpack.c.bf16 %v3196, %v3196
        %v3206 = vsel %vm1659, %v3201, 0
        %3208 = vmatprep.subr.bf16.mxu0 0
        %3209 = vmatpush1.bf16.msra.mxu0 %v2093
        %3210 = vmatprep.subr.bf16.mxu0 0
        %3211 = vmatpush1.bf16.msra.mxu0 0
        %3212 = vmatprep.subr.bf16.mxu0 0
        %3213 = vmatpush1.bf16.msra.mxu0 0
        %3214 = vmatprep.subr.bf16.mxu0 0
        %3215 = vmatpush1.bf16.msra.mxu0 0
        %3216 = vmatprep.subr.bf16.mxu0 0
        %3217 = vmatpush1.bf16.msra.mxu0 0
        %3218 = vmatprep.subr.bf16.mxu0 0
        %3219 = vmatpush1.bf16.msra.mxu0 0
        %3220 = vmatprep.subr.bf16.mxu0 0
        %3221 = vmatpush1.bf16.msra.mxu0 0
        %3222 = vmatprep.subr.bf16.mxu0 0
        %3223 = vmatpush1.bf16.msra.mxu0 0
        %3224 = vmatprep.subr.bf16.mxu0 0
        %3225 = vmatpush1.bf16.msra.mxu0 0
        %3226 = vmatprep.subr.bf16.mxu0 0
        %3227 = vmatpush1.bf16.msra.mxu0 0
        %3228 = vmatprep.subr.bf16.mxu0 0
        %3229 = vmatpush1.bf16.msra.mxu0 0
        %3230 = vmatprep.subr.bf16.mxu0 0
        %3231 = vmatpush1.bf16.msra.mxu0 0
        %3232 = vmatprep.subr.bf16.mxu0 0
        %3233 = vmatpush1.bf16.msra.mxu0 0
        %3234 = vmatprep.subr.bf16.mxu0 0
        %3235 = vmatpush1.bf16.msra.mxu0 0
        %3236 = vmatprep.subr.bf16.mxu0 0
        %3237 = vmatpush1.bf16.msra.mxu0 0
        %3238 = vmatprep.subr.bf16.mxu0 0
        %3239 = vmatpush1.bf16.msra.mxu0 0
        %3240 = vmatprep.mubr.bf16.mxu0 0
        %3241 = vmatmul.mubr.bf16.gmra.mrb[0].mxu0 %v3206
        %v3242 = vpop.f32.mrb[0].mxu0
        %v3243 = vadd.f32 0.0, %v3242
        %v3244 = vpop.f32.mrb[0].mxu0
        %v3245 = vpop.f32.mrb[0].mxu0
        %v3246 = vpop.f32.mrb[0].mxu0
        %3247 = vdwg.mxu0
        %v3249 = vsel %vm1659, %v3202, 0
        %3251 = vmatprep.subr.bf16.mxu0 0
        %3252 = vmatpush1.bf16.msra.mxu0 %v2139
        %3253 = vmatprep.subr.bf16.mxu0 0
        %3254 = vmatpush1.bf16.msra.mxu0 0
        %3255 = vmatprep.subr.bf16.mxu0 0
        %3256 = vmatpush1.bf16.msra.mxu0 0
        %3257 = vmatprep.subr.bf16.mxu0 0
        %3258 = vmatpush1.bf16.msra.mxu0 0
        %3259 = vmatprep.subr.bf16.mxu0 0
        %3260 = vmatpush1.bf16.msra.mxu0 0
        %3261 = vmatprep.subr.bf16.mxu0 0
        %3262 = vmatpush1.bf16.msra.mxu0 0
        %3263 = vmatprep.subr.bf16.mxu0 0
        %3264 = vmatpush1.bf16.msra.mxu0 0
        %3265 = vmatprep.subr.bf16.mxu0 0
        %3266 = vmatpush1.bf16.msra.mxu0 0
        %3267 = vmatprep.subr.bf16.mxu0 0
        %3268 = vmatpush1.bf16.msra.mxu0 0
        %3269 = vmatprep.subr.bf16.mxu0 0
        %3270 = vmatpush1.bf16.msra.mxu0 0
        %3271 = vmatprep.subr.bf16.mxu0 0
        %3272 = vmatpush1.bf16.msra.mxu0 0
        %3273 = vmatprep.subr.bf16.mxu0 0
        %3274 = vmatpush1.bf16.msra.mxu0 0
        %3275 = vmatprep.subr.bf16.mxu0 0
        %3276 = vmatpush1.bf16.msra.mxu0 0
        %3277 = vmatprep.subr.bf16.mxu0 0
        %3278 = vmatpush1.bf16.msra.mxu0 0
        %3279 = vmatprep.subr.bf16.mxu0 0
        %3280 = vmatpush1.bf16.msra.mxu0 0
        %3281 = vmatprep.subr.bf16.mxu0 0
        %3282 = vmatpush1.bf16.msra.mxu0 0
        %3283 = vmatprep.mubr.bf16.mxu0 0
        %3284 = vmatmul.mubr.bf16.gmra.mrb[0].mxu0 %v3249
        %v3285 = vpop.f32.mrb[0].mxu0
        %v3286 = vadd.f32 0.0, %v3285
        %v3287 = vpop.f32.mrb[0].mxu0
        %v3288 = vpop.f32.mrb[0].mxu0
        %v3289 = vpop.f32.mrb[0].mxu0
        %3290 = vdwg.mxu0
        %v3292 = vsel %vm1659, %v3203, 0
        %3294 = vmatprep.subr.bf16.mxu0 0
        %3295 = vmatpush1.bf16.msra.mxu0 %v2185
        %3296 = vmatprep.subr.bf16.mxu0 0
        %3297 = vmatpush1.bf16.msra.mxu0 0
        %3298 = vmatprep.subr.bf16.mxu0 0
        %3299 = vmatpush1.bf16.msra.mxu0 0
        %3300 = vmatprep.subr.bf16.mxu0 0
        %3301 = vmatpush1.bf16.msra.mxu0 0
        %3302 = vmatprep.subr.bf16.mxu0 0
        %3303 = vmatpush1.bf16.msra.mxu0 0
        %3304 = vmatprep.subr.bf16.mxu0 0
        %3305 = vmatpush1.bf16.msra.mxu0 0
        %3306 = vmatprep.subr.bf16.mxu0 0
        %3307 = vmatpush1.bf16.msra.mxu0 0
        %3308 = vmatprep.subr.bf16.mxu0 0
        %3309 = vmatpush1.bf16.msra.mxu0 0
        %3310 = vmatprep.subr.bf16.mxu0 0
        %3311 = vmatpush1.bf16.msra.mxu0 0
        %3312 = vmatprep.subr.bf16.mxu0 0
        %3313 = vmatpush1.bf16.msra.mxu0 0
        %3314 = vmatprep.subr.bf16.mxu0 0
        %3315 = vmatpush1.bf16.msra.mxu0 0
        %3316 = vmatprep.subr.bf16.mxu0 0
        %3317 = vmatpush1.bf16.msra.mxu0 0
        %3318 = vmatprep.subr.bf16.mxu0 0
        %3319 = vmatpush1.bf16.msra.mxu0 0
        %3320 = vmatprep.subr.bf16.mxu0 0
        %3321 = vmatpush1.bf16.msra.mxu0 0
        %3322 = vmatprep.subr.bf16.mxu0 0
        %3323 = vmatpush1.bf16.msra.mxu0 0
        %3324 = vmatprep.subr.bf16.mxu0 0
        %3325 = vmatpush1.bf16.msra.mxu0 0
        %3326 = vmatprep.mubr.bf16.mxu0 0
        %3327 = vmatmul.mubr.bf16.gmra.mrb[0].mxu0 %v3292
        %v3328 = vpop.f32.mrb[0].mxu0
        %v3329 = vadd.f32 0.0, %v3328
        %v3330 = vpop.f32.mrb[0].mxu0
        %v3331 = vpop.f32.mrb[0].mxu0
        %v3332 = vpop.f32.mrb[0].mxu0
        %3333 = vdwg.mxu0
        %v3335 = vsel %vm1659, %v3204, 0
        %3337 = vmatprep.subr.bf16.mxu0 0
        %3338 = vmatpush1.bf16.msra.mxu0 %v2231
        %3339 = vmatprep.subr.bf16.mxu0 0
        %3340 = vmatpush1.bf16.msra.mxu0 0
        %3341 = vmatprep.subr.bf16.mxu0 0
        %3342 = vmatpush1.bf16.msra.mxu0 0
        %3343 = vmatprep.subr.bf16.mxu0 0
        %3344 = vmatpush1.bf16.msra.mxu0 0
        %3345 = vmatprep.subr.bf16.mxu0 0
        %3346 = vmatpush1.bf16.msra.mxu0 0
        %3347 = vmatprep.subr.bf16.mxu0 0
        %3348 = vmatpush1.bf16.msra.mxu0 0
        %3349 = vmatprep.subr.bf16.mxu0 0
        %3350 = vmatpush1.bf16.msra.mxu0 0
        %3351 = vmatprep.subr.bf16.mxu0 0
        %3352 = vmatpush1.bf16.msra.mxu0 0
        %3353 = vmatprep.subr.bf16.mxu0 0
        %3354 = vmatpush1.bf16.msra.mxu0 0
        %3355 = vmatprep.subr.bf16.mxu0 0
        %3356 = vmatpush1.bf16.msra.mxu0 0
        %3357 = vmatprep.subr.bf16.mxu0 0
        %3358 = vmatpush1.bf16.msra.mxu0 0
        %3359 = vmatprep.subr.bf16.mxu0 0
        %3360 = vmatpush1.bf16.msra.mxu0 0
        %3361 = vmatprep.subr.bf16.mxu0 0
        %3362 = vmatpush1.bf16.msra.mxu0 0
        %3363 = vmatprep.subr.bf16.mxu0 0
        %3364 = vmatpush1.bf16.msra.mxu0 0
        %3365 = vmatprep.subr.bf16.mxu0 0
        %3366 = vmatpush1.bf16.msra.mxu0 0
        %3367 = vmatprep.subr.bf16.mxu0 0
        %3368 = vmatpush1.bf16.msra.mxu0 0
        %3369 = vmatprep.mubr.bf16.mxu0 0
        %3370 = vmatmul.mubr.bf16.gmra.mrb[0].mxu0 %v3335
        %v3371 = vpop.f32.mrb[0].mxu0
        %v3372 = vadd.f32 0.0, %v3371
        %v3373 = vpop.f32.mrb[0].mxu0
        %v3374 = vpop.f32.mrb[0].mxu0
        %v3375 = vpop.f32.mrb[0].mxu0
        %3376 = vdwg.mxu0
        %v3377 = vsel %vm978, %v3243, 0.0
        %v3378 = vsel %vm978, %v3286, 0.0
        %v3379 = vadd.f32 %v3377, %v3378
        %v3380 = vsel %vm978, %v3329, 0.0
        %v3381 = vadd.f32 %v3379, %v3380
        %v3382 = vsel %vm978, %v3372, 0.0
        %v3383 = vadd.f32 %v3381, %v3382
        %v3384 = vld [vmem:[%s781] sm:$0x1]
        %v3386 = vlaneseq
        %v3387 = vshrl.u32 %v3386, 7
        %v3388 = vsub.s32 0, %v3387
        %v3389 = vrot.slane %v3384, %v3388
        %v3391 = vadd.f32 %v2279, %v3389
        %v3392 = vadd.f32 %v3383, %v3389
        %v3393 = vadd.f32 %v974, %v3391
        %v3394 = vadd.f32 %v975, %v3392
        %v3395 = vld [vmem:[%s789] sm:$0x1]
        %v3396 = vld [vmem:[%s797] sm:$0x1]
        %v3397 = vsel %vm978, %v3393, 0.0
        %3398 = vadd.xlane.f32.xlu0 %v3397
        %v3399 = vpop.xlane.xlu0 %3398
        %v3400 = vsel %vm978, %v3394, 0.0
        %3401 = vadd.xlane.f32.xlu0 %v3400
        %v3402 = vpop.xlane.xlu0 %3401
        %v3403 = vmul.f32 %v3399, %v985
        %v3404 = vmul.f32 %v3402, %v985
        %v3405 = vsub.f32 %v3393, %v3403
        %v3406 = vsub.f32 %v3394, %v3404
        %v3407 = vmul.f32 %v3405, %v3405
        %v3408 = vmul.f32 %v3406, %v3406
        %v3409 = vsel %vm978, %v3407, 0.0
        %3410 = vadd.xlane.f32.xlu0 %v3409
        %v3411 = vpop.xlane.xlu0 %3410
        %v3412 = vsel %vm978, %v3408, 0.0
        %3413 = vadd.xlane.f32.xlu0 %v3412
        %v3414 = vpop.xlane.xlu0 %3413
        %v3415 = vmul.f32 %v3411, %v985
        %v3416 = vmul.f32 %v3414, %v985
        %v3417 = vadd.f32 %v3415, 1e-05
        %v3418 = vadd.f32 %v3416, 1e-05
        %v3419 = vrsqrt.pop %v3417
        %v3420 = vrsqrt.pop %v3418
        %v3421 = vmul.f32 %v3405, %v3419
        %v3422 = vmul.f32 %v3406, %v3420
        %v3424 = vlaneseq
        %v3425 = vshrl.u32 %v3424, 7
        %v3426 = vsub.s32 0, %v3425
        %v3427 = vrot.slane %v3395, %v3426
        %v3429 = vmul.f32 %v3421, %v3427
        %v3430 = vmul.f32 %v3422, %v3427
        %v3432 = vlaneseq
        %v3433 = vshrl.u32 %v3432, 7
        %v3434 = vsub.s32 0, %v3433
        %v3435 = vrot.slane %v3396, %v3434
        %v3437 = vadd.f32 %v3429, %v3435
        %v3438 = vadd.f32 %v3430, %v3435
        %v3439 = vpack.c.bf16 %v3438, %v3437
        %v3440 = vld [vmem:[%s955] sm:$0xf]
        %v3441 = vld [vmem:[%s955 + $0x4] sm:$0xf]
        %v3442 = vld [vmem:[%s955 + $0x8] sm:$0xf]
        %v3443 = vld [vmem:[%s955 + $0xc] sm:$0xf]
        %v3444 = vld [vmem:[%s805] sm:$0x1]
        %v3446 = vlaneseq
        %v3447 = vshrl.u32 %v3446, 7
        %v3448 = vsub.s32 0, %v3447
        %v3449 = vrot.slane %v3444, %v3448
        %v3455 = vunpack.c.l.b16 %v3440
        %v3456 = vunpack.c.l.b16 %v3441
        %v3457 = vunpack.c.l.b16 %v3442
        %v3458 = vunpack.c.l.b16 %v3443
        %v3459 = vpack.c.b16 %v3456, %v3455
        %v3460 = vpack.c.b16 %v3458, %v3457
        %v3464 = vsel %vm978, %v3439, 0
        %3466 = vmatprep.subr.bf16.mxu0 0
        %3467 = vmatpush1.bf16.msra.mxu0 %v3459
        %3468 = vmatprep.subr.bf16.mxu0 0
        %3469 = vmatpush1.bf16.msra.mxu0 %v3460
        %3470 = vmatprep.subr.bf16.mxu0 0
        %3471 = vmatpush1.bf16.msra.mxu0 0
        %3472 = vmatprep.subr.bf16.mxu0 0
        %3473 = vmatpush1.bf16.msra.mxu0 0
        %3474 = vmatprep.subr.bf16.mxu0 0
        %3475 = vmatpush1.bf16.msra.mxu0 0
        %3476 = vmatprep.subr.bf16.mxu0 0
        %3477 = vmatpush1.bf16.msra.mxu0 0
        %3478 = vmatprep.subr.bf16.mxu0 0
        %3479 = vmatpush1.bf16.msra.mxu0 0
        %3480 = vmatprep.subr.bf16.mxu0 0
        %3481 = vmatpush1.bf16.msra.mxu0 0
        %3482 = vmatprep.subr.bf16.mxu0 0
        %3483 = vmatpush1.bf16.msra.mxu0 0
        %3484 = vmatprep.subr.bf16.mxu0 0
        %3485 = vmatpush1.bf16.msra.mxu0 0
        %3486 = vmatprep.subr.bf16.mxu0 0
        %3487 = vmatpush1.bf16.msra.mxu0 0
        %3488 = vmatprep.subr.bf16.mxu0 0
        %3489 = vmatpush1.bf16.msra.mxu0 0
        %3490 = vmatprep.subr.bf16.mxu0 0
        %3491 = vmatpush1.bf16.msra.mxu0 0
        %3492 = vmatprep.subr.bf16.mxu0 0
        %3493 = vmatpush1.bf16.msra.mxu0 0
        %3494 = vmatprep.subr.bf16.mxu0 0
        %3495 = vmatpush1.bf16.msra.mxu0 0
        %3496 = vmatprep.subr.bf16.mxu0 0
        %3497 = vmatpush1.bf16.msra.mxu0 0
        %3498 = vmatprep.mubr.bf16.mxu0 0
        %3499 = vmatmul.mubr.bf16.gmra.mrb[0].mxu0 %v3464
        %v3500 = vpop.f32.mrb[0].mxu0
        %v3501 = vadd.f32 %v3449, %v3500
        %v3502 = vpop.f32.mrb[0].mxu0
        %v3503 = vpop.f32.mrb[0].mxu0
        %v3504 = vadd.f32 %v3449, %v3503
        %v3505 = vpop.f32.mrb[0].mxu0
        %3506 = vdwg.mxu0
        %v3507 = vmul.f32 %v3501, 1.702
        %v3508 = vmul.f32 %v3504, 1.702
        %v3509 = vxor.u32 %v3507, 2147483648
        %v3510 = vxor.u32 %v3508, 2147483648
        %v3511 = vmul.f32 %v3509, 1.442695
        %v3512 = vpow.pop %v3511
        %v3513 = vmul.f32 %v3510, 1.442695
        %v3514 = vpow.pop %v3513
        %v3515 = vadd.f32 %v3512, 1.0
        %v3516 = vadd.f32 %v3514, 1.0
        %v3517 = vrcp.pop %v3515
        %v3518 = vmul.f32 1.0, %v3517
        %v3519 = vrcp.pop %v3516
        %v3520 = vmul.f32 1.0, %v3519
        %v3521 = vmul.f32 %v3501, %v3518
        %v3522 = vmul.f32 %v3504, %v3520
        %v3523 = vpack.c.bf16 %v3522, %v3521
        %v3524 = vld [vmem:[%s960] sm:$0xf]
        %v3525 = vld [vmem:[%s960 + $0x4] sm:$0xf]
        %v3526 = vld [vmem:[%s960 + $0x8] sm:$0xf]
        %v3527 = vld [vmem:[%s960 + $0xc] sm:$0xf]
        %v3528 = vld [vmem:[%s960 + $0x10] sm:$0xf]
        %v3529 = vld [vmem:[%s960 + $0x14] sm:$0xf]
        %v3530 = vld [vmem:[%s960 + $0x18] sm:$0xf]
        %v3531 = vld [vmem:[%s960 + $0x1c] sm:$0xf]
        %v3532 = vld [vmem:[%s960 + $0x20] sm:$0xf]
        %v3533 = vld [vmem:[%s960 + $0x24] sm:$0xf]
        %v3534 = vld [vmem:[%s960 + $0x28] sm:$0xf]
        %v3535 = vld [vmem:[%s960 + $0x2c] sm:$0xf]
        %v3536 = vld [vmem:[%s960 + $0x30] sm:$0xf]
        %v3537 = vld [vmem:[%s960 + $0x34] sm:$0xf]
        %v3538 = vld [vmem:[%s960 + $0x38] sm:$0xf]
        %v3539 = vld [vmem:[%s960 + $0x3c] sm:$0xf]
        %v3540 = vld [vmem:[%s963] sm:$0x1]
        %v3542 = vlaneseq
        %v3543 = vshrl.u32 %v3542, 7
        %v3544 = vsub.s32 0, %v3543
        %v3545 = vrot.slane %v3540, %v3544
        %v3563 = vunpack.c.l.b16 %v3524
        %v3564 = vunpack.c.l.b16 %v3525
        %v3565 = vunpack.c.l.b16 %v3526
        %v3566 = vunpack.c.l.b16 %v3527
        %v3567 = vunpack.c.l.b16 %v3528
        %v3568 = vunpack.c.l.b16 %v3529
        %v3569 = vunpack.c.l.b16 %v3530
        %v3570 = vunpack.c.l.b16 %v3531
        %v3571 = vunpack.c.l.b16 %v3532
        %v3572 = vunpack.c.l.b16 %v3533
        %v3573 = vunpack.c.l.b16 %v3534
        %v3574 = vunpack.c.l.b16 %v3535
        %v3575 = vunpack.c.l.b16 %v3536
        %v3576 = vunpack.c.l.b16 %v3537
        %v3577 = vunpack.c.l.b16 %v3538
        %v3578 = vunpack.c.l.b16 %v3539
        %v3579 = vpack.c.b16 %v3564, %v3563
        %v3580 = vpack.c.b16 %v3566, %v3565
        %v3581 = vpack.c.b16 %v3568, %v3567
        %v3582 = vpack.c.b16 %v3570, %v3569
        %v3583 = vpack.c.b16 %v3572, %v3571
        %v3584 = vpack.c.b16 %v3574, %v3573
        %v3585 = vpack.c.b16 %v3576, %v3575
        %v3586 = vpack.c.b16 %v3578, %v3577
        %3595 = vmatprep.subr.bf16.mxu0 0
        %3596 = vmatpush1.bf16.msra.mxu0 %v3579
        %3597 = vmatprep.subr.bf16.mxu0 0
        %3598 = vmatpush1.bf16.msra.mxu0 %v3580
        %3599 = vmatprep.subr.bf16.mxu0 0
        %3600 = vmatpush1.bf16.msra.mxu0 %v3581
        %3601 = vmatprep.subr.bf16.mxu0 0
        %3602 = vmatpush1.bf16.msra.mxu0 %v3582
        %3603 = vmatprep.subr.bf16.mxu0 0
        %3604 = vmatpush1.bf16.msra.mxu0 %v3583
        %3605 = vmatprep.subr.bf16.mxu0 0
        %3606 = vmatpush1.bf16.msra.mxu0 %v3584
        %3607 = vmatprep.subr.bf16.mxu0 0
        %3608 = vmatpush1.bf16.msra.mxu0 %v3585
        %3609 = vmatprep.subr.bf16.mxu0 0
        %3610 = vmatpush1.bf16.msra.mxu0 %v3586
        %3611 = vmatprep.subr.bf16.mxu0 0
        %3612 = vmatpush1.bf16.msra.mxu0 0
        %3613 = vmatprep.subr.bf16.mxu0 0
        %3614 = vmatpush1.bf16.msra.mxu0 0
        %3615 = vmatprep.subr.bf16.mxu0 0
        %3616 = vmatpush1.bf16.msra.mxu0 0
        %3617 = vmatprep.subr.bf16.mxu0 0
        %3618 = vmatpush1.bf16.msra.mxu0 0
        %3619 = vmatprep.subr.bf16.mxu0 0
        %3620 = vmatpush1.bf16.msra.mxu0 0
        %3621 = vmatprep.subr.bf16.mxu0 0
        %3622 = vmatpush1.bf16.msra.mxu0 0
        %3623 = vmatprep.subr.bf16.mxu0 0
        %3624 = vmatpush1.bf16.msra.mxu0 0
        %3625 = vmatprep.subr.bf16.mxu0 0
        %3626 = vmatpush1.bf16.msra.mxu0 0
        %3627 = vmatprep.mubr.bf16.mxu0 0
        %3628 = vmatmul.mubr.bf16.gmra.mrb[0].mxu0 %v3523
        %v3629 = vpop.f32.mrb[0].mxu0
        %v3630 = vadd.f32 %v3545, %v3629
        %v3631 = vpop.f32.mrb[0].mxu0
        %v3632 = vpop.f32.mrb[0].mxu0
        %v3633 = vadd.f32 %v3545, %v3632
        %v3634 = vpop.f32.mrb[0].mxu0
        %3635 = vdwg.mxu0
        %v3636 = vadd.f32 %v3393, %v3630
        %v3637 = vadd.f32 %v3394, %v3633
        %3638 = vst.msk [vmem:[#allocation2] sm:$0xff] %vm978, %v3636
        %3639 = vst.msk [vmem:[#allocation2 + $0x8] sm:$0xff] %vm978, %v3637
        %p3640 = scmp.eq.s32.totalorder %s41, 1
        // Predicated region
        $region129: #{tpu_custom_call.1} parent=95 // pred_check
          %p3641 = pneg %p3640
        $region130: #{tpu_custom_call.1} parent=95 // pred_check_branch
          %3643 = sbr.rel (%p3641) target = $region132
        $region131: #{tpu_custom_call.1} parent=95 // pred_region
          %v3644 = vld [vmem:[%s17] sm:$0x1]
          %v3645 = vld [vmem:[%s18] sm:$0x1]
          %v3646 = vsel %vm978, %v3636, 0.0
          %3647 = vadd.xlane.f32.xlu0 %v3646
          %v3648 = vpop.xlane.xlu0 %3647
          %v3649 = vsel %vm978, %v3637, 0.0
          %3650 = vadd.xlane.f32.xlu0 %v3649
          %v3651 = vpop.xlane.xlu0 %3650
          %v3652 = vmul.f32 %v3648, %v985
          %v3653 = vmul.f32 %v3651, %v985
          %v3654 = vsub.f32 %v3636, %v3652
          %v3655 = vsub.f32 %v3637, %v3653
          %v3656 = vmul.f32 %v3654, %v3654
          %v3657 = vmul.f32 %v3655, %v3655
          %v3658 = vsel %vm978, %v3656, 0.0
          %3659 = vadd.xlane.f32.xlu0 %v3658
          %v3660 = vpop.xlane.xlu0 %3659
          %v3661 = vsel %vm978, %v3657, 0.0
          %3662 = vadd.xlane.f32.xlu0 %v3661
          %v3663 = vpop.xlane.xlu0 %3662
          %v3664 = vmul.f32 %v3660, %v985
          %v3665 = vmul.f32 %v3663, %v985
          %v3666 = vadd.f32 %v3664, 1e-05
          %v3667 = vadd.f32 %v3665, 1e-05
          %v3668 = vrsqrt.pop %v3666
          %v3669 = vrsqrt.pop %v3667
          %v3670 = vmul.f32 %v3654, %v3668
          %v3671 = vmul.f32 %v3655, %v3669
          %v3673 = vlaneseq
          %v3674 = vshrl.u32 %v3673, 7
          %v3675 = vsub.s32 0, %v3674
          %v3676 = vrot.slane %v3644, %v3675
          %v3678 = vmul.f32 %v3670, %v3676
          %v3679 = vmul.f32 %v3671, %v3676
          %v3681 = vlaneseq
          %v3682 = vshrl.u32 %v3681, 7
          %v3683 = vsub.s32 0, %v3682
          %v3684 = vrot.slane %v3645, %v3683
          %v3686 = vadd.f32 %v3678, %v3684
          %v3687 = vadd.f32 %v3679, %v3684
          %3688 = vst.msk [vmem:[#allocation15] sm:$0xff] %vm978, %v3686
          %3689 = vst.msk [vmem:[#allocation15 + $0x8] sm:$0xff] %vm978, %v3687
        $region132: #{tpu_custom_call.1} parent=95 // pred_fallthru
          _
        // Predicated region
        $region133: #{tpu_custom_call.1} parent=95 // pred_check
          %p3690 = pneg %p533
        $region134: #{tpu_custom_call.1} parent=95 // pred_check_branch
          %3692 = sbr.rel (%p3690) target = $region136
        $region135: #{tpu_custom_call.1} parent=95 // pred_region
          %s3694 = ssub.s32 256, 256
          %3695 = vsyncadd [#allocation5], %s3694
          %s3696 = sshll.u32 [#allocation15], 4
          %s3697 = int_to_ptr.vmem [resolvable:$true] %s3696
          %3702 = dma.vmem_to_hbm [thread:$0]  %s3697, 256, %s19, [#allocation5], 128, 128, 8
        $region136: #{tpu_custom_call.1} parent=95 // pred_fallthru
          _
        // Predicated region
        $region137: #{tpu_custom_call.1} parent=95 // pred_check
          %p3703 = pneg %p533
        $region138: #{tpu_custom_call.1} parent=95 // pred_check_branch
          %3705 = sbr.rel (%p3703) target = $region140
        $region139: #{tpu_custom_call.1} parent=95 // pred_region
          %3706 = dma.done [#allocation5], 256
        $region140: #{tpu_custom_call.1} parent=95 // pred_fallthru
          _
      $region96: #{tpu_custom_call.1} parent=5 // pred_fallthru
        _
      %p3707 = scmp.le.s32.totalorder 2, %s36
      // Predicated region
      $region141: #{tpu_custom_call.1} parent=5 // pred_check
        %p3708 = pneg %p3707
      $region142: #{tpu_custom_call.1} parent=5 // pred_check_branch
        %3710 = sbr.rel (%p3708) target = $region144
      $region143: #{tpu_custom_call.1} parent=5 // pred_region
        %s3711 = ssub.s32 %s36, 2
      $region144: #{tpu_custom_call.1} parent=5 // pred_fallthru
        _
    $region6: #{tpu_custom_call.1} parent=1 // loop_footer
      %s40 = sadd.s32 1, %s36
    $region7: #{tpu_custom_call.1} parent=1 // loop_footer_branch
      %35 = sbr.rel target = $region3
    $region8: #{tpu_custom_call.1} parent=1 // loop_exit
      _
    %3712 = vsyncpa [#allocation4], 1
    %s3713 = scalar_lea.sflag [#allocation4], 1
    %3714 = vsyncpa %s3713, 1
    %3715 = vsyncpa [#allocation7], 1
    %s3716 = scalar_lea.sflag [#allocation7], 1
    %3717 = vsyncpa %s3716, 1
    %3718 = vsyncpa [#allocation10], 1
    %s3719 = scalar_lea.sflag [#allocation10], 1
    %3720 = vsyncpa %s3719, 1
    %3721 = vsyncpa [#allocation13], 1
    %s3722 = scalar_lea.sflag [#allocation13], 1
    %3723 = vsyncpa %s3722, 1
    %3724 = vsyncpa [#allocation5], 1
    %s3725 = scalar_lea.sflag [#allocation5], 1
    %3726 = vsyncpa %s3725, 1

</llo_original>
